<compile_context>
chip_gen: v7x
topology: tpu7x:2x2x1
jax: 0.10.0
libtpu: 0.0.40
codegen_flags: <defaults>
</compile_context>

<pallas_src>
import math

import jax
import jax.numpy as jnp
from jax.experimental import pallas as pl
from jax.experimental.pallas import tpu as pltpu

# ----------------------- small config consistent with the module -------------
D_INP     = 4                     # number of sensors (d_inp); d_enc == d_inp as in the reference
D_MODEL   = 32                    # d_model (multiple of d_inp)
DIM       = D_MODEL // D_INP      # 8  (= int(d_model / d_inp))
D_PE      = 16                    # positional-encoding width
NHEAD     = 4
NHID      = 64                    # transformer feed-forward width
NLAYERS   = 2
D_STATIC  = 5
N_CLASSES = 2
MAX_LEN   = 8                     # sequence length == pos-encoder max_len
BATCH     = 2

E_TRANS   = D_MODEL + D_PE        # 48 : transformer width (d_model + d_pe)
HEAD_DIM  = E_TRANS // NHEAD      # 12
D_FINAL   = E_TRANS + D_MODEL     # 80 : mlp_static input width ([agg | emb])
E_PAD     = 128                   # lane-padded internal width
NHID_PAD  = 128
OUT_PAD   = 128                   # lane-padded logits width
LN_EPS    = 1e-5
ENC_SCALE = math.sqrt(D_MODEL)
NEG_INF   = -1e9                  # additive key-padding mask (f32-safe, exp -> 0)


# ------------------------------- fused kernel --------------------------------
def _raindrop_kernel(vals_ref, times_ref, static_ref, bias_ref, wagg_ref,
                     hmask_ref, gsum_ref,
                     enc_w_ref, enc_b_ref, inv_ts_ref, emb_w_ref, emb_b_ref,
                     wqkv_ref, bqkv_ref, wout_ref, bout_ref,
                     ln1w_ref, ln1b_ref, ff1w_ref, ff1b_ref,
                     ff2w_ref, ff2b_ref, ln2w_ref, ln2b_ref,
                     mlp_w1_ref, mlp_b1_ref, mlp_w2_ref, mlp_b2_ref,
                     out_ref, x_scr):
    f32 = jnp.float32
    bf16 = jnp.bfloat16
    l = pl.program_id(0)

    # ---------------- first grid step: encoder + propagation + PE -------------
    @pl.when(l == 0)
    def _():
        # Linear(d_inp,d_enc) * sqrt(d_model) and the graph-propagation placeholder
        # (repeat each sensor DIM times into lanes [0, d_model)) are folded into enc_w.
        prop = jnp.dot(vals_ref[...].astype(bf16), enc_w_ref[...],
                       preferred_element_type=f32) + enc_b_ref[...]
        # Positional encoding: sin in lanes [32,40), cos in [40,48) — matches the
        # reference torch.cat([sin(scaled_t), cos(scaled_t)], -1) block layout.
        lane = jax.lax.broadcasted_iota(jnp.int32, (1, E_PAD), 1)
        st = times_ref[...] * inv_ts_ref[...]                         # (N,1)*(1,128)
        pe = (jnp.where((lane >= D_MODEL) & (lane < D_MODEL + D_PE // 2),
                        jnp.sin(st), 0.0)
              + jnp.where((lane >= D_MODEL + D_PE // 2) & (lane < E_TRANS),
                          jnp.cos(st), 0.0))
        x_scr[...] = prop + pe                                        # pad lanes stay 0

    # LayerNorm over the 48 true lanes; E[x^2]-mu^2 form needs no lane mask because padding
    # lanes are exactly zero (they contribute 0 to both sums) and w,b are zero there.
    def layer_norm(v, w, b):
        mu = jnp.sum(v, axis=-1, keepdims=True) * (1.0 / E_TRANS)
        ms = jnp.sum(v * v, axis=-1, keepdims=True) * (1.0 / E_TRANS)
        var = ms - mu * mu
        return (v - mu) * jax.lax.rsqrt(var + LN_EPS) * w + b

    # --------------------- one transformer encoder layer ----------------------
    x = x_scr[...]
    hmask = hmask_ref[...]                                            # (H*N, E_PAD)

    # fused QKV projection (1/sqrt(head_dim) pre-folded into the Q block)
    qkv = jnp.dot(x.astype(bf16), wqkv_ref[0], preferred_element_type=f32) + bqkv_ref[0]
    q = qkv[:, 0:E_PAD]
    k = qkv[:, E_PAD:2 * E_PAD]
    v = qkv[:, 2 * E_PAD:3 * E_PAD]

    # Stack K/V per head along rows and mask each copy to its head's lanes.
    k_stack = jnp.concatenate([k] * NHEAD, axis=0) * hmask            # (H*N, E_PAD)
    v_stack = jnp.concatenate([v] * NHEAD, axis=0) * hmask            # (H*N, E_PAD)

    # Scores (N, H*N): lane axis = head x key; contraction absorbs the transpose (no XLU k.T).
    s = jax.lax.dot_general(q.astype(bf16), k_stack.astype(bf16),
                            dimension_numbers=(((1,), (1,)), ((), ())),
                            preferred_element_type=f32) + bias_ref[...]
    # Global row-max subtraction (safe here; per-head logits never differ by ~80).
    s = s - jnp.max(s, axis=-1, keepdims=True)
    e = jnp.exp(s)
    # Per-head denominators, broadcast back along the lane axis via a block-ones matmul.
    denom = jnp.dot(e, gsum_ref[...], preferred_element_type=f32)     # (N, H*N)
    p = e * pl.reciprocal(denom, approx=True)

    # P @ V_stack puts each head's output in its own lanes and sums over keys in one matmul.
    attn = jnp.dot(p.astype(bf16), v_stack.astype(bf16), preferred_element_type=f32)
    attn = jnp.dot(attn.astype(bf16), wout_ref[0], preferred_element_type=f32) + bout_ref[0]
    x = layer_norm(x + attn, ln1w_ref[0], ln1b_ref[0])                # norm1

    # feed-forward (ReLU)
    ff = jnp.maximum(
        jnp.dot(x.astype(bf16), ff1w_ref[0], preferred_element_type=f32) + ff1b_ref[0], 0.0)
    ff = jnp.dot(ff.astype(bf16), ff2w_ref[0], preferred_element_type=f32) + ff2b_ref[0]
    x = layer_norm(x + ff, ln2w_ref[0], ln2b_ref[0])                  # norm2
    x_scr[...] = x

    # ---------------- last grid step: aggregation + static emb + head ---------
    @pl.when(l == NLAYERS - 1)
    def _():
        # masked mean over valid timesteps / (len + 1); weights precomputed (exact divide).
        feat = jnp.dot(wagg_ref[...].astype(bf16), x.astype(bf16),
                       preferred_element_type=f32)                    # (B, E_PAD)
        # static embedding pre-shifted into lanes [E_TRANS, E_TRANS+D_MODEL): concat == add
        feat = feat + jnp.dot(static_ref[...].astype(bf16), emb_w_ref[...],
                              preferred_element_type=f32) + emb_b_ref[...]
        h1 = jnp.maximum(
            jnp.dot(feat.astype(bf16), mlp_w1_ref[...], preferred_element_type=f32)
            + mlp_b1_ref[...], 0.0)
        out_ref[...] = (jnp.dot(h1.astype(bf16), mlp_w2_ref[...],
                                preferred_element_type=f32) + mlp_b2_ref[...])


# --------------------------------- wrapper ------------------------------------
def raindrop_forward(params, src, static, times, lengths):
    """src: [T, B, 2*d_inp], static: [B, d_static], times: [T, B], lengths: [B] (int)."""
    T, B = src.shape[0], src.shape[1]
    n = T * B                      # flattened rows, t-major: row = t*B + b
    hn = NHEAD * n
    f32 = jnp.float32

    vals = src[:, :, :D_INP].reshape(n, D_INP).astype(f32)
    times_col = times.reshape(n, 1).astype(f32)
    len_f = lengths.astype(f32)

    # --- length-dependent masks, built once outside the kernel (tiny, exact math) ---
    r = jnp.arange(n)
    b_of = r % B
    t_of = r // B
    key_ok = t_of < lengths[b_of]                                       # key not padded
    allowed = (b_of[:, None] == b_of[None, :]) & key_ok[None, :]        # batch block-diag
    bias = jnp.where(allowed, 0.0, NEG_INF).astype(f32)                 # (N, N)
    attn_bias = jnp.tile(bias, (1, NHEAD))                              # (N, H*N)

    sel = (b_of[None, :] == jnp.arange(B)[:, None]) & (t_of[None, :] < lengths[:, None])
    w_agg = sel.astype(f32) / (len_f[:, None] + 1.0)                    # (B, N) masked-mean

    # --- shape-only constants (constant-folded by XLA) ---
    h_of = jnp.arange(hn) // n
    lane = jnp.arange(E_PAD)
    head_mask = ((lane[None, :] >= h_of[:, None] * HEAD_DIM)
                 & (lane[None, :] < (h_of[:, None] + 1) * HEAD_DIM)).astype(f32)  # (H*N,E_PAD)
    gsum = (h_of[:, None] == h_of[None, :]).astype(f32)                 # (H*N, H*N)

    def rep(shape):
        return pl.BlockSpec(shape, lambda l: (0,) * len(shape))

    def per_layer(shape):
        return pl.BlockSpec((1,) + shape, lambda l: (l, 0, 0))

    in_specs = [
        rep((n, D_INP)), rep((n, 1)), rep((B, D_STATIC)),
        rep((n, hn)), rep((B, n)), rep((hn, E_PAD)), rep((hn, hn)),
        rep((D_INP, E_PAD)), rep((1, E_PAD)), rep((1, E_PAD)),
        rep((D_STATIC, E_PAD)), rep((1, E_PAD)),
        per_layer((E_PAD, 3 * E_PAD)), per_layer((1, 3 * E_PAD)),
        per_layer((E_PAD, E_PAD)), per_layer((1, E_PAD)),
        per_layer((1, E_PAD)), per_layer((1, E_PAD)),
        per_layer((E_PAD, NHID_PAD)), per_layer((1, NHID_PAD)),
        per_layer((NHID_PAD, E_PAD)), per_layer((1, E_PAD)),
        per_layer((1, E_PAD)), per_layer((1, E_PAD)),
        rep((E_PAD, E_PAD)), rep((1, E_PAD)), rep((E_PAD, OUT_PAD)), rep((1, OUT_PAD)),
    ]

    out = pl.pallas_call(
        _raindrop_kernel,
        out_shape=jax.ShapeDtypeStruct((B, OUT_PAD), jnp.float32),
        grid_spec=pltpu.PrefetchScalarGridSpec(
            num_scalar_prefetch=0,
            grid=(NLAYERS,),
            in_specs=in_specs,
            out_specs=pl.BlockSpec((B, OUT_PAD), lambda l: (0, 0)),
            scratch_shapes=[pltpu.VMEM((n, E_PAD), jnp.float32)],
        ),
        compiler_params=pltpu.CompilerParams(dimension_semantics=("arbitrary",)),
    )(vals, times_col, static.astype(f32), attn_bias, w_agg, head_mask, gsum,
      params["enc_w"], params["enc_b"], params["inv_ts"], params["emb_w"], params["emb_b"],
      params["wqkv"], params["bqkv"], params["wout"], params["bout"],
      params["ln1w"], params["ln1b"], params["ff1w"], params["ff1b"],
      params["ff2w"], params["ff2b"], params["ln2w"], params["ln2b"],
      params["mlp_w1"], params["mlp_b1"], params["mlp_w2"], params["mlp_b2"])

    logits = out[:, :N_CLASSES]
    # TODO(synk): `distance` comes from the (unavailable) graph-propagation attention weights.
    distance = jnp.float32(0.0)
    return logits, distance, None


# ---------------------------- parameter init ----------------------------------
def init_params(key):
    """Weights pre-transposed (x @ W), zero-padded into 128-lane slabs; matmul weights in bf16."""
    ks = iter(jax.random.split(key, 64))

    def u(shape, scale=0.1):
        return jax.random.uniform(next(ks), shape, jnp.float32, -scale, scale)

    def place(block, shape, r0=0, c0=0):
        out = jnp.zeros(shape, jnp.float32)
        return out.at[r0:r0 + block.shape[0], c0:c0 + block.shape[1]].set(block)

    bf16 = jnp.bfloat16
    p = {}

    # encoder Linear(d_inp, d_enc) * sqrt(d_model), then propagation placeholder (repeat each
    # encoded sensor DIM times into lanes [0, d_model)) -- composed into one (d_inp, 128) matrix.
    enc_w = u((D_INP, D_INP))
    enc_b = u((1, D_INP))
    col = jnp.arange(E_PAD)[None, :]
    row = jnp.arange(D_INP)[:, None]
    expand = ((col < D_MODEL) & ((col // DIM) == row)).astype(jnp.float32)   # (d_inp, E_PAD)
    p["enc_w"] = ((enc_w * ENC_SCALE) @ expand).astype(bf16)
    p["enc_b"] = (enc_b * ENC_SCALE) @ expand                                # f32 (1, E_PAD)

    # static embedding Linear(d_static, d_model), shifted into lanes [E_TRANS, E_TRANS+D_MODEL)
    p["emb_w"] = place(u((D_STATIC, D_MODEL)), (D_STATIC, E_PAD), 0, E_TRANS).astype(bf16)
    p["emb_b"] = place(u((1, D_MODEL)), (1, E_PAD), 0, E_TRANS)

    # transformer encoder layers (stacked along a leading layer dim, zero-padded)
    q_scale = 1.0 / math.sqrt(HEAD_DIM)
    wqkv, bqkv, wout, bout = [], [], [], []
    ln1w, ln1b, f1w, f1b, f2w, f2b, ln2w, ln2b = [], [], [], [], [], [], [], []
    for _ in range(NLAYERS):
        w = jnp.zeros((E_PAD, 3 * E_PAD), jnp.float32)
        w = w.at[:E_TRANS, 0:E_TRANS].set(u((E_TRANS, E_TRANS)) * q_scale)   # scale folded
        w = w.at[:E_TRANS, E_PAD:E_PAD + E_TRANS].set(u((E_TRANS, E_TRANS)))
        w = w.at[:E_TRANS, 2 * E_PAD:2 * E_PAD + E_TRANS].set(u((E_TRANS, E_TRANS)))
        wqkv.append(w)
        b = jnp.zeros((1, 3 * E_PAD), jnp.float32)
        b = b.at[:, 0:E_TRANS].set(u((1, E_TRANS)) * q_scale)
        b = b.at[:, E_PAD:E_PAD + E_TRANS].set(u((1, E_TRANS)))
        b = b.at[:, 2 * E_PAD:2 * E_PAD + E_TRANS].set(u((1, E_TRANS)))
        bqkv.append(b)
        wout.append(place(u((E_TRANS, E_TRANS)), (E_PAD, E_PAD)))
        bout.append(place(u((1, E_TRANS)), (1, E_PAD)))
        ln1w.append(place(jnp.ones((1, E_TRANS), jnp.float32), (1, E_PAD)))
        ln1b.append(jnp.zeros((1, E_PAD), jnp.float32))
        f1w.append(place(u((E_TRANS, NHID)), (E_PAD, NHID_PAD)))
        f1b.append(place(u((1, NHID)), (1, NHID_PAD)))
        f2w.append(place(u((NHID, E_TRANS)), (NHID_PAD, E_PAD)))
        f2b.append(place(u((1, E_TRANS)), (1, E_PAD)))
        ln2w.append(place(jnp.ones((1, E_TRANS), jnp.float32), (1, E_PAD)))
        ln2b.append(jnp.zeros((1, E_PAD), jnp.float32))

    p["wqkv"] = jnp.stack(wqkv).astype(bf16)
    p["bqkv"] = jnp.stack(bqkv)
    p["wout"] = jnp.stack(wout).astype(bf16)
    p["bout"] = jnp.stack(bout)
    p["ln1w"] = jnp.stack(ln1w)
    p["ln1b"] = jnp.stack(ln1b)
    p["ff1w"] = jnp.stack(f1w).astype(bf16)
    p["ff1b"] = jnp.stack(f1b)
    p["ff2w"] = jnp.stack(f2w).astype(bf16)
    p["ff2b"] = jnp.stack(f2b)
    p["ln2w"] = jnp.stack(ln2w)
    p["ln2b"] = jnp.stack(ln2b)

    # mlp_static: Linear(d_final, d_final) -> ReLU -> Linear(d_final, n_classes)
    p["mlp_w1"] = place(u((D_FINAL, D_FINAL)), (E_PAD, E_PAD)).astype(bf16)
    p["mlp_b1"] = place(u((1, D_FINAL)), (1, E_PAD))
    p["mlp_w2"] = place(u((D_FINAL, N_CLASSES)), (E_PAD, OUT_PAD)).astype(bf16)
    p["mlp_b2"] = place(u((1, N_CLASSES)), (1, OUT_PAD))

    # positional-encoding inverse timescales, pre-positioned in lanes [D_MODEL, E_TRANS)
    ts = float(MAX_LEN) ** jnp.linspace(0.0, 1.0, D_PE // 2)
    inv = (1.0 / ts).astype(jnp.float32).reshape(1, D_PE // 2)
    it = jnp.zeros((1, E_PAD), jnp.float32)
    it = it.at[:, D_MODEL:D_MODEL + D_PE // 2].set(inv)
    it = it.at[:, D_MODEL + D_PE // 2:E_TRANS].set(inv)
    p["inv_ts"] = it
    return p


# --------------------------------- main ----------------------------------------
if __name__ == "__main__":
    key = jax.random.PRNGKey(0)
    kp, k1, k2 = jax.random.split(key, 3)
    params = init_params(kp)

    # src: [T, B, 2*d_inp] = values + missing mask; times: [T, B]; lengths: [B]
    src = jax.random.normal(k1, (MAX_LEN, BATCH, 2 * D_INP), jnp.float32)
    src = src.at[:, :, D_INP:].set((src[:, :, D_INP:] > 0).astype(jnp.float32))
    static = jax.random.normal(k2, (BATCH, D_STATIC), jnp.float32)
    times = jnp.tile(jnp.arange(MAX_LEN, dtype=jnp.float32)[:, None], (1, BATCH)) + 1.0
    lengths = jnp.array([MAX_LEN, MAX_LEN - 3], dtype=jnp.int32)

    fwd = jax.jit(raindrop_forward)
    logits, distance, _ = fwd(params, src, static, times, lengths)
    jax.block_until_ready(logits)
    assert logits.shape == (BATCH, N_CLASSES)
    assert bool(jnp.all(jnp.isfinite(logits)))
    print("KERNEL_OK")
</pallas_src>

<mosaic_0001>
module attributes {stable_mosaic.version = 11 : i64} {
  func.func @_raindrop_kernel(%arg0: i32, %arg1: memref<16x4xf32, #tpu.memory_space<vmem>>, %arg2: memref<16x1xf32, #tpu.memory_space<vmem>>, %arg3: memref<2x5xf32, #tpu.memory_space<vmem>>, %arg4: memref<16x64xf32, #tpu.memory_space<vmem>>, %arg5: memref<2x16xf32, #tpu.memory_space<vmem>>, %arg6: memref<64x128xf32, #tpu.memory_space<vmem>>, %arg7: memref<64x64xf32, #tpu.memory_space<vmem>>, %arg8: memref<4x128xbf16, #tpu.memory_space<vmem>>, %arg9: memref<1x128xf32, #tpu.memory_space<vmem>>, %arg10: memref<1x128xf32, #tpu.memory_space<vmem>>, %arg11: memref<5x128xbf16, #tpu.memory_space<vmem>>, %arg12: memref<1x128xf32, #tpu.memory_space<vmem>>, %arg13: memref<1x128x384xbf16, #tpu.memory_space<vmem>>, %arg14: memref<1x1x384xf32, #tpu.memory_space<vmem>>, %arg15: memref<1x128x128xbf16, #tpu.memory_space<vmem>>, %arg16: memref<1x1x128xf32, #tpu.memory_space<vmem>>, %arg17: memref<1x1x128xf32, #tpu.memory_space<vmem>>, %arg18: memref<1x1x128xf32, #tpu.memory_space<vmem>>, %arg19: memref<1x128x128xbf16, #tpu.memory_space<vmem>>, %arg20: memref<1x1x128xf32, #tpu.memory_space<vmem>>, %arg21: memref<1x128x128xbf16, #tpu.memory_space<vmem>>, %arg22: memref<1x1x128xf32, #tpu.memory_space<vmem>>, %arg23: memref<1x1x128xf32, #tpu.memory_space<vmem>>, %arg24: memref<1x1x128xf32, #tpu.memory_space<vmem>>, %arg25: memref<128x128xbf16, #tpu.memory_space<vmem>>, %arg26: memref<1x128xf32, #tpu.memory_space<vmem>>, %arg27: memref<128x128xbf16, #tpu.memory_space<vmem>>, %arg28: memref<1x128xf32, #tpu.memory_space<vmem>>, %arg29: memref<2x128xf32, #tpu.memory_space<vmem>>, %arg30: memref<16x128xf32, #tpu.memory_space<vmem>>) attributes {dimension_semantics = [#tpu.dimension_semantics<arbitrary>], iteration_bounds = array<i64: 2>, scalar_prefetch = 0 : i64, scratch_operands = 1 : i64, tpu.core_type = #tpu.core_type<tc>, window_params = [{pipeline_mode = #tpu.pipeline_mode<synchronous>, transform_indices = @transform_0, window_bounds = array<i64: 16, 4>}, {pipeline_mode = #tpu.pipeline_mode<synchronous>, transform_indices = @transform_1, window_bounds = array<i64: 16, 1>}, {pipeline_mode = #tpu.pipeline_mode<synchronous>, transform_indices = @transform_2, window_bounds = array<i64: 2, 5>}, {pipeline_mode = #tpu.pipeline_mode<synchronous>, transform_indices = @transform_3, window_bounds = array<i64: 16, 64>}, {pipeline_mode = #tpu.pipeline_mode<synchronous>, transform_indices = @transform_4, window_bounds = array<i64: 2, 16>}, {pipeline_mode = #tpu.pipeline_mode<synchronous>, transform_indices = @transform_5, window_bounds = array<i64: 64, 128>}, {pipeline_mode = #tpu.pipeline_mode<synchronous>, transform_indices = @transform_6, window_bounds = array<i64: 64, 64>}, {pipeline_mode = #tpu.pipeline_mode<synchronous>, transform_indices = @transform_7, window_bounds = array<i64: 4, 128>}, {pipeline_mode = #tpu.pipeline_mode<synchronous>, transform_indices = @transform_8, window_bounds = array<i64: 1, 128>}, {pipeline_mode = #tpu.pipeline_mode<synchronous>, transform_indices = @transform_9, window_bounds = array<i64: 1, 128>}, {pipeline_mode = #tpu.pipeline_mode<synchronous>, transform_indices = @transform_10, window_bounds = array<i64: 5, 128>}, {pipeline_mode = #tpu.pipeline_mode<synchronous>, transform_indices = @transform_11, window_bounds = array<i64: 1, 128>}, {transform_indices = @transform_12, window_bounds = array<i64: 1, 128, 384>}, {transform_indices = @transform_13, window_bounds = array<i64: 1, 1, 384>}, {transform_indices = @transform_14, window_bounds = array<i64: 1, 128, 128>}, {transform_indices = @transform_15, window_bounds = array<i64: 1, 1, 128>}, {transform_indices = @transform_16, window_bounds = array<i64: 1, 1, 128>}, {transform_indices = @transform_17, window_bounds = array<i64: 1, 1, 128>}, {transform_indices = @transform_18, window_bounds = array<i64: 1, 128, 128>}, {transform_indices = @transform_19, window_bounds = array<i64: 1, 1, 128>}, {transform_indices = @transform_20, window_bounds = array<i64: 1, 128, 128>}, {transform_indices = @transform_21, window_bounds = array<i64: 1, 1, 128>}, {transform_indices = @transform_22, window_bounds = array<i64: 1, 1, 128>}, {transform_indices = @transform_23, window_bounds = array<i64: 1, 1, 128>}, {pipeline_mode = #tpu.pipeline_mode<synchronous>, transform_indices = @transform_24, window_bounds = array<i64: 128, 128>}, {pipeline_mode = #tpu.pipeline_mode<synchronous>, transform_indices = @transform_25, window_bounds = array<i64: 1, 128>}, {pipeline_mode = #tpu.pipeline_mode<synchronous>, transform_indices = @transform_26, window_bounds = array<i64: 128, 128>}, {pipeline_mode = #tpu.pipeline_mode<synchronous>, transform_indices = @transform_27, window_bounds = array<i64: 1, 128>}, {pipeline_mode = #tpu.pipeline_mode<synchronous>, transform_indices = @transform_28, window_bounds = array<i64: 2, 128>}]} {
    %c0_i32 = arith.constant 0 : i32
    %0 = arith.cmpi eq, %arg0, %c0_i32 : i32
    %1 = arith.extui %0 : i1 to i32
    %c0_i32_0 = arith.constant 0 : i32
    %2 = arith.cmpi ne, %1, %c0_i32_0 : i32
    scf.if %2 {
      %c0_65 = arith.constant 0 : index
      %c0_66 = arith.constant 0 : index
      %121 = vector.load %arg1[%c0_65, %c0_66] : memref<16x4xf32, #tpu.memory_space<vmem>>, vector<16x4xf32>
      %122 = arith.truncf %121 : vector<16x4xf32> to vector<16x4xbf16>
      %c0_67 = arith.constant 0 : index
      %c0_68 = arith.constant 0 : index
      %123 = vector.load %arg8[%c0_67, %c0_68] : memref<4x128xbf16, #tpu.memory_space<vmem>>, vector<4x128xbf16>
      %cst_69 = arith.constant dense<0.000000e+00> : vector<16x128xf32>
      %124 = tpu.matmul %122, %123, %cst_69 {dimension_numbers = #tpu.dot_dimension_numbers<[1], [0], [0], [1], [0, 0, 1, 1], [], []>} : vector<16x4xbf16>, vector<4x128xbf16>, vector<16x128xf32> -> vector<16x128xf32>
      %c0_70 = arith.constant 0 : index
      %c0_71 = arith.constant 0 : index
      %125 = vector.load %arg9[%c0_70, %c0_71] : memref<1x128xf32, #tpu.memory_space<vmem>>, vector<1x128xf32>
      %126 = vector.broadcast %125 : vector<1x128xf32> to vector<16x128xf32>
      %127 = arith.addf %124, %126 : vector<16x128xf32>
      %128 = tpu.iota {dimensions = array<i32: 1>} : vector<1x128xi32>
      %c0_72 = arith.constant 0 : index
      %c0_73 = arith.constant 0 : index
      %129 = vector.load %arg2[%c0_72, %c0_73] : memref<16x1xf32, #tpu.memory_space<vmem>>, vector<16x1xf32>
      %c0_74 = arith.constant 0 : index
      %c0_75 = arith.constant 0 : index
      %130 = vector.load %arg10[%c0_74, %c0_75] : memref<1x128xf32, #tpu.memory_space<vmem>>, vector<1x128xf32>
      %131 = vector.broadcast %129 : vector<16x1xf32> to vector<16x128xf32>
      %132 = vector.broadcast %130 : vector<1x128xf32> to vector<16x128xf32>
      %133 = arith.mulf %131, %132 : vector<16x128xf32>
      %c32_i32 = arith.constant 32 : i32
      %134 = vector.broadcast %c32_i32 : i32 to vector<1x128xi32>
      %135 = arith.cmpi sge, %128, %134 : vector<1x128xi32>
      %c40_i32 = arith.constant 40 : i32
      %136 = vector.broadcast %c40_i32 : i32 to vector<1x128xi32>
      %137 = arith.cmpi slt, %128, %136 : vector<1x128xi32>
      %138 = arith.andi %135, %137 : vector<1x128xi1>
      %139 = math.sin %133 : vector<16x128xf32>
      %cst_76 = arith.constant 0.000000e+00 : f32
      %140 = vector.shape_cast %138 : vector<1x128xi1> to vector<1x128xi1>
      %141 = vector.broadcast %140 : vector<1x128xi1> to vector<16x128xi1>
      %142 = vector.broadcast %cst_76 : f32 to vector<16x128xf32>
      %143 = arith.select %141, %139, %142 : vector<16x128xi1>, vector<16x128xf32>
      %c40_i32_77 = arith.constant 40 : i32
      %144 = vector.broadcast %c40_i32_77 : i32 to vector<1x128xi32>
      %145 = arith.cmpi sge, %128, %144 : vector<1x128xi32>
      %c48_i32 = arith.constant 48 : i32
      %146 = vector.broadcast %c48_i32 : i32 to vector<1x128xi32>
      %147 = arith.cmpi slt, %128, %146 : vector<1x128xi32>
      %148 = arith.andi %145, %147 : vector<1x128xi1>
      %149 = math.cos %133 : vector<16x128xf32>
      %cst_78 = arith.constant 0.000000e+00 : f32
      %150 = vector.shape_cast %148 : vector<1x128xi1> to vector<1x128xi1>
      %151 = vector.broadcast %150 : vector<1x128xi1> to vector<16x128xi1>
      %152 = vector.broadcast %cst_78 : f32 to vector<16x128xf32>
      %153 = arith.select %151, %149, %152 : vector<16x128xi1>, vector<16x128xf32>
      %154 = arith.addf %143, %153 : vector<16x128xf32>
      %155 = arith.addf %127, %154 : vector<16x128xf32>
      %c0_79 = arith.constant 0 : index
      %c0_80 = arith.constant 0 : index
      %156 = vector.load %arg30[%c0_79, %c0_80] : memref<16x128xf32, #tpu.memory_space<vmem>>, vector<16x128xf32>
      tpu.vector_store %arg30[%c0_79, %c0_80], %155 {strides = array<i32>} : memref<16x128xf32, #tpu.memory_space<vmem>>, vector<16x128xf32>,
    } else {
    }
    %c0 = arith.constant 0 : index
    %c0_1 = arith.constant 0 : index
    %3 = vector.load %arg30[%c0, %c0_1] : memref<16x128xf32, #tpu.memory_space<vmem>>, vector<16x128xf32>
    %c0_2 = arith.constant 0 : index
    %c0_3 = arith.constant 0 : index
    %4 = vector.load %arg6[%c0_2, %c0_3] : memref<64x128xf32, #tpu.memory_space<vmem>>, vector<64x128xf32>
    %5 = arith.truncf %3 : vector<16x128xf32> to vector<16x128xbf16>
    %c0_4 = arith.constant 0 : index
    %c0_5 = arith.constant 0 : index
    %c0_6 = arith.constant 0 : index
    %6 = vector.load %arg13[%c0_4, %c0_5, %c0_6] : memref<1x128x384xbf16, #tpu.memory_space<vmem>>, vector<1x128x384xbf16>
    %7 = vector.shape_cast %6 : vector<1x128x384xbf16> to vector<128x384xbf16>
    %cst = arith.constant dense<0.000000e+00> : vector<16x384xf32>
    %8 = tpu.matmul %5, %7, %cst {dimension_numbers = #tpu.dot_dimension_numbers<[1], [0], [0], [1], [0, 0, 1, 1], [], []>} : vector<16x128xbf16>, vector<128x384xbf16>, vector<16x384xf32> -> vector<16x384xf32>
    %c0_7 = arith.constant 0 : index
    %c0_8 = arith.constant 0 : index
    %c0_9 = arith.constant 0 : index
    %9 = vector.load %arg14[%c0_7, %c0_8, %c0_9] : memref<1x1x384xf32, #tpu.memory_space<vmem>>, vector<1x1x384xf32>
    %10 = vector.shape_cast %9 : vector<1x1x384xf32> to vector<1x384xf32>
    %11 = vector.broadcast %10 : vector<1x384xf32> to vector<16x384xf32>
    %12 = arith.addf %8, %11 : vector<16x384xf32>
    %13 = vector.extract_strided_slice %12 {offsets = [0, 0], sizes = [16, 128], strides = [1, 1]} : vector<16x384xf32> to vector<16x128xf32>
    %14 = vector.extract_strided_slice %12 {offsets = [0, 128], sizes = [16, 128], strides = [1, 1]} : vector<16x384xf32> to vector<16x128xf32>
    %15 = vector.extract_strided_slice %12 {offsets = [0, 256], sizes = [16, 128], strides = [1, 1]} : vector<16x384xf32> to vector<16x128xf32>
    %16 = tpu.concatenate %14, %14, %14, %14 in 0 : vector<16x128xf32>, vector<16x128xf32>, vector<16x128xf32>, vector<16x128xf32> -> vector<64x128xf32>
    %17 = arith.mulf %16, %4 : vector<64x128xf32>
    %18 = tpu.concatenate %15, %15, %15, %15 in 0 : vector<16x128xf32>, vector<16x128xf32>, vector<16x128xf32>, vector<16x128xf32> -> vector<64x128xf32>
    %19 = arith.mulf %18, %4 : vector<64x128xf32>
    %20 = arith.truncf %13 : vector<16x128xf32> to vector<16x128xbf16>
    %21 = arith.truncf %17 : vector<64x128xf32> to vector<64x128xbf16>
    %cst_10 = arith.constant dense<0.000000e+00> : vector<16x64xf32>
    %22 = tpu.matmul %20, %21, %cst_10 {dimension_numbers = #tpu.dot_dimension_numbers<[1], [1], [0], [0], [0, 0, 1, 0], [], []>} : vector<16x128xbf16>, vector<64x128xbf16>, vector<16x64xf32> -> vector<16x64xf32>
    %c0_11 = arith.constant 0 : index
    %c0_12 = arith.constant 0 : index
    %23 = vector.load %arg4[%c0_11, %c0_12] : memref<16x64xf32, #tpu.memory_space<vmem>>, vector<16x64xf32>
    %24 = arith.addf %22, %23 : vector<16x64xf32>
    %cst_13 = arith.constant dense<0xFF800000> : vector<16xf32>
    %25 = vector.multi_reduction <maximumf>, %24, %cst_13 [1] : vector<16x64xf32> to vector<16xf32>
    %26 = vector.shape_cast %25 : vector<16xf32> to vector<16x1xf32>
    %27 = vector.broadcast %26 : vector<16x1xf32> to vector<16x64xf32>
    %28 = arith.subf %24, %27 : vector<16x64xf32>
    %29 = math.exp %28 : vector<16x64xf32>
    %c0_14 = arith.constant 0 : index
    %c0_15 = arith.constant 0 : index
    %30 = vector.load %arg7[%c0_14, %c0_15] : memref<64x64xf32, #tpu.memory_space<vmem>>, vector<64x64xf32>
    %cst_16 = arith.constant dense<0.000000e+00> : vector<16x64xf32>
    %31 = tpu.matmul %29, %30, %cst_16 {dimension_numbers = #tpu.dot_dimension_numbers<[1], [0], [0], [1], [0, 0, 1, 1], [], []>} : vector<16x64xf32>, vector<64x64xf32>, vector<16x64xf32> -> vector<16x64xf32>
    %32 = tpu.reciprocal %31 {approx = true} : vector<16x64xf32> -> vector<16x64xf32>
    %33 = arith.mulf %29, %32 : vector<16x64xf32>
    %34 = arith.truncf %33 : vector<16x64xf32> to vector<16x64xbf16>
    %35 = arith.truncf %19 : vector<64x128xf32> to vector<64x128xbf16>
    %cst_17 = arith.constant dense<0.000000e+00> : vector<16x128xf32>
    %36 = tpu.matmul %34, %35, %cst_17 {dimension_numbers = #tpu.dot_dimension_numbers<[1], [0], [0], [1], [0, 0, 1, 1], [], []>} : vector<16x64xbf16>, vector<64x128xbf16>, vector<16x128xf32> -> vector<16x128xf32>
    %37 = arith.truncf %36 : vector<16x128xf32> to vector<16x128xbf16>
    %c0_18 = arith.constant 0 : index
    %c0_19 = arith.constant 0 : index
    %c0_20 = arith.constant 0 : index
    %38 = vector.load %arg15[%c0_18, %c0_19, %c0_20] : memref<1x128x128xbf16, #tpu.memory_space<vmem>>, vector<1x128x128xbf16>
    %39 = vector.shape_cast %38 : vector<1x128x128xbf16> to vector<128x128xbf16>
    %cst_21 = arith.constant dense<0.000000e+00> : vector<16x128xf32>
    %40 = tpu.matmul %37, %39, %cst_21 {dimension_numbers = #tpu.dot_dimension_numbers<[1], [0], [0], [1], [0, 0, 1, 1], [], []>} : vector<16x128xbf16>, vector<128x128xbf16>, vector<16x128xf32> -> vector<16x128xf32>
    %c0_22 = arith.constant 0 : index
    %c0_23 = arith.constant 0 : index
    %c0_24 = arith.constant 0 : index
    %41 = vector.load %arg16[%c0_22, %c0_23, %c0_24] : memref<1x1x128xf32, #tpu.memory_space<vmem>>, vector<1x1x128xf32>
    %42 = vector.shape_cast %41 : vector<1x1x128xf32> to vector<1x128xf32>
    %43 = vector.broadcast %42 : vector<1x128xf32> to vector<16x128xf32>
    %44 = arith.addf %40, %43 : vector<16x128xf32>
    %45 = arith.addf %3, %44 : vector<16x128xf32>
    %c0_25 = arith.constant 0 : index
    %c0_26 = arith.constant 0 : index
    %c0_27 = arith.constant 0 : index
    %46 = vector.load %arg17[%c0_25, %c0_26, %c0_27] : memref<1x1x128xf32, #tpu.memory_space<vmem>>, vector<1x1x128xf32>
    %47 = vector.shape_cast %46 : vector<1x1x128xf32> to vector<1x128xf32>
    %c0_28 = arith.constant 0 : index
    %c0_29 = arith.constant 0 : index
    %c0_30 = arith.constant 0 : index
    %48 = vector.load %arg18[%c0_28, %c0_29, %c0_30] : memref<1x1x128xf32, #tpu.memory_space<vmem>>, vector<1x1x128xf32>
    %49 = vector.shape_cast %48 : vector<1x1x128xf32> to vector<1x128xf32>
    %cst_31 = arith.constant dense<0.000000e+00> : vector<16xf32>
    %50 = vector.multi_reduction <add>, %45, %cst_31 [1] : vector<16x128xf32> to vector<16xf32>
    %51 = vector.shape_cast %50 : vector<16xf32> to vector<16x1xf32>
    %cst_32 = arith.constant 0.020833334 : f32
    %52 = vector.broadcast %cst_32 : f32 to vector<16x1xf32>
    %53 = arith.mulf %51, %52 : vector<16x1xf32>
    %54 = arith.mulf %45, %45 : vector<16x128xf32>
    %cst_33 = arith.constant dense<0.000000e+00> : vector<16xf32>
    %55 = vector.multi_reduction <add>, %54, %cst_33 [1] : vector<16x128xf32> to vector<16xf32>
    %56 = vector.shape_cast %55 : vector<16xf32> to vector<16x1xf32>
    %cst_34 = arith.constant 0.020833334 : f32
    %57 = vector.broadcast %cst_34 : f32 to vector<16x1xf32>
    %58 = arith.mulf %56, %57 : vector<16x1xf32>
    %59 = arith.mulf %53, %53 : vector<16x1xf32>
    %60 = arith.subf %58, %59 : vector<16x1xf32>
    %61 = vector.broadcast %53 : vector<16x1xf32> to vector<16x128xf32>
    %62 = arith.subf %45, %61 : vector<16x128xf32>
    %cst_35 = arith.constant 9.99999974E-6 : f32
    %63 = vector.broadcast %cst_35 : f32 to vector<16x1xf32>
    %64 = arith.addf %60, %63 : vector<16x1xf32>
    %65 = math.rsqrt %64 : vector<16x1xf32>
    %66 = vector.broadcast %65 : vector<16x1xf32> to vector<16x128xf32>
    %67 = arith.mulf %62, %66 : vector<16x128xf32>
    %68 = vector.broadcast %47 : vector<1x128xf32> to vector<16x128xf32>
    %69 = arith.mulf %67, %68 : vector<16x128xf32>
    %70 = vector.broadcast %49 : vector<1x128xf32> to vector<16x128xf32>
    %71 = arith.addf %69, %70 : vector<16x128xf32>
    %72 = arith.truncf %71 : vector<16x128xf32> to vector<16x128xbf16>
    %c0_36 = arith.constant 0 : index
    %c0_37 = arith.constant 0 : index
    %c0_38 = arith.constant 0 : index
    %73 = vector.load %arg19[%c0_36, %c0_37, %c0_38] : memref<1x128x128xbf16, #tpu.memory_space<vmem>>, vector<1x128x128xbf16>
    %74 = vector.shape_cast %73 : vector<1x128x128xbf16> to vector<128x128xbf16>
    %cst_39 = arith.constant dense<0.000000e+00> : vector<16x128xf32>
    %75 = tpu.matmul %72, %74, %cst_39 {dimension_numbers = #tpu.dot_dimension_numbers<[1], [0], [0], [1], [0, 0, 1, 1], [], []>} : vector<16x128xbf16>, vector<128x128xbf16>, vector<16x128xf32> -> vector<16x128xf32>
    %c0_40 = arith.constant 0 : index
    %c0_41 = arith.constant 0 : index
    %c0_42 = arith.constant 0 : index
    %76 = vector.load %arg20[%c0_40, %c0_41, %c0_42] : memref<1x1x128xf32, #tpu.memory_space<vmem>>, vector<1x1x128xf32>
    %77 = vector.shape_cast %76 : vector<1x1x128xf32> to vector<1x128xf32>
    %78 = vector.broadcast %77 : vector<1x128xf32> to vector<16x128xf32>
    %79 = arith.addf %75, %78 : vector<16x128xf32>
    %cst_43 = arith.constant 0.000000e+00 : f32
    %80 = vector.broadcast %cst_43 : f32 to vector<16x128xf32>
    %81 = arith.maximumf %79, %80 : vector<16x128xf32>
    %82 = arith.truncf %81 : vector<16x128xf32> to vector<16x128xbf16>
    %c0_44 = arith.constant 0 : index
    %c0_45 = arith.constant 0 : index
    %c0_46 = arith.constant 0 : index
    %83 = vector.load %arg21[%c0_44, %c0_45, %c0_46] : memref<1x128x128xbf16, #tpu.memory_space<vmem>>, vector<1x128x128xbf16>
    %84 = vector.shape_cast %83 : vector<1x128x128xbf16> to vector<128x128xbf16>
    %cst_47 = arith.constant dense<0.000000e+00> : vector<16x128xf32>
    %85 = tpu.matmul %82, %84, %cst_47 {dimension_numbers = #tpu.dot_dimension_numbers<[1], [0], [0], [1], [0, 0, 1, 1], [], []>} : vector<16x128xbf16>, vector<128x128xbf16>, vector<16x128xf32> -> vector<16x128xf32>
    %c0_48 = arith.constant 0 : index
    %c0_49 = arith.constant 0 : index
    %c0_50 = arith.constant 0 : index
    %86 = vector.load %arg22[%c0_48, %c0_49, %c0_50] : memref<1x1x128xf32, #tpu.memory_space<vmem>>, vector<1x1x128xf32>
    %87 = vector.shape_cast %86 : vector<1x1x128xf32> to vector<1x128xf32>
    %88 = vector.broadcast %87 : vector<1x128xf32> to vector<16x128xf32>
    %89 = arith.addf %85, %88 : vector<16x128xf32>
    %90 = arith.addf %71, %89 : vector<16x128xf32>
    %c0_51 = arith.constant 0 : index
    %c0_52 = arith.constant 0 : index
    %c0_53 = arith.constant 0 : index
    %91 = vector.load %arg23[%c0_51, %c0_52, %c0_53] : memref<1x1x128xf32, #tpu.memory_space<vmem>>, vector<1x1x128xf32>
    %92 = vector.shape_cast %91 : vector<1x1x128xf32> to vector<1x128xf32>
    %c0_54 = arith.constant 0 : index
    %c0_55 = arith.constant 0 : index
    %c0_56 = arith.constant 0 : index
    %93 = vector.load %arg24[%c0_54, %c0_55, %c0_56] : memref<1x1x128xf32, #tpu.memory_space<vmem>>, vector<1x1x128xf32>
    %94 = vector.shape_cast %93 : vector<1x1x128xf32> to vector<1x128xf32>
    %cst_57 = arith.constant dense<0.000000e+00> : vector<16xf32>
    %95 = vector.multi_reduction <add>, %90, %cst_57 [1] : vector<16x128xf32> to vector<16xf32>
    %96 = vector.shape_cast %95 : vector<16xf32> to vector<16x1xf32>
    %cst_58 = arith.constant 0.020833334 : f32
    %97 = vector.broadcast %cst_58 : f32 to vector<16x1xf32>
    %98 = arith.mulf %96, %97 : vector<16x1xf32>
    %99 = arith.mulf %90, %90 : vector<16x128xf32>
    %cst_59 = arith.constant dense<0.000000e+00> : vector<16xf32>
    %100 = vector.multi_reduction <add>, %99, %cst_59 [1] : vector<16x128xf32> to vector<16xf32>
    %101 = vector.shape_cast %100 : vector<16xf32> to vector<16x1xf32>
    %cst_60 = arith.constant 0.020833334 : f32
    %102 = vector.broadcast %cst_60 : f32 to vector<16x1xf32>
    %103 = arith.mulf %101, %102 : vector<16x1xf32>
    %104 = arith.mulf %98, %98 : vector<16x1xf32>
    %105 = arith.subf %103, %104 : vector<16x1xf32>
    %106 = vector.broadcast %98 : vector<16x1xf32> to vector<16x128xf32>
    %107 = arith.subf %90, %106 : vector<16x128xf32>
    %cst_61 = arith.constant 9.99999974E-6 : f32
    %108 = vector.broadcast %cst_61 : f32 to vector<16x1xf32>
    %109 = arith.addf %105, %108 : vector<16x1xf32>
    %110 = math.rsqrt %109 : vector<16x1xf32>
    %111 = vector.broadcast %110 : vector<16x1xf32> to vector<16x128xf32>
    %112 = arith.mulf %107, %111 : vector<16x128xf32>
    %113 = vector.broadcast %92 : vector<1x128xf32> to vector<16x128xf32>
    %114 = arith.mulf %112, %113 : vector<16x128xf32>
    %115 = vector.broadcast %94 : vector<1x128xf32> to vector<16x128xf32>
    %116 = arith.addf %114, %115 : vector<16x128xf32>
    %c0_62 = arith.constant 0 : index
    %c0_63 = arith.constant 0 : index
    %117 = vector.load %arg30[%c0_62, %c0_63] : memref<16x128xf32, #tpu.memory_space<vmem>>, vector<16x128xf32>
    tpu.vector_store %arg30[%c0_62, %c0_63], %116 {strides = array<i32>} : memref<16x128xf32, #tpu.memory_space<vmem>>, vector<16x128xf32>,
    %c1_i32 = arith.constant 1 : i32
    %118 = arith.cmpi eq, %arg0, %c1_i32 : i32
    %119 = arith.extui %118 : i1 to i32
    %c0_i32_64 = arith.constant 0 : i32
    %120 = arith.cmpi ne, %119, %c0_i32_64 : i32
    scf.if %120 {
      %c0_65 = arith.constant 0 : index
      %c0_66 = arith.constant 0 : index
      %121 = vector.load %arg5[%c0_65, %c0_66] : memref<2x16xf32, #tpu.memory_space<vmem>>, vector<2x16xf32>
      %122 = arith.truncf %121 : vector<2x16xf32> to vector<2x16xbf16>
      %123 = arith.truncf %116 : vector<16x128xf32> to vector<16x128xbf16>
      %cst_67 = arith.constant dense<0.000000e+00> : vector<2x128xf32>
      %124 = tpu.matmul %122, %123, %cst_67 {dimension_numbers = #tpu.dot_dimension_numbers<[1], [0], [0], [1], [0, 0, 1, 1], [], []>} : vector<2x16xbf16>, vector<16x128xbf16>, vector<2x128xf32> -> vector<2x128xf32>
      %c0_68 = arith.constant 0 : index
      %c0_69 = arith.constant 0 : index
      %125 = vector.load %arg3[%c0_68, %c0_69] : memref<2x5xf32, #tpu.memory_space<vmem>>, vector<2x5xf32>
      %126 = arith.truncf %125 : vector<2x5xf32> to vector<2x5xbf16>
      %c0_70 = arith.constant 0 : index
      %c0_71 = arith.constant 0 : index
      %127 = vector.load %arg11[%c0_70, %c0_71] : memref<5x128xbf16, #tpu.memory_space<vmem>>, vector<5x128xbf16>
      %cst_72 = arith.constant dense<0.000000e+00> : vector<2x128xf32>
      %128 = tpu.matmul %126, %127, %cst_72 {dimension_numbers = #tpu.dot_dimension_numbers<[1], [0], [0], [1], [0, 0, 1, 1], [], []>} : vector<2x5xbf16>, vector<5x128xbf16>, vector<2x128xf32> -> vector<2x128xf32>
      %129 = arith.addf %124, %128 : vector<2x128xf32>
      %c0_73 = arith.constant 0 : index
      %c0_74 = arith.constant 0 : index
      %130 = vector.load %arg12[%c0_73, %c0_74] : memref<1x128xf32, #tpu.memory_space<vmem>>, vector<1x128xf32>
      %131 = vector.broadcast %130 : vector<1x128xf32> to vector<2x128xf32>
      %132 = arith.addf %129, %131 : vector<2x128xf32>
      %133 = arith.truncf %132 : vector<2x128xf32> to vector<2x128xbf16>
      %c0_75 = arith.constant 0 : index
      %c0_76 = arith.constant 0 : index
      %134 = vector.load %arg25[%c0_75, %c0_76] : memref<128x128xbf16, #tpu.memory_space<vmem>>, vector<128x128xbf16>
      %cst_77 = arith.constant dense<0.000000e+00> : vector<2x128xf32>
      %135 = tpu.matmul %133, %134, %cst_77 {dimension_numbers = #tpu.dot_dimension_numbers<[1], [0], [0], [1], [0, 0, 1, 1], [], []>} : vector<2x128xbf16>, vector<128x128xbf16>, vector<2x128xf32> -> vector<2x128xf32>
      %c0_78 = arith.constant 0 : index
      %c0_79 = arith.constant 0 : index
      %136 = vector.load %arg26[%c0_78, %c0_79] : memref<1x128xf32, #tpu.memory_space<vmem>>, vector<1x128xf32>
      %137 = vector.broadcast %136 : vector<1x128xf32> to vector<2x128xf32>
      %138 = arith.addf %135, %137 : vector<2x128xf32>
      %cst_80 = arith.constant 0.000000e+00 : f32
      %139 = vector.broadcast %cst_80 : f32 to vector<2x128xf32>
      %140 = arith.maximumf %138, %139 : vector<2x128xf32>
      %141 = arith.truncf %140 : vector<2x128xf32> to vector<2x128xbf16>
      %c0_81 = arith.constant 0 : index
      %c0_82 = arith.constant 0 : index
      %142 = vector.load %arg27[%c0_81, %c0_82] : memref<128x128xbf16, #tpu.memory_space<vmem>>, vector<128x128xbf16>
      %cst_83 = arith.constant dense<0.000000e+00> : vector<2x128xf32>
      %143 = tpu.matmul %141, %142, %cst_83 {dimension_numbers = #tpu.dot_dimension_numbers<[1], [0], [0], [1], [0, 0, 1, 1], [], []>} : vector<2x128xbf16>, vector<128x128xbf16>, vector<2x128xf32> -> vector<2x128xf32>
      %c0_84 = arith.constant 0 : index
      %c0_85 = arith.constant 0 : index
      %144 = vector.load %arg28[%c0_84, %c0_85] : memref<1x128xf32, #tpu.memory_space<vmem>>, vector<1x128xf32>
      %145 = vector.broadcast %144 : vector<1x128xf32> to vector<2x128xf32>
      %146 = arith.addf %143, %145 : vector<2x128xf32>
      %c0_86 = arith.constant 0 : index
      %c0_87 = arith.constant 0 : index
      %147 = vector.load %arg29[%c0_86, %c0_87] : memref<2x128xf32, #tpu.memory_space<vmem>>, vector<2x128xf32>
      tpu.vector_store %arg29[%c0_86, %c0_87], %146 {strides = array<i32>} : memref<2x128xf32, #tpu.memory_space<vmem>>, vector<2x128xf32>,
    } else {
    }
    return
  }
  func.func @transform_0(%arg0: i32) -> (i32, i32) {
    %c0_i32 = arith.constant 0 : i32
    %c0_i32_0 = arith.constant 0 : i32
    %c0_i32_1 = arith.constant 0 : i32
    return %c0_i32, %c0_i32_0 : i32, i32
  }
  func.func @transform_1(%arg0: i32) -> (i32, i32) {
    %c0_i32 = arith.constant 0 : i32
    %c0_i32_0 = arith.constant 0 : i32
    %c0_i32_1 = arith.constant 0 : i32
    return %c0_i32, %c0_i32_0 : i32, i32
  }
  func.func @transform_2(%arg0: i32) -> (i32, i32) {
    %c0_i32 = arith.constant 0 : i32
    %c0_i32_0 = arith.constant 0 : i32
    %c0_i32_1 = arith.constant 0 : i32
    return %c0_i32, %c0_i32_0 : i32, i32
  }
  func.func @transform_3(%arg0: i32) -> (i32, i32) {
    %c0_i32 = arith.constant 0 : i32
    %c0_i32_0 = arith.constant 0 : i32
    %c0_i32_1 = arith.constant 0 : i32
    return %c0_i32, %c0_i32_0 : i32, i32
  }
  func.func @transform_4(%arg0: i32) -> (i32, i32) {
    %c0_i32 = arith.constant 0 : i32
    %c0_i32_0 = arith.constant 0 : i32
    %c0_i32_1 = arith.constant 0 : i32
    return %c0_i32, %c0_i32_0 : i32, i32
  }
  func.func @transform_5(%arg0: i32) -> (i32, i32) {
    %c0_i32 = arith.constant 0 : i32
    %c0_i32_0 = arith.constant 0 : i32
    %c0_i32_1 = arith.constant 0 : i32
    return %c0_i32, %c0_i32_0 : i32, i32
  }
  func.func @transform_6(%arg0: i32) -> (i32, i32) {
    %c0_i32 = arith.constant 0 : i32
    %c0_i32_0 = arith.constant 0 : i32
    %c0_i32_1 = arith.constant 0 : i32
    return %c0_i32, %c0_i32_0 : i32, i32
  }
  func.func @transform_7(%arg0: i32) -> (i32, i32) {
    %c0_i32 = arith.constant 0 : i32
    %c0_i32_0 = arith.constant 0 : i32
    %c0_i32_1 = arith.constant 0 : i32
    return %c0_i32, %c0_i32_0 : i32, i32
  }
  func.func @transform_8(%arg0: i32) -> (i32, i32) {
    %c0_i32 = arith.constant 0 : i32
    %c0_i32_0 = arith.constant 0 : i32
    %c0_i32_1 = arith.constant 0 : i32
    return %c0_i32, %c0_i32_0 : i32, i32
  }
  func.func @transform_9(%arg0: i32) -> (i32, i32) {
    %c0_i32 = arith.constant 0 : i32
    %c0_i32_0 = arith.constant 0 : i32
    %c0_i32_1 = arith.constant 0 : i32
    return %c0_i32, %c0_i32_0 : i32, i32
  }
  func.func @transform_10(%arg0: i32) -> (i32, i32) {
    %c0_i32 = arith.constant 0 : i32
    %c0_i32_0 = arith.constant 0 : i32
    %c0_i32_1 = arith.constant 0 : i32
    return %c0_i32, %c0_i32_0 : i32, i32
  }
  func.func @transform_11(%arg0: i32) -> (i32, i32) {
    %c0_i32 = arith.constant 0 : i32
    %c0_i32_0 = arith.constant 0 : i32
    %c0_i32_1 = arith.constant 0 : i32
    return %c0_i32, %c0_i32_0 : i32, i32
  }
  func.func @transform_12(%arg0: i32) -> (i32, i32, i32) {
    %c0_i32 = arith.constant 0 : i32
    %c0_i32_0 = arith.constant 0 : i32
    %c0_i32_1 = arith.constant 0 : i32
    return %arg0, %c0_i32, %c0_i32_0 : i32, i32, i32
  }
  func.func @transform_13(%arg0: i32) -> (i32, i32, i32) {
    %c0_i32 = arith.constant 0 : i32
    %c0_i32_0 = arith.constant 0 : i32
    %c0_i32_1 = arith.constant 0 : i32
    return %arg0, %c0_i32, %c0_i32_0 : i32, i32, i32
  }
  func.func @transform_14(%arg0: i32) -> (i32, i32, i32) {
    %c0_i32 = arith.constant 0 : i32
    %c0_i32_0 = arith.constant 0 : i32
    %c0_i32_1 = arith.constant 0 : i32
    return %arg0, %c0_i32, %c0_i32_0 : i32, i32, i32
  }
  func.func @transform_15(%arg0: i32) -> (i32, i32, i32) {
    %c0_i32 = arith.constant 0 : i32
    %c0_i32_0 = arith.constant 0 : i32
    %c0_i32_1 = arith.constant 0 : i32
    return %arg0, %c0_i32, %c0_i32_0 : i32, i32, i32
  }
  func.func @transform_16(%arg0: i32) -> (i32, i32, i32) {
    %c0_i32 = arith.constant 0 : i32
    %c0_i32_0 = arith.constant 0 : i32
    %c0_i32_1 = arith.constant 0 : i32
    return %arg0, %c0_i32, %c0_i32_0 : i32, i32, i32
  }
  func.func @transform_17(%arg0: i32) -> (i32, i32, i32) {
    %c0_i32 = arith.constant 0 : i32
    %c0_i32_0 = arith.constant 0 : i32
    %c0_i32_1 = arith.constant 0 : i32
    return %arg0, %c0_i32, %c0_i32_0 : i32, i32, i32
  }
  func.func @transform_18(%arg0: i32) -> (i32, i32, i32) {
    %c0_i32 = arith.constant 0 : i32
    %c0_i32_0 = arith.constant 0 : i32
    %c0_i32_1 = arith.constant 0 : i32
    return %arg0, %c0_i32, %c0_i32_0 : i32, i32, i32
  }
  func.func @transform_19(%arg0: i32) -> (i32, i32, i32) {
    %c0_i32 = arith.constant 0 : i32
    %c0_i32_0 = arith.constant 0 : i32
    %c0_i32_1 = arith.constant 0 : i32
    return %arg0, %c0_i32, %c0_i32_0 : i32, i32, i32
  }
  func.func @transform_20(%arg0: i32) -> (i32, i32, i32) {
    %c0_i32 = arith.constant 0 : i32
    %c0_i32_0 = arith.constant 0 : i32
    %c0_i32_1 = arith.constant 0 : i32
    return %arg0, %c0_i32, %c0_i32_0 : i32, i32, i32
  }
  func.func @transform_21(%arg0: i32) -> (i32, i32, i32) {
    %c0_i32 = arith.constant 0 : i32
    %c0_i32_0 = arith.constant 0 : i32
    %c0_i32_1 = arith.constant 0 : i32
    return %arg0, %c0_i32, %c0_i32_0 : i32, i32, i32
  }
  func.func @transform_22(%arg0: i32) -> (i32, i32, i32) {
    %c0_i32 = arith.constant 0 : i32
    %c0_i32_0 = arith.constant 0 : i32
    %c0_i32_1 = arith.constant 0 : i32
    return %arg0, %c0_i32, %c0_i32_0 : i32, i32, i32
  }
  func.func @transform_23(%arg0: i32) -> (i32, i32, i32) {
    %c0_i32 = arith.constant 0 : i32
    %c0_i32_0 = arith.constant 0 : i32
    %c0_i32_1 = arith.constant 0 : i32
    return %arg0, %c0_i32, %c0_i32_0 : i32, i32, i32
  }
  func.func @transform_24(%arg0: i32) -> (i32, i32) {
    %c0_i32 = arith.constant 0 : i32
    %c0_i32_0 = arith.constant 0 : i32
    %c0_i32_1 = arith.constant 0 : i32
    return %c0_i32, %c0_i32_0 : i32, i32
  }
  func.func @transform_25(%arg0: i32) -> (i32, i32) {
    %c0_i32 = arith.constant 0 : i32
    %c0_i32_0 = arith.constant 0 : i32
    %c0_i32_1 = arith.constant 0 : i32
    return %c0_i32, %c0_i32_0 : i32, i32
  }
  func.func @transform_26(%arg0: i32) -> (i32, i32) {
    %c0_i32 = arith.constant 0 : i32
    %c0_i32_0 = arith.constant 0 : i32
    %c0_i32_1 = arith.constant 0 : i32
    return %c0_i32, %c0_i32_0 : i32, i32
  }
  func.func @transform_27(%arg0: i32) -> (i32, i32) {
    %c0_i32 = arith.constant 0 : i32
    %c0_i32_0 = arith.constant 0 : i32
    %c0_i32_1 = arith.constant 0 : i32
    return %c0_i32, %c0_i32_0 : i32, i32
  }
  func.func @transform_28(%arg0: i32) -> (i32, i32) {
    %c0_i32 = arith.constant 0 : i32
    %c0_i32_0 = arith.constant 0 : i32
    %c0_i32_1 = arith.constant 0 : i32
    return %c0_i32, %c0_i32_0 : i32, i32
  }
}

</mosaic_0001>

<llo_original>
// kernel: tile.9
$region0: #{tile.9}
  %s0 = inlined_call_operand.vmem [shape: f32[16,4,16], index: 0, kind: input, shape index: {}]
  %s1 = inlined_call_operand.vmem [shape: f32[16,64], index: 1, kind: output, shape index: {}]
  $region1: #{tile.9} parent=0
    #allocation0 [shape = 'u8[65536]{0}', space=vmem, size = 0x10000, scoped, tag = 'scoped mem for input reshape']
    %s3 = sshllo.u32 0, 4
    %s4 = smul.addr 4, 15
    %s5 = scalar_lea.vmem %s0, %s4
    %v6 = vld [vmem:[%s5] sm:%s3]
    %s7 = scalar_lea.vmem [#allocation0], 120
    %8 = vst [vmem:[%s7] sm:%s3] %v6
    %s9 = smul.addr 4, 14
    %s10 = scalar_lea.vmem %s0, %s9
    %v11 = vld [vmem:[%s10] sm:%s3]
    %s12 = scalar_lea.vmem [#allocation0], 112
    %13 = vst [vmem:[%s12] sm:%s3] %v11
    %s14 = smul.addr 4, 13
    %s15 = scalar_lea.vmem %s0, %s14
    %v16 = vld [vmem:[%s15] sm:%s3]
    %s17 = scalar_lea.vmem [#allocation0], 104
    %18 = vst [vmem:[%s17] sm:%s3] %v16
    %s19 = smul.addr 4, 12
    %s20 = scalar_lea.vmem %s0, %s19
    %v21 = vld [vmem:[%s20] sm:%s3]
    %s22 = scalar_lea.vmem [#allocation0], 96
    %23 = vst [vmem:[%s22] sm:%s3] %v21
    %s24 = smul.addr 4, 11
    %s25 = scalar_lea.vmem %s0, %s24
    %v26 = vld [vmem:[%s25] sm:%s3]
    %s27 = scalar_lea.vmem [#allocation0], 88
    %28 = vst [vmem:[%s27] sm:%s3] %v26
    %s29 = smul.addr 4, 10
    %s30 = scalar_lea.vmem %s0, %s29
    %v31 = vld [vmem:[%s30] sm:%s3]
    %s32 = scalar_lea.vmem [#allocation0], 80
    %33 = vst [vmem:[%s32] sm:%s3] %v31
    %s34 = smul.addr 4, 9
    %s35 = scalar_lea.vmem %s0, %s34
    %v36 = vld [vmem:[%s35] sm:%s3]
    %s37 = scalar_lea.vmem [#allocation0], 72
    %38 = vst [vmem:[%s37] sm:%s3] %v36
    %s39 = smul.addr 4, 8
    %s40 = scalar_lea.vmem %s0, %s39
    %v41 = vld [vmem:[%s40] sm:%s3]
    %s42 = scalar_lea.vmem [#allocation0], 64
    %43 = vst [vmem:[%s42] sm:%s3] %v41
    %s44 = smul.addr 4, 7
    %s45 = scalar_lea.vmem %s0, %s44
    %v46 = vld [vmem:[%s45] sm:%s3]
    %s47 = scalar_lea.vmem [#allocation0], 56
    %48 = vst [vmem:[%s47] sm:%s3] %v46
    %s49 = smul.addr 4, 6
    %s50 = scalar_lea.vmem %s0, %s49
    %v51 = vld [vmem:[%s50] sm:%s3]
    %s52 = scalar_lea.vmem [#allocation0], 48
    %53 = vst [vmem:[%s52] sm:%s3] %v51
    %s54 = smul.addr 4, 5
    %s55 = scalar_lea.vmem %s0, %s54
    %v56 = vld [vmem:[%s55] sm:%s3]
    %s57 = scalar_lea.vmem [#allocation0], 40
    %58 = vst [vmem:[%s57] sm:%s3] %v56
    %s59 = smul.addr 4, 4
    %s60 = scalar_lea.vmem %s0, %s59
    %v61 = vld [vmem:[%s60] sm:%s3]
    %s62 = scalar_lea.vmem [#allocation0], 32
    %63 = vst [vmem:[%s62] sm:%s3] %v61
    %s64 = smul.addr 4, 3
    %s65 = scalar_lea.vmem %s0, %s64
    %v66 = vld [vmem:[%s65] sm:%s3]
    %s67 = scalar_lea.vmem [#allocation0], 24
    %68 = vst [vmem:[%s67] sm:%s3] %v66
    %s69 = smul.addr 4, 2
    %s70 = scalar_lea.vmem %s0, %s69
    %v71 = vld [vmem:[%s70] sm:%s3]
    %s72 = scalar_lea.vmem [#allocation0], 16
    %73 = vst [vmem:[%s72] sm:%s3] %v71
    %s74 = scalar_lea.vmem %s0, 4
    %v75 = vld [vmem:[%s74] sm:%s3]
    %s76 = scalar_lea.vmem [#allocation0], 8
    %77 = vst [vmem:[%s76] sm:%s3] %v75
    %v78 = vld [vmem:[%s0] sm:%s3]
    %79 = vst [vmem:[#allocation0] sm:%s3] %v78
    %v80 = vld [vmem:[#allocation0] ss:$8 sm:$0xf]
    %v81 = vld [vmem:[#allocation0] ss:$8 sm:$0xf0]
    %vm82 = vcmask 1047556
    %v83 = vsel %vm82, %v81, %v80
    %vm84 = vcmask 130048
    %85 = vst.msk [vmem:[%s1] sm:$0xff] %vm84, %v83
    %s86 = scalar_lea.vmem [#allocation0], 64
    %v87 = vld [vmem:[%s86] ss:$8 sm:$0xf]
    %s88 = scalar_lea.vmem [#allocation0], 64
    %v89 = vld [vmem:[%s88] ss:$8 sm:$0xf0]
    %vm90 = vcmask 1047556
    %v91 = vsel %vm90, %v89, %v87
    %vm92 = vcmask 130048
    %s93 = scalar_lea.vmem %s1, 8
    %94 = vst.msk [vmem:[%s93] sm:$0xff] %vm92, %v91
    %s95 = scalar_lea.vmem [#allocation0], 3
    %v96 = vld [vmem:[%s95] ss:$8 sm:$0xf]
    %s97 = scalar_lea.vmem [#allocation0], 3
    %v98 = vld [vmem:[%s97] ss:$8 sm:$0xf0]
    %vm99 = vcmask 1047556
    %v100 = vsel %vm99, %v98, %v96
    %101 = vrot.lane.b32.xlu0 %v100, 48
    %v102 = vpop.permute.xlu0 %101
    %vm103 = vcmask 523648
    %104 = vst.msk [vmem:[%s1] sm:$0xff] %vm103, %v102
    %s105 = scalar_lea.vmem [#allocation0], 67
    %v106 = vld [vmem:[%s105] ss:$8 sm:$0xf]
    %s107 = scalar_lea.vmem [#allocation0], 67
    %v108 = vld [vmem:[%s107] ss:$8 sm:$0xf0]
    %vm109 = vcmask 1047556
    %v110 = vsel %vm109, %v108, %v106
    %111 = vrot.lane.b32.xlu0 %v110, 48
    %v112 = vpop.permute.xlu0 %111
    %vm113 = vcmask 523648
    %s114 = scalar_lea.vmem %s1, 8
    %115 = vst.msk [vmem:[%s114] sm:$0xff] %vm113, %v112
    %s116 = scalar_lea.vmem [#allocation0], 2
    %v117 = vld [vmem:[%s116] ss:$8 sm:$0xf]
    %s118 = scalar_lea.vmem [#allocation0], 2
    %v119 = vld [vmem:[%s118] ss:$8 sm:$0xf0]
    %vm120 = vcmask 1047556
    %v121 = vsel %vm120, %v119, %v117
    %122 = vrot.lane.b32.xlu0 %v121, 32
    %v123 = vpop.permute.xlu0 %122
    %vm124 = vcmask 392448
    %125 = vst.msk [vmem:[%s1] sm:$0xff] %vm124, %v123
    %s126 = scalar_lea.vmem [#allocation0], 66
    %v127 = vld [vmem:[%s126] ss:$8 sm:$0xf]
    %s128 = scalar_lea.vmem [#allocation0], 66
    %v129 = vld [vmem:[%s128] ss:$8 sm:$0xf0]
    %vm130 = vcmask 1047556
    %v131 = vsel %vm130, %v129, %v127
    %132 = vrot.lane.b32.xlu0 %v131, 32
    %v133 = vpop.permute.xlu0 %132
    %vm134 = vcmask 392448
    %s135 = scalar_lea.vmem %s1, 8
    %136 = vst.msk [vmem:[%s135] sm:$0xff] %vm134, %v133
    %s137 = scalar_lea.vmem [#allocation0], 1
    %v138 = vld [vmem:[%s137] ss:$8 sm:$0xf]
    %s139 = scalar_lea.vmem [#allocation0], 1
    %v140 = vld [vmem:[%s139] ss:$8 sm:$0xf0]
    %vm141 = vcmask 1047556
    %v142 = vsel %vm141, %v140, %v138
    %143 = vrot.lane.b32.xlu0 %v142, 16
    %v144 = vpop.permute.xlu0 %143
    %vm145 = vcmask 261248
    %146 = vst.msk [vmem:[%s1] sm:$0xff] %vm145, %v144
    %s147 = scalar_lea.vmem [#allocation0], 65
    %v148 = vld [vmem:[%s147] ss:$8 sm:$0xf]
    %s149 = scalar_lea.vmem [#allocation0], 65
    %v150 = vld [vmem:[%s149] ss:$8 sm:$0xf0]
    %vm151 = vcmask 1047556
    %v152 = vsel %vm151, %v150, %v148
    %153 = vrot.lane.b32.xlu0 %v152, 16
    %v154 = vpop.permute.xlu0 %153
    %vm155 = vcmask 261248
    %s156 = scalar_lea.vmem %s1, 8
    %157 = vst.msk [vmem:[%s156] sm:$0xff] %vm155, %v154

// kernel: raindrop_forward.1
$region0: #{raindrop_forward.1}
  #allocation0 [shape = 'u32[]', space=smem, size = 0x4, offset = 0x4, fixed_abs, tag = 'smem constant byte address 0x4 - core index']
  #allocation1 [shape = 'u32[144,128]{1,0:T(1,128)}', space=vmem, size = 0x12000, scoped, tag = 'internal scratch']
  #allocation2 [shape = 'f32[16,128]{1,0:T(8,128)}', space=vmem, size = 0x2000, scoped, tag = 'scratch operand']
  %s0 = inlined_call_operand.vmem [shape: f32[16,4], index: 0, kind: input, shape index: {}]
  %s1 = inlined_call_operand.vmem [shape: f32[16,1], index: 1, kind: input, shape index: {}]
  %s2 = inlined_call_operand.vmem [shape: f32[2,5], index: 2, kind: input, shape index: {}]
  %s3 = inlined_call_operand.vmem [shape: f32[16,64], index: 3, kind: input, shape index: {}]
  %s4 = inlined_call_operand.vmem [shape: f32[2,16], index: 4, kind: input, shape index: {}]
  %s5 = inlined_call_operand.vmem [shape: f32[64,128], index: 5, kind: input, shape index: {}]
  %s6 = inlined_call_operand.vmem [shape: f32[64,64], index: 6, kind: input, shape index: {}]
  %s7 = inlined_call_operand.vmem [shape: bf16[4,128], index: 7, kind: input, shape index: {}]
  %s8 = inlined_call_operand.vmem [shape: f32[1,128], index: 8, kind: input, shape index: {}]
  %s9 = inlined_call_operand.vmem [shape: f32[1,128], index: 9, kind: input, shape index: {}]
  %s10 = inlined_call_operand.vmem [shape: bf16[5,128], index: 10, kind: input, shape index: {}]
  %s11 = inlined_call_operand.hbm [shape: f32[1,128], index: 11, kind: input, shape index: {}]
  %s12 = inlined_call_operand.vmem [shape: bf16[2,128,384], index: 12, kind: input, shape index: {}]
  %s13 = inlined_call_operand.hbm [shape: f32[2,1,384], index: 13, kind: input, shape index: {}]
  %s14 = inlined_call_operand.hbm [shape: bf16[2,128,128], index: 14, kind: input, shape index: {}]
  %s15 = inlined_call_operand.hbm [shape: f32[2,1,128], index: 15, kind: input, shape index: {}]
  %s16 = inlined_call_operand.hbm [shape: f32[2,1,128], index: 16, kind: input, shape index: {}]
  %s17 = inlined_call_operand.hbm [shape: f32[2,1,128], index: 17, kind: input, shape index: {}]
  %s18 = inlined_call_operand.hbm [shape: bf16[2,128,128], index: 18, kind: input, shape index: {}]
  %s19 = inlined_call_operand.hbm [shape: f32[2,1,128], index: 19, kind: input, shape index: {}]
  %s20 = inlined_call_operand.hbm [shape: bf16[2,128,128], index: 20, kind: input, shape index: {}]
  %s21 = inlined_call_operand.hbm [shape: f32[2,1,128], index: 21, kind: input, shape index: {}]
  %s22 = inlined_call_operand.hbm [shape: f32[2,1,128], index: 22, kind: input, shape index: {}]
  %s23 = inlined_call_operand.hbm [shape: f32[2,1,128], index: 23, kind: input, shape index: {}]
  %s24 = inlined_call_operand.vmem [shape: bf16[128,128], index: 24, kind: input, shape index: {}]
  %s25 = inlined_call_operand.hbm [shape: f32[1,128], index: 25, kind: input, shape index: {}]
  %s26 = inlined_call_operand.hbm [shape: bf16[128,128], index: 26, kind: input, shape index: {}]
  %s27 = inlined_call_operand.hbm [shape: f32[1,128], index: 27, kind: input, shape index: {}]
  %s28 = inlined_call_operand.hbm [shape: f32[2,128], index: 28, kind: output, shape index: {}]
  %s29 = sld [smem:[#allocation0]]
  $region213: #{raindrop_forward.1} parent=0
    _
  %s31 = ssub.s32 1, %s29
  %s32 = scalar_select 0, %s31, %s29
  $region1: #{raindrop_forward.1} parent=0
    #allocation3 [shape = 'u8[512]{0}', space=vmem, size = 0x400, scoped, tag = 'input window, operand 11, single buffered']
    #allocation4 [shape = 's32[2]{0}', space=sflag, size = 0x8, scoped, tag = 'scoped memory for raindrop_forward.1']
    #allocation5 [shape = 's32[2]{0}', space=sflag, size = 0x8, scoped, tag = 'scoped memory for raindrop_forward.1']
    #allocation6 [shape = 'u8[3072]{0}', space=vmem, size = 0xc00, scoped, tag = 'input window, operand 13']
    #allocation7 [shape = 's32[2]{0}', space=sflag, size = 0x8, scoped, tag = 'scoped memory for raindrop_forward.1']
    #allocation8 [shape = 'u8[65536]{0}', space=vmem, size = 0x10000, scoped, tag = 'input window, operand 14']
    #allocation9 [shape = 'u8[1024]{0}', space=vmem, size = 0x400, scoped, tag = 'input window, operand 15']
    #allocation10 [shape = 's32[2]{0}', space=sflag, size = 0x8, scoped, tag = 'scoped memory for raindrop_forward.1']
    #allocation11 [shape = 'u8[1024]{0}', space=vmem, size = 0x400, scoped, tag = 'input window, operand 16']
    #allocation12 [shape = 'u8[1024]{0}', space=vmem, size = 0x400, scoped, tag = 'input window, operand 17']
    #allocation13 [shape = 's32[2]{0}', space=sflag, size = 0x8, scoped, tag = 'scoped memory for raindrop_forward.1']
    #allocation14 [shape = 'u8[65536]{0}', space=vmem, size = 0x10000, scoped, tag = 'input window, operand 18']
    #allocation15 [shape = 'u8[1024]{0}', space=vmem, size = 0x400, scoped, tag = 'input window, operand 19']
    #allocation16 [shape = 's32[2]{0}', space=sflag, size = 0x8, scoped, tag = 'scoped memory for raindrop_forward.1']
    #allocation17 [shape = 'u8[65536]{0}', space=vmem, size = 0x10000, scoped, tag = 'input window, operand 20']
    #allocation18 [shape = 'u8[1024]{0}', space=vmem, size = 0x400, scoped, tag = 'input window, operand 21']
    #allocation19 [shape = 's32[2]{0}', space=sflag, size = 0x8, scoped, tag = 'scoped memory for raindrop_forward.1']
    #allocation20 [shape = 'u8[1024]{0}', space=vmem, size = 0x400, scoped, tag = 'input window, operand 22']
    #allocation21 [shape = 'u8[1024]{0}', space=vmem, size = 0x400, scoped, tag = 'input window, operand 23']
    #allocation22 [shape = 's32[2]{0}', space=sflag, size = 0x8, scoped, tag = 'scoped memory for raindrop_forward.1']
    #allocation23 [shape = 'u8[512]{0}', space=vmem, size = 0x400, scoped, tag = 'input window, operand 25, single buffered']
    #allocation24 [shape = 'u8[32768]{0}', space=vmem, size = 0x8000, scoped, tag = 'input window, operand 26, single buffered']
    #allocation25 [shape = 's32[1]{0}', space=sflag, size = 0x4, scoped, tag = 'scoped memory for raindrop_forward.1']
    #allocation26 [shape = 'u8[512]{0}', space=vmem, size = 0x400, scoped, tag = 'input window, operand 27, single buffered']
    #allocation27 [shape = 'u8[1024]{0}', space=vmem, size = 0x400, scoped, tag = 'output window, operand 0, single buffered']
    %33 = vsyncpa [#allocation4], 0
    %34 = vsyncpa [#allocation7], 0
    %s35 = scalar_lea.sflag [#allocation7], 1
    %36 = vsyncpa %s35, 0
    %37 = vsyncpa [#allocation10], 0
    %s38 = scalar_lea.sflag [#allocation10], 1
    %39 = vsyncpa %s38, 0
    %40 = vsyncpa [#allocation13], 0
    %s41 = scalar_lea.sflag [#allocation13], 1
    %42 = vsyncpa %s41, 0
    %43 = vsyncpa [#allocation16], 0
    %s44 = scalar_lea.sflag [#allocation16], 1
    %45 = vsyncpa %s44, 0
    %46 = vsyncpa [#allocation19], 0
    %s47 = scalar_lea.sflag [#allocation19], 1
    %48 = vsyncpa %s47, 0
    %49 = vsyncpa [#allocation22], 0
    %s50 = scalar_lea.sflag [#allocation22], 1
    %51 = vsyncpa %s50, 0
    %52 = vsyncpa [#allocation25], 0
    %53 = vsyncpa [#allocation5], 0
    loop: start=0, step=1, limit=4
    $region2: #{raindrop_forward.1} parent=1 // loop_pre_header
      _
    $region3: #{raindrop_forward.1} parent=1 // loop_header
      %s55 = sphi 0, %s59
      %p56 = scmp.ge.s32.totalorder %s55, 4
      %s63 = sphi 0, %s63
      %s65 = sphi 0, %s63
      %s66 = sphi 0, %s65
      %s80 = sphi 0, %s66
      %s84 = sphi 0, %s84
      %s86 = sphi 0, %s84
      %s87 = sphi 0, %s86
      %s101 = sphi 0, %s87
      %s105 = sphi 0, %s105
      %s107 = sphi 0, %s105
      %s108 = sphi 0, %s107
      %s122 = sphi 0, %s108
      %s126 = sphi 0, %s126
      %s128 = sphi 0, %s126
      %s129 = sphi 0, %s128
      %s143 = sphi 0, %s129
      %s147 = sphi 0, %s147
      %s149 = sphi 0, %s147
      %s150 = sphi 0, %s149
      %s164 = sphi 0, %s150
      %s168 = sphi 0, %s168
      %s170 = sphi 0, %s168
      %s171 = sphi 0, %s170
      %s185 = sphi 0, %s171
      %s189 = sphi 0, %s189
      %s191 = sphi 0, %s189
      %s192 = sphi 0, %s191
      %s206 = sphi 0, %s192
      %s210 = sphi 0, %s210
      %s212 = sphi 0, %s210
      %s213 = sphi 0, %s212
      %s227 = sphi 0, %s213
      %s231 = sphi 0, %s231
      %s233 = sphi 0, %s231
      %s234 = sphi 0, %s233
      %s248 = sphi 0, %s234
      %s252 = sphi 0, %s252
      %s254 = sphi 0, %s252
      %s255 = sphi 0, %s254
      %s269 = sphi 0, %s255
      %s273 = sphi 0, %s273
      %s275 = sphi 0, %s273
      %s276 = sphi 0, %s275
      %s290 = sphi 0, %s276
      %s294 = sphi 0, %s294
      %s296 = sphi 0, %s294
      %s297 = sphi 0, %s296
      %s311 = sphi 0, %s297
      %s317 = sphi 0, %s319
      %s320 = sphi 0, %s317
      %s321 = sphi 0, %s320
      %s337 = sphi 0, %s321
      %s343 = sphi 0, %s345
      %s346 = sphi 0, %s343
      %s347 = sphi 0, %s346
      %s363 = sphi 0, %s347
      %s369 = sphi 0, %s371
      %s372 = sphi 0, %s369
      %s373 = sphi 0, %s372
      %s389 = sphi 0, %s373
      %s395 = sphi 0, %s397
      %s398 = sphi 0, %s395
      %s399 = sphi 0, %s398
      %s415 = sphi 0, %s399
      %s421 = sphi 0, %s423
      %s424 = sphi 0, %s421
      %s425 = sphi 0, %s424
      %s441 = sphi 0, %s425
      %s447 = sphi 0, %s449
      %s450 = sphi 0, %s447
      %s451 = sphi 0, %s450
      %s467 = sphi 0, %s451
      %s473 = sphi 0, %s475
      %s476 = sphi 0, %s473
      %s477 = sphi 0, %s476
      %s493 = sphi 0, %s477
      %s499 = sphi 0, %s501
      %s502 = sphi 0, %s499
      %s503 = sphi 0, %s502
      %s519 = sphi 0, %s503
      %s525 = sphi 0, %s527
      %s528 = sphi 0, %s525
      %s529 = sphi 0, %s528
      %s545 = sphi 0, %s529
      %s551 = sphi 0, %s553
      %s554 = sphi 0, %s551
      %s555 = sphi 0, %s554
      %s571 = sphi 0, %s555
      %s577 = sphi 0, %s579
      %s580 = sphi 0, %s577
      %s581 = sphi 0, %s580
      %s597 = sphi 0, %s581
      %s603 = sphi 0, %s605
      %s606 = sphi 0, %s603
      %s607 = sphi 0, %s606
      %s623 = sphi 0, %s607
      %s627 = sphi 0, %s627
      %s629 = sphi 0, %s627
      %s630 = sphi 0, %s629
      %s644 = sphi 0, %s630
      %s648 = sphi 0, %s648
      %s650 = sphi 0, %s648
      %s651 = sphi 0, %s650
      %s665 = sphi 0, %s651
      %s669 = sphi 0, %s669
      %s671 = sphi 0, %s669
      %s672 = sphi 0, %s671
      %s686 = sphi 0, %s672
      %s690 = sphi 0, %s690
      %s692 = sphi 0, %s690
      %s693 = sphi 0, %s692
      %s707 = sphi 0, %s693
      %s711 = sphi 0, %s711
      %s713 = sphi 0, %s711
      %s714 = sphi 0, %s713
      %s728 = sphi 0, %s714
    $region4: #{raindrop_forward.1} parent=1 // loop_header_branch
      %58 = sbr.rel (%p56) target = $region8
    $region5: #{raindrop_forward.1} parent=1 // loop_body
      %s60 = ssub.s32 %s55, 1
      %s61 = ssub.s32 %s55, 2
      %s62 = sadd.s32 %s55, 1
      %s64 = sadd.s32 %s63, 1
      %p67 = scmp.eq.s32.totalorder %s55, 1
      %p68 = scmp.ne.s32.totalorder %s63, %s65
      %p69 = scmp.eq.s32.totalorder %s55, 0
      %p70 = por %p68, %p69
      %p71 = scmp.ne.s32.totalorder %s63, %s65
      %p72 = scmp.eq.s32.totalorder %s60, 1
      %p73 = por %p71, %p72
      %p74 = scmp.ne.s32.totalorder %s65, %s66
      %p75 = scmp.eq.s32.totalorder %s60, 0
      %p76 = por %p74, %p75
      %p77 = scmp.ne.s32.totalorder %s65, %s66
      %p78 = scmp.eq.s32.totalorder %s61, 1
      %p79 = por %p77, %p78
      %p81 = scmp.ne.s32.totalorder %s66, %s80
      %p82 = scmp.eq.s32.totalorder %s61, 0
      %p83 = por %p81, %p82
      %s85 = sadd.s32 %s84, 1
      %p88 = scmp.eq.s32.totalorder %s55, 1
      %p89 = scmp.ne.s32.totalorder %s84, %s86
      %p90 = scmp.eq.s32.totalorder %s55, 0
      %p91 = por %p89, %p90
      %p92 = scmp.ne.s32.totalorder %s84, %s86
      %p93 = scmp.eq.s32.totalorder %s60, 1
      %p94 = por %p92, %p93
      %p95 = scmp.ne.s32.totalorder %s86, %s87
      %p96 = scmp.eq.s32.totalorder %s60, 0
      %p97 = por %p95, %p96
      %p98 = scmp.ne.s32.totalorder %s86, %s87
      %p99 = scmp.eq.s32.totalorder %s61, 1
      %p100 = por %p98, %p99
      %p102 = scmp.ne.s32.totalorder %s87, %s101
      %p103 = scmp.eq.s32.totalorder %s61, 0
      %p104 = por %p102, %p103
      %s106 = sadd.s32 %s105, 1
      %p109 = scmp.eq.s32.totalorder %s55, 1
      %p110 = scmp.ne.s32.totalorder %s105, %s107
      %p111 = scmp.eq.s32.totalorder %s55, 0
      %p112 = por %p110, %p111
      %p113 = scmp.ne.s32.totalorder %s105, %s107
      %p114 = scmp.eq.s32.totalorder %s60, 1
      %p115 = por %p113, %p114
      %p116 = scmp.ne.s32.totalorder %s107, %s108
      %p117 = scmp.eq.s32.totalorder %s60, 0
      %p118 = por %p116, %p117
      %p119 = scmp.ne.s32.totalorder %s107, %s108
      %p120 = scmp.eq.s32.totalorder %s61, 1
      %p121 = por %p119, %p120
      %p123 = scmp.ne.s32.totalorder %s108, %s122
      %p124 = scmp.eq.s32.totalorder %s61, 0
      %p125 = por %p123, %p124
      %s127 = sadd.s32 %s126, 1
      %p130 = scmp.eq.s32.totalorder %s55, 1
      %p131 = scmp.ne.s32.totalorder %s126, %s128
      %p132 = scmp.eq.s32.totalorder %s55, 0
      %p133 = por %p131, %p132
      %p134 = scmp.ne.s32.totalorder %s126, %s128
      %p135 = scmp.eq.s32.totalorder %s60, 1
      %p136 = por %p134, %p135
      %p137 = scmp.ne.s32.totalorder %s128, %s129
      %p138 = scmp.eq.s32.totalorder %s60, 0
      %p139 = por %p137, %p138
      %p140 = scmp.ne.s32.totalorder %s128, %s129
      %p141 = scmp.eq.s32.totalorder %s61, 1
      %p142 = por %p140, %p141
      %p144 = scmp.ne.s32.totalorder %s129, %s143
      %p145 = scmp.eq.s32.totalorder %s61, 0
      %p146 = por %p144, %p145
      %s148 = sadd.s32 %s147, 1
      %p151 = scmp.eq.s32.totalorder %s55, 1
      %p152 = scmp.ne.s32.totalorder %s147, %s149
      %p153 = scmp.eq.s32.totalorder %s55, 0
      %p154 = por %p152, %p153
      %p155 = scmp.ne.s32.totalorder %s147, %s149
      %p156 = scmp.eq.s32.totalorder %s60, 1
      %p157 = por %p155, %p156
      %p158 = scmp.ne.s32.totalorder %s149, %s150
      %p159 = scmp.eq.s32.totalorder %s60, 0
      %p160 = por %p158, %p159
      %p161 = scmp.ne.s32.totalorder %s149, %s150
      %p162 = scmp.eq.s32.totalorder %s61, 1
      %p163 = por %p161, %p162
      %p165 = scmp.ne.s32.totalorder %s150, %s164
      %p166 = scmp.eq.s32.totalorder %s61, 0
      %p167 = por %p165, %p166
      %s169 = sadd.s32 %s168, 1
      %p172 = scmp.eq.s32.totalorder %s55, 1
      %p173 = scmp.ne.s32.totalorder %s168, %s170
      %p174 = scmp.eq.s32.totalorder %s55, 0
      %p175 = por %p173, %p174
      %p176 = scmp.ne.s32.totalorder %s168, %s170
      %p177 = scmp.eq.s32.totalorder %s60, 1
      %p178 = por %p176, %p177
      %p179 = scmp.ne.s32.totalorder %s170, %s171
      %p180 = scmp.eq.s32.totalorder %s60, 0
      %p181 = por %p179, %p180
      %p182 = scmp.ne.s32.totalorder %s170, %s171
      %p183 = scmp.eq.s32.totalorder %s61, 1
      %p184 = por %p182, %p183
      %p186 = scmp.ne.s32.totalorder %s171, %s185
      %p187 = scmp.eq.s32.totalorder %s61, 0
      %p188 = por %p186, %p187
      %s190 = sadd.s32 %s189, 1
      %p193 = scmp.eq.s32.totalorder %s55, 1
      %p194 = scmp.ne.s32.totalorder %s189, %s191
      %p195 = scmp.eq.s32.totalorder %s55, 0
      %p196 = por %p194, %p195
      %p197 = scmp.ne.s32.totalorder %s189, %s191
      %p198 = scmp.eq.s32.totalorder %s60, 1
      %p199 = por %p197, %p198
      %p200 = scmp.ne.s32.totalorder %s191, %s192
      %p201 = scmp.eq.s32.totalorder %s60, 0
      %p202 = por %p200, %p201
      %p203 = scmp.ne.s32.totalorder %s191, %s192
      %p204 = scmp.eq.s32.totalorder %s61, 1
      %p205 = por %p203, %p204
      %p207 = scmp.ne.s32.totalorder %s192, %s206
      %p208 = scmp.eq.s32.totalorder %s61, 0
      %p209 = por %p207, %p208
      %s211 = sadd.s32 %s210, 1
      %p214 = scmp.eq.s32.totalorder %s55, 1
      %p215 = scmp.ne.s32.totalorder %s210, %s212
      %p216 = scmp.eq.s32.totalorder %s55, 0
      %p217 = por %p215, %p216
      %p218 = scmp.ne.s32.totalorder %s210, %s212
      %p219 = scmp.eq.s32.totalorder %s60, 1
      %p220 = por %p218, %p219
      %p221 = scmp.ne.s32.totalorder %s212, %s213
      %p222 = scmp.eq.s32.totalorder %s60, 0
      %p223 = por %p221, %p222
      %p224 = scmp.ne.s32.totalorder %s212, %s213
      %p225 = scmp.eq.s32.totalorder %s61, 1
      %p226 = por %p224, %p225
      %p228 = scmp.ne.s32.totalorder %s213, %s227
      %p229 = scmp.eq.s32.totalorder %s61, 0
      %p230 = por %p228, %p229
      %s232 = sadd.s32 %s231, 1
      %p235 = scmp.eq.s32.totalorder %s55, 1
      %p236 = scmp.ne.s32.totalorder %s231, %s233
      %p237 = scmp.eq.s32.totalorder %s55, 0
      %p238 = por %p236, %p237
      %p239 = scmp.ne.s32.totalorder %s231, %s233
      %p240 = scmp.eq.s32.totalorder %s60, 1
      %p241 = por %p239, %p240
      %p242 = scmp.ne.s32.totalorder %s233, %s234
      %p243 = scmp.eq.s32.totalorder %s60, 0
      %p244 = por %p242, %p243
      %p245 = scmp.ne.s32.totalorder %s233, %s234
      %p246 = scmp.eq.s32.totalorder %s61, 1
      %p247 = por %p245, %p246
      %p249 = scmp.ne.s32.totalorder %s234, %s248
      %p250 = scmp.eq.s32.totalorder %s61, 0
      %p251 = por %p249, %p250
      %s253 = sadd.s32 %s252, 1
      %p256 = scmp.eq.s32.totalorder %s55, 1
      %p257 = scmp.ne.s32.totalorder %s252, %s254
      %p258 = scmp.eq.s32.totalorder %s55, 0
      %p259 = por %p257, %p258
      %p260 = scmp.ne.s32.totalorder %s252, %s254
      %p261 = scmp.eq.s32.totalorder %s60, 1
      %p262 = por %p260, %p261
      %p263 = scmp.ne.s32.totalorder %s254, %s255
      %p264 = scmp.eq.s32.totalorder %s60, 0
      %p265 = por %p263, %p264
      %p266 = scmp.ne.s32.totalorder %s254, %s255
      %p267 = scmp.eq.s32.totalorder %s61, 1
      %p268 = por %p266, %p267
      %p270 = scmp.ne.s32.totalorder %s255, %s269
      %p271 = scmp.eq.s32.totalorder %s61, 0
      %p272 = por %p270, %p271
      %s274 = sadd.s32 %s273, 1
      %p277 = scmp.eq.s32.totalorder %s55, 1
      %p278 = scmp.ne.s32.totalorder %s273, %s275
      %p279 = scmp.eq.s32.totalorder %s55, 0
      %p280 = por %p278, %p279
      %p281 = scmp.ne.s32.totalorder %s273, %s275
      %p282 = scmp.eq.s32.totalorder %s60, 1
      %p283 = por %p281, %p282
      %p284 = scmp.ne.s32.totalorder %s275, %s276
      %p285 = scmp.eq.s32.totalorder %s60, 0
      %p286 = por %p284, %p285
      %p287 = scmp.ne.s32.totalorder %s275, %s276
      %p288 = scmp.eq.s32.totalorder %s61, 1
      %p289 = por %p287, %p288
      %p291 = scmp.ne.s32.totalorder %s276, %s290
      %p292 = scmp.eq.s32.totalorder %s61, 0
      %p293 = por %p291, %p292
      %s295 = sadd.s32 %s294, 1
      %p298 = scmp.eq.s32.totalorder %s55, 1
      %p299 = scmp.ne.s32.totalorder %s294, %s296
      %p300 = scmp.eq.s32.totalorder %s55, 0
      %p301 = por %p299, %p300
      %p302 = scmp.ne.s32.totalorder %s294, %s296
      %p303 = scmp.eq.s32.totalorder %s60, 1
      %p304 = por %p302, %p303
      %p305 = scmp.ne.s32.totalorder %s296, %s297
      %p306 = scmp.eq.s32.totalorder %s60, 0
      %p307 = por %p305, %p306
      %p308 = scmp.ne.s32.totalorder %s296, %s297
      %p309 = scmp.eq.s32.totalorder %s61, 1
      %p310 = por %p308, %p309
      %p312 = scmp.ne.s32.totalorder %s297, %s311
      %p313 = scmp.eq.s32.totalorder %s61, 0
      %p314 = por %p312, %p313
      %s315 = ssub.s32 %s55, %s62
      %p316 = scmp.eq.s32.totalorder %s315, 0
      %s318 = sadd.s32 %s317, 1
      %s319 = scalar_select %p316, %s317, %s318
      %p322 = pneg %p316
      %p323 = scmp.eq.s32.totalorder %s55, 1
      %p324 = por %p322, %p323
      %p325 = scmp.ne.s32.totalorder %s317, %s320
      %p326 = scmp.eq.s32.totalorder %s55, 0
      %p327 = por %p325, %p326
      %p328 = scmp.ne.s32.totalorder %s317, %s320
      %p329 = scmp.eq.s32.totalorder %s60, 1
      %p330 = por %p328, %p329
      %p331 = scmp.ne.s32.totalorder %s320, %s321
      %p332 = scmp.eq.s32.totalorder %s60, 0
      %p333 = por %p331, %p332
      %p334 = scmp.ne.s32.totalorder %s320, %s321
      %p335 = scmp.eq.s32.totalorder %s61, 1
      %p336 = por %p334, %p335
      %p338 = scmp.ne.s32.totalorder %s321, %s337
      %p339 = scmp.eq.s32.totalorder %s61, 0
      %p340 = por %p338, %p339
      %s341 = ssub.s32 %s55, %s62
      %p342 = scmp.eq.s32.totalorder %s341, 0
      %s344 = sadd.s32 %s343, 1
      %s345 = scalar_select %p342, %s343, %s344
      %p348 = pneg %p342
      %p349 = scmp.eq.s32.totalorder %s55, 1
      %p350 = por %p348, %p349
      %p351 = scmp.ne.s32.totalorder %s343, %s346
      %p352 = scmp.eq.s32.totalorder %s55, 0
      %p353 = por %p351, %p352
      %p354 = scmp.ne.s32.totalorder %s343, %s346
      %p355 = scmp.eq.s32.totalorder %s60, 1
      %p356 = por %p354, %p355
      %p357 = scmp.ne.s32.totalorder %s346, %s347
      %p358 = scmp.eq.s32.totalorder %s60, 0
      %p359 = por %p357, %p358
      %p360 = scmp.ne.s32.totalorder %s346, %s347
      %p361 = scmp.eq.s32.totalorder %s61, 1
      %p362 = por %p360, %p361
      %p364 = scmp.ne.s32.totalorder %s347, %s363
      %p365 = scmp.eq.s32.totalorder %s61, 0
      %p366 = por %p364, %p365
      %s367 = ssub.s32 %s55, %s62
      %p368 = scmp.eq.s32.totalorder %s367, 0
      %s370 = sadd.s32 %s369, 1
      %s371 = scalar_select %p368, %s369, %s370
      %p374 = pneg %p368
      %p375 = scmp.eq.s32.totalorder %s55, 1
      %p376 = por %p374, %p375
      %p377 = scmp.ne.s32.totalorder %s369, %s372
      %p378 = scmp.eq.s32.totalorder %s55, 0
      %p379 = por %p377, %p378
      %p380 = scmp.ne.s32.totalorder %s369, %s372
      %p381 = scmp.eq.s32.totalorder %s60, 1
      %p382 = por %p380, %p381
      %p383 = scmp.ne.s32.totalorder %s372, %s373
      %p384 = scmp.eq.s32.totalorder %s60, 0
      %p385 = por %p383, %p384
      %p386 = scmp.ne.s32.totalorder %s372, %s373
      %p387 = scmp.eq.s32.totalorder %s61, 1
      %p388 = por %p386, %p387
      %p390 = scmp.ne.s32.totalorder %s373, %s389
      %p391 = scmp.eq.s32.totalorder %s61, 0
      %p392 = por %p390, %p391
      %s393 = ssub.s32 %s55, %s62
      %p394 = scmp.eq.s32.totalorder %s393, 0
      %s396 = sadd.s32 %s395, 1
      %s397 = scalar_select %p394, %s395, %s396
      %p400 = pneg %p394
      %p401 = scmp.eq.s32.totalorder %s55, 1
      %p402 = por %p400, %p401
      %p403 = scmp.ne.s32.totalorder %s395, %s398
      %p404 = scmp.eq.s32.totalorder %s55, 0
      %p405 = por %p403, %p404
      %p406 = scmp.ne.s32.totalorder %s395, %s398
      %p407 = scmp.eq.s32.totalorder %s60, 1
      %p408 = por %p406, %p407
      %p409 = scmp.ne.s32.totalorder %s398, %s399
      %p410 = scmp.eq.s32.totalorder %s60, 0
      %p411 = por %p409, %p410
      %p412 = scmp.ne.s32.totalorder %s398, %s399
      %p413 = scmp.eq.s32.totalorder %s61, 1
      %p414 = por %p412, %p413
      %p416 = scmp.ne.s32.totalorder %s399, %s415
      %p417 = scmp.eq.s32.totalorder %s61, 0
      %p418 = por %p416, %p417
      %s419 = ssub.s32 %s55, %s62
      %p420 = scmp.eq.s32.totalorder %s419, 0
      %s422 = sadd.s32 %s421, 1
      %s423 = scalar_select %p420, %s421, %s422
      %p426 = pneg %p420
      %p427 = scmp.eq.s32.totalorder %s55, 1
      %p428 = por %p426, %p427
      %p429 = scmp.ne.s32.totalorder %s421, %s424
      %p430 = scmp.eq.s32.totalorder %s55, 0
      %p431 = por %p429, %p430
      %p432 = scmp.ne.s32.totalorder %s421, %s424
      %p433 = scmp.eq.s32.totalorder %s60, 1
      %p434 = por %p432, %p433
      %p435 = scmp.ne.s32.totalorder %s424, %s425
      %p436 = scmp.eq.s32.totalorder %s60, 0
      %p437 = por %p435, %p436
      %p438 = scmp.ne.s32.totalorder %s424, %s425
      %p439 = scmp.eq.s32.totalorder %s61, 1
      %p440 = por %p438, %p439
      %p442 = scmp.ne.s32.totalorder %s425, %s441
      %p443 = scmp.eq.s32.totalorder %s61, 0
      %p444 = por %p442, %p443
      %s445 = ssub.s32 %s55, %s62
      %p446 = scmp.eq.s32.totalorder %s445, 0
      %s448 = sadd.s32 %s447, 1
      %s449 = scalar_select %p446, %s447, %s448
      %p452 = pneg %p446
      %p453 = scmp.eq.s32.totalorder %s55, 1
      %p454 = por %p452, %p453
      %p455 = scmp.ne.s32.totalorder %s447, %s450
      %p456 = scmp.eq.s32.totalorder %s55, 0
      %p457 = por %p455, %p456
      %p458 = scmp.ne.s32.totalorder %s447, %s450
      %p459 = scmp.eq.s32.totalorder %s60, 1
      %p460 = por %p458, %p459
      %p461 = scmp.ne.s32.totalorder %s450, %s451
      %p462 = scmp.eq.s32.totalorder %s60, 0
      %p463 = por %p461, %p462
      %p464 = scmp.ne.s32.totalorder %s450, %s451
      %p465 = scmp.eq.s32.totalorder %s61, 1
      %p466 = por %p464, %p465
      %p468 = scmp.ne.s32.totalorder %s451, %s467
      %p469 = scmp.eq.s32.totalorder %s61, 0
      %p470 = por %p468, %p469
      %s471 = ssub.s32 %s55, %s62
      %p472 = scmp.eq.s32.totalorder %s471, 0
      %s474 = sadd.s32 %s473, 1
      %s475 = scalar_select %p472, %s473, %s474
      %p478 = pneg %p472
      %p479 = scmp.eq.s32.totalorder %s55, 1
      %p480 = por %p478, %p479
      %p481 = scmp.ne.s32.totalorder %s473, %s476
      %p482 = scmp.eq.s32.totalorder %s55, 0
      %p483 = por %p481, %p482
      %p484 = scmp.ne.s32.totalorder %s473, %s476
      %p485 = scmp.eq.s32.totalorder %s60, 1
      %p486 = por %p484, %p485
      %p487 = scmp.ne.s32.totalorder %s476, %s477
      %p488 = scmp.eq.s32.totalorder %s60, 0
      %p489 = por %p487, %p488
      %p490 = scmp.ne.s32.totalorder %s476, %s477
      %p491 = scmp.eq.s32.totalorder %s61, 1
      %p492 = por %p490, %p491
      %p494 = scmp.ne.s32.totalorder %s477, %s493
      %p495 = scmp.eq.s32.totalorder %s61, 0
      %p496 = por %p494, %p495
      %s497 = ssub.s32 %s55, %s62
      %p498 = scmp.eq.s32.totalorder %s497, 0
      %s500 = sadd.s32 %s499, 1
      %s501 = scalar_select %p498, %s499, %s500
      %p504 = pneg %p498
      %p505 = scmp.eq.s32.totalorder %s55, 1
      %p506 = por %p504, %p505
      %p507 = scmp.ne.s32.totalorder %s499, %s502
      %p508 = scmp.eq.s32.totalorder %s55, 0
      %p509 = por %p507, %p508
      %p510 = scmp.ne.s32.totalorder %s499, %s502
      %p511 = scmp.eq.s32.totalorder %s60, 1
      %p512 = por %p510, %p511
      %p513 = scmp.ne.s32.totalorder %s502, %s503
      %p514 = scmp.eq.s32.totalorder %s60, 0
      %p515 = por %p513, %p514
      %p516 = scmp.ne.s32.totalorder %s502, %s503
      %p517 = scmp.eq.s32.totalorder %s61, 1
      %p518 = por %p516, %p517
      %p520 = scmp.ne.s32.totalorder %s503, %s519
      %p521 = scmp.eq.s32.totalorder %s61, 0
      %p522 = por %p520, %p521
      %s523 = ssub.s32 %s55, %s62
      %p524 = scmp.eq.s32.totalorder %s523, 0
      %s526 = sadd.s32 %s525, 1
      %s527 = scalar_select %p524, %s525, %s526
      %p530 = pneg %p524
      %p531 = scmp.eq.s32.totalorder %s55, 1
      %p532 = por %p530, %p531
      %p533 = scmp.ne.s32.totalorder %s525, %s528
      %p534 = scmp.eq.s32.totalorder %s55, 0
      %p535 = por %p533, %p534
      %p536 = scmp.ne.s32.totalorder %s525, %s528
      %p537 = scmp.eq.s32.totalorder %s60, 1
      %p538 = por %p536, %p537
      %p539 = scmp.ne.s32.totalorder %s528, %s529
      %p540 = scmp.eq.s32.totalorder %s60, 0
      %p541 = por %p539, %p540
      %p542 = scmp.ne.s32.totalorder %s528, %s529
      %p543 = scmp.eq.s32.totalorder %s61, 1
      %p544 = por %p542, %p543
      %p546 = scmp.ne.s32.totalorder %s529, %s545
      %p547 = scmp.eq.s32.totalorder %s61, 0
      %p548 = por %p546, %p547
      %s549 = ssub.s32 %s55, %s62
      %p550 = scmp.eq.s32.totalorder %s549, 0
      %s552 = sadd.s32 %s551, 1
      %s553 = scalar_select %p550, %s551, %s552
      %p556 = pneg %p550
      %p557 = scmp.eq.s32.totalorder %s55, 1
      %p558 = por %p556, %p557
      %p559 = scmp.ne.s32.totalorder %s551, %s554
      %p560 = scmp.eq.s32.totalorder %s55, 0
      %p561 = por %p559, %p560
      %p562 = scmp.ne.s32.totalorder %s551, %s554
      %p563 = scmp.eq.s32.totalorder %s60, 1
      %p564 = por %p562, %p563
      %p565 = scmp.ne.s32.totalorder %s554, %s555
      %p566 = scmp.eq.s32.totalorder %s60, 0
      %p567 = por %p565, %p566
      %p568 = scmp.ne.s32.totalorder %s554, %s555
      %p569 = scmp.eq.s32.totalorder %s61, 1
      %p570 = por %p568, %p569
      %p572 = scmp.ne.s32.totalorder %s555, %s571
      %p573 = scmp.eq.s32.totalorder %s61, 0
      %p574 = por %p572, %p573
      %s575 = ssub.s32 %s55, %s62
      %p576 = scmp.eq.s32.totalorder %s575, 0
      %s578 = sadd.s32 %s577, 1
      %s579 = scalar_select %p576, %s577, %s578
      %p582 = pneg %p576
      %p583 = scmp.eq.s32.totalorder %s55, 1
      %p584 = por %p582, %p583
      %p585 = scmp.ne.s32.totalorder %s577, %s580
      %p586 = scmp.eq.s32.totalorder %s55, 0
      %p587 = por %p585, %p586
      %p588 = scmp.ne.s32.totalorder %s577, %s580
      %p589 = scmp.eq.s32.totalorder %s60, 1
      %p590 = por %p588, %p589
      %p591 = scmp.ne.s32.totalorder %s580, %s581
      %p592 = scmp.eq.s32.totalorder %s60, 0
      %p593 = por %p591, %p592
      %p594 = scmp.ne.s32.totalorder %s580, %s581
      %p595 = scmp.eq.s32.totalorder %s61, 1
      %p596 = por %p594, %p595
      %p598 = scmp.ne.s32.totalorder %s581, %s597
      %p599 = scmp.eq.s32.totalorder %s61, 0
      %p600 = por %p598, %p599
      %s601 = ssub.s32 %s55, %s62
      %p602 = scmp.eq.s32.totalorder %s601, 0
      %s604 = sadd.s32 %s603, 1
      %s605 = scalar_select %p602, %s603, %s604
      %p608 = pneg %p602
      %p609 = scmp.eq.s32.totalorder %s55, 1
      %p610 = por %p608, %p609
      %p611 = scmp.ne.s32.totalorder %s603, %s606
      %p612 = scmp.eq.s32.totalorder %s55, 0
      %p613 = por %p611, %p612
      %p614 = scmp.ne.s32.totalorder %s603, %s606
      %p615 = scmp.eq.s32.totalorder %s60, 1
      %p616 = por %p614, %p615
      %p617 = scmp.ne.s32.totalorder %s606, %s607
      %p618 = scmp.eq.s32.totalorder %s60, 0
      %p619 = por %p617, %p618
      %p620 = scmp.ne.s32.totalorder %s606, %s607
      %p621 = scmp.eq.s32.totalorder %s61, 1
      %p622 = por %p620, %p621
      %p624 = scmp.ne.s32.totalorder %s607, %s623
      %p625 = scmp.eq.s32.totalorder %s61, 0
      %p626 = por %p624, %p625
      %s628 = sadd.s32 %s627, 1
      %p631 = scmp.eq.s32.totalorder %s55, 1
      %p632 = scmp.ne.s32.totalorder %s627, %s629
      %p633 = scmp.eq.s32.totalorder %s55, 0
      %p634 = por %p632, %p633
      %p635 = scmp.ne.s32.totalorder %s627, %s629
      %p636 = scmp.eq.s32.totalorder %s60, 1
      %p637 = por %p635, %p636
      %p638 = scmp.ne.s32.totalorder %s629, %s630
      %p639 = scmp.eq.s32.totalorder %s60, 0
      %p640 = por %p638, %p639
      %p641 = scmp.ne.s32.totalorder %s629, %s630
      %p642 = scmp.eq.s32.totalorder %s61, 1
      %p643 = por %p641, %p642
      %p645 = scmp.ne.s32.totalorder %s630, %s644
      %p646 = scmp.eq.s32.totalorder %s61, 0
      %p647 = por %p645, %p646
      %s649 = sadd.s32 %s648, 1
      %p652 = scmp.eq.s32.totalorder %s55, 1
      %p653 = scmp.ne.s32.totalorder %s648, %s650
      %p654 = scmp.eq.s32.totalorder %s55, 0
      %p655 = por %p653, %p654
      %p656 = scmp.ne.s32.totalorder %s648, %s650
      %p657 = scmp.eq.s32.totalorder %s60, 1
      %p658 = por %p656, %p657
      %p659 = scmp.ne.s32.totalorder %s650, %s651
      %p660 = scmp.eq.s32.totalorder %s60, 0
      %p661 = por %p659, %p660
      %p662 = scmp.ne.s32.totalorder %s650, %s651
      %p663 = scmp.eq.s32.totalorder %s61, 1
      %p664 = por %p662, %p663
      %p666 = scmp.ne.s32.totalorder %s651, %s665
      %p667 = scmp.eq.s32.totalorder %s61, 0
      %p668 = por %p666, %p667
      %s670 = sadd.s32 %s669, 1
      %p673 = scmp.eq.s32.totalorder %s55, 1
      %p674 = scmp.ne.s32.totalorder %s669, %s671
      %p675 = scmp.eq.s32.totalorder %s55, 0
      %p676 = por %p674, %p675
      %p677 = scmp.ne.s32.totalorder %s669, %s671
      %p678 = scmp.eq.s32.totalorder %s60, 1
      %p679 = por %p677, %p678
      %p680 = scmp.ne.s32.totalorder %s671, %s672
      %p681 = scmp.eq.s32.totalorder %s60, 0
      %p682 = por %p680, %p681
      %p683 = scmp.ne.s32.totalorder %s671, %s672
      %p684 = scmp.eq.s32.totalorder %s61, 1
      %p685 = por %p683, %p684
      %p687 = scmp.ne.s32.totalorder %s672, %s686
      %p688 = scmp.eq.s32.totalorder %s61, 0
      %p689 = por %p687, %p688
      %s691 = sadd.s32 %s690, 1
      %p694 = scmp.eq.s32.totalorder %s55, 1
      %p695 = scmp.ne.s32.totalorder %s690, %s692
      %p696 = scmp.eq.s32.totalorder %s55, 0
      %p697 = por %p695, %p696
      %p698 = scmp.ne.s32.totalorder %s690, %s692
      %p699 = scmp.eq.s32.totalorder %s60, 1
      %p700 = por %p698, %p699
      %p701 = scmp.ne.s32.totalorder %s692, %s693
      %p702 = scmp.eq.s32.totalorder %s60, 0
      %p703 = por %p701, %p702
      %p704 = scmp.ne.s32.totalorder %s692, %s693
      %p705 = scmp.eq.s32.totalorder %s61, 1
      %p706 = por %p704, %p705
      %p708 = scmp.ne.s32.totalorder %s693, %s707
      %p709 = scmp.eq.s32.totalorder %s61, 0
      %p710 = por %p708, %p709
      %s712 = sadd.s32 %s711, 1
      %p715 = scmp.eq.s32.totalorder %s55, 1
      %p716 = scmp.ne.s32.totalorder %s711, %s713
      %p717 = scmp.eq.s32.totalorder %s55, 0
      %p718 = por %p716, %p717
      %p719 = scmp.ne.s32.totalorder %s711, %s713
      %p720 = scmp.eq.s32.totalorder %s60, 1
      %p721 = por %p719, %p720
      %p722 = scmp.ne.s32.totalorder %s713, %s714
      %p723 = scmp.eq.s32.totalorder %s60, 0
      %p724 = por %p722, %p723
      %p725 = scmp.ne.s32.totalorder %s713, %s714
      %p726 = scmp.eq.s32.totalorder %s61, 1
      %p727 = por %p725, %p726
      %p729 = scmp.ne.s32.totalorder %s714, %s728
      %p730 = scmp.eq.s32.totalorder %s61, 0
      %p731 = por %p729, %p730
      %p732 = scmp.le.s32.totalorder 1, %s55
      %p733 = scmp.lt.s32.totalorder %s55, 3
      %p734 = pnand %p732, %p733
      %p735 = pneg %p734
      // Predicated region
      $region9: #{raindrop_forward.1} parent=5 // pred_check
        _
      $region10: #{raindrop_forward.1} parent=5 // pred_check_branch
        %737 = sbr.rel (%p734) target = $region12
      $region11: #{raindrop_forward.1} parent=5 // pred_region
        %s738 = ssub.s32 %s55, 1
        // Predicated region
        $region13: #{raindrop_forward.1} parent=11 // pred_check
          %p739 = pneg %p76
        $region14: #{raindrop_forward.1} parent=11 // pred_check_branch
          %741 = sbr.rel (%p739) target = $region16
        $region15: #{raindrop_forward.1} parent=11 // pred_region
          _
        $region16: #{raindrop_forward.1} parent=11 // pred_fallthru
          _
        // Predicated region
        $region17: #{raindrop_forward.1} parent=11 // pred_check
          %p742 = pneg %p97
        $region18: #{raindrop_forward.1} parent=11 // pred_check_branch
          %744 = sbr.rel (%p742) target = $region20
        $region19: #{raindrop_forward.1} parent=11 // pred_region
          _
        $region20: #{raindrop_forward.1} parent=11 // pred_fallthru
          _
        // Predicated region
        $region21: #{raindrop_forward.1} parent=11 // pred_check
          %p745 = pneg %p118
        $region22: #{raindrop_forward.1} parent=11 // pred_check_branch
          %747 = sbr.rel (%p745) target = $region24
        $region23: #{raindrop_forward.1} parent=11 // pred_region
          _
        $region24: #{raindrop_forward.1} parent=11 // pred_fallthru
          _
        // Predicated region
        $region25: #{raindrop_forward.1} parent=11 // pred_check
          %p748 = pneg %p139
        $region26: #{raindrop_forward.1} parent=11 // pred_check_branch
          %750 = sbr.rel (%p748) target = $region28
        $region27: #{raindrop_forward.1} parent=11 // pred_region
          _
        $region28: #{raindrop_forward.1} parent=11 // pred_fallthru
          _
        // Predicated region
        $region29: #{raindrop_forward.1} parent=11 // pred_check
          %p751 = pneg %p160
        $region30: #{raindrop_forward.1} parent=11 // pred_check_branch
          %753 = sbr.rel (%p751) target = $region32
        $region31: #{raindrop_forward.1} parent=11 // pred_region
          _
        $region32: #{raindrop_forward.1} parent=11 // pred_fallthru
          _
        // Predicated region
        $region33: #{raindrop_forward.1} parent=11 // pred_check
          %p754 = pneg %p181
        $region34: #{raindrop_forward.1} parent=11 // pred_check_branch
          %756 = sbr.rel (%p754) target = $region36
        $region35: #{raindrop_forward.1} parent=11 // pred_region
          _
        $region36: #{raindrop_forward.1} parent=11 // pred_fallthru
          _
        // Predicated region
        $region37: #{raindrop_forward.1} parent=11 // pred_check
          %p757 = pneg %p202
        $region38: #{raindrop_forward.1} parent=11 // pred_check_branch
          %759 = sbr.rel (%p757) target = $region40
        $region39: #{raindrop_forward.1} parent=11 // pred_region
          _
        $region40: #{raindrop_forward.1} parent=11 // pred_fallthru
          _
        // Predicated region
        $region41: #{raindrop_forward.1} parent=11 // pred_check
          %p760 = pneg %p223
        $region42: #{raindrop_forward.1} parent=11 // pred_check_branch
          %762 = sbr.rel (%p760) target = $region44
        $region43: #{raindrop_forward.1} parent=11 // pred_region
          _
        $region44: #{raindrop_forward.1} parent=11 // pred_fallthru
          _
        // Predicated region
        $region45: #{raindrop_forward.1} parent=11 // pred_check
          %p763 = pneg %p244
        $region46: #{raindrop_forward.1} parent=11 // pred_check_branch
          %765 = sbr.rel (%p763) target = $region48
        $region47: #{raindrop_forward.1} parent=11 // pred_region
          _
        $region48: #{raindrop_forward.1} parent=11 // pred_fallthru
          _
        // Predicated region
        $region49: #{raindrop_forward.1} parent=11 // pred_check
          %p766 = pneg %p265
        $region50: #{raindrop_forward.1} parent=11 // pred_check_branch
          %768 = sbr.rel (%p766) target = $region52
        $region51: #{raindrop_forward.1} parent=11 // pred_region
          _
        $region52: #{raindrop_forward.1} parent=11 // pred_fallthru
          _
        // Predicated region
        $region53: #{raindrop_forward.1} parent=11 // pred_check
          %p769 = pneg %p286
        $region54: #{raindrop_forward.1} parent=11 // pred_check_branch
          %771 = sbr.rel (%p769) target = $region56
        $region55: #{raindrop_forward.1} parent=11 // pred_region
          _
        $region56: #{raindrop_forward.1} parent=11 // pred_fallthru
          _
        // Predicated region
        $region57: #{raindrop_forward.1} parent=11 // pred_check
          %p772 = pneg %p307
        $region58: #{raindrop_forward.1} parent=11 // pred_check_branch
          %774 = sbr.rel (%p772) target = $region60
        $region59: #{raindrop_forward.1} parent=11 // pred_region
          %s776 = ssub.s32 16, 16
          %777 = vsyncadd [#allocation4], %s776
          %s779 = sshll.u32 [#allocation3], 4
          %s780 = int_to_ptr.vmem [resolvable:$true] %s779
          %782 = dma.hbm_to_vmem [thread:$0]  %s11, 16, %s780, [#allocation4]
        $region60: #{raindrop_forward.1} parent=11 // pred_fallthru
          _
        // Predicated region
        $region61: #{raindrop_forward.1} parent=11 // pred_check
          %p783 = pneg %p640
        $region62: #{raindrop_forward.1} parent=11 // pred_check_branch
          %785 = sbr.rel (%p783) target = $region64
        $region63: #{raindrop_forward.1} parent=11 // pred_region
          _
        $region64: #{raindrop_forward.1} parent=11 // pred_fallthru
          _
        // Predicated region
        $region65: #{raindrop_forward.1} parent=11 // pred_check
          %p786 = pneg %p661
        $region66: #{raindrop_forward.1} parent=11 // pred_check_branch
          %788 = sbr.rel (%p786) target = $region68
        $region67: #{raindrop_forward.1} parent=11 // pred_region
          %s790 = ssub.s32 16, 16
          %791 = vsyncadd [#allocation22], %s790
          %s793 = sshll.u32 [#allocation23], 4
          %s794 = int_to_ptr.vmem [resolvable:$true] %s793
          %796 = dma.hbm_to_vmem [thread:$0]  %s25, 16, %s794, [#allocation22]
        $region68: #{raindrop_forward.1} parent=11 // pred_fallthru
          _
        // Predicated region
        $region69: #{raindrop_forward.1} parent=11 // pred_check
          %p797 = pneg %p682
        $region70: #{raindrop_forward.1} parent=11 // pred_check_branch
          %799 = sbr.rel (%p797) target = $region72
        $region71: #{raindrop_forward.1} parent=11 // pred_region
          %s801 = ssub.s32 1024, 1024
          %802 = vsyncadd [#allocation25], %s801
          %s803 = sshll.u32 [#allocation24], 4
          %s804 = int_to_ptr.vmem [resolvable:$true] %s803
          %809 = dma.hbm_to_vmem [thread:$0]  %s26, 1024, %s804, [#allocation25], 64, 64, 4
        $region72: #{raindrop_forward.1} parent=11 // pred_fallthru
          _
        // Predicated region
        $region73: #{raindrop_forward.1} parent=11 // pred_check
          %p810 = pneg %p703
        $region74: #{raindrop_forward.1} parent=11 // pred_check_branch
          %812 = sbr.rel (%p810) target = $region76
        $region75: #{raindrop_forward.1} parent=11 // pred_region
          %s814 = ssub.s32 16, 16
          %815 = vsyncadd [#allocation25], %s814
          %s817 = sshll.u32 [#allocation26], 4
          %s818 = int_to_ptr.vmem [resolvable:$true] %s817
          %820 = dma.hbm_to_vmem [thread:$0]  %s27, 16, %s818, [#allocation25]
        $region76: #{raindrop_forward.1} parent=11 // pred_fallthru
          _
      $region12: #{raindrop_forward.1} parent=5 // pred_fallthru
        _
      %p821 = scmp.lt.s32.totalorder %s55, 2
      // Predicated region
      $region77: #{raindrop_forward.1} parent=5 // pred_check
        %p822 = pneg %p821
      $region78: #{raindrop_forward.1} parent=5 // pred_check_branch
        %824 = sbr.rel (%p822) target = $region80
      $region79: #{raindrop_forward.1} parent=5 // pred_region
        // Predicated region
        $region81: #{raindrop_forward.1} parent=79 // pred_check
          %p825 = pneg %p327
        $region82: #{raindrop_forward.1} parent=79 // pred_check_branch
          %827 = sbr.rel (%p825) target = $region84
        $region83: #{raindrop_forward.1} parent=79 // pred_region
          %p828 = scmp.lt.s32.totalorder %s55, 1
          %s829 = scalar_select %p828, %s55, 1
          %s830 = smul.addr %s829, 48
          %s831 = smul.addr %s830, 4
          %s832 = scalar_lea.vmem %s12, %s831
        $region84: #{raindrop_forward.1} parent=79 // pred_fallthru
          _
        // Predicated region
        $region85: #{raindrop_forward.1} parent=79 // pred_check
          %p833 = pneg %p353
        $region86: #{raindrop_forward.1} parent=79 // pred_check_branch
          %835 = sbr.rel (%p833) target = $region88
        $region87: #{raindrop_forward.1} parent=79 // pred_region
          %s836 = sand.u32 %s55, 1
          %s837 = scalar_lea.sflag [#allocation7], %s836
          %s838 = sand.u32 %s343, 1
          %s839 = smul.addr %s838, 3
          %s840 = scalar_lea.vmem [#allocation6], %s839
          %s842 = ssub.s32 48, 48
          %843 = vsyncadd %s837, %s842
          %s844 = smul.addr %s55, 3
          %s845 = smul.addr %s844, 16
          %s846 = scalar_lea.hbm %s13, %s845
          %s848 = sshll.u32 %s840, 4
          %s849 = int_to_ptr.vmem [resolvable:$true] %s848
          %851 = dma.hbm_to_vmem [thread:$0]  %s846, 48, %s849, %s837
        $region88: #{raindrop_forward.1} parent=79 // pred_fallthru
          _
        // Predicated region
        $region89: #{raindrop_forward.1} parent=79 // pred_check
          %p852 = pneg %p379
        $region90: #{raindrop_forward.1} parent=79 // pred_check_branch
          %854 = sbr.rel (%p852) target = $region92
        $region91: #{raindrop_forward.1} parent=79 // pred_region
          %s855 = sand.u32 %s55, 1
          %s856 = scalar_lea.sflag [#allocation7], %s855
          %s857 = sand.u32 %s369, 1
          %s858 = smul.addr %s857, 64
          %s859 = scalar_lea.vmem [#allocation8], %s858
          %s861 = ssub.s32 1024, 1024
          %862 = vsyncadd %s856, %s861
          %s863 = smul.addr %s55, 16
          %s864 = smul.addr %s863, 64
          %s865 = scalar_lea.hbm %s14, %s864
          %s866 = sshll.u32 %s859, 4
          %s867 = int_to_ptr.vmem [resolvable:$true] %s866
          %872 = dma.hbm_to_vmem [thread:$0]  %s865, 1024, %s867, %s856, 64, 64, 4
        $region92: #{raindrop_forward.1} parent=79 // pred_fallthru
          _
        // Predicated region
        $region93: #{raindrop_forward.1} parent=79 // pred_check
          %p873 = pneg %p405
        $region94: #{raindrop_forward.1} parent=79 // pred_check_branch
          %875 = sbr.rel (%p873) target = $region96
        $region95: #{raindrop_forward.1} parent=79 // pred_region
          %s876 = sand.u32 %s55, 1
          %s877 = scalar_lea.sflag [#allocation10], %s876
          %s878 = sand.u32 %s395, 1
          %s879 = scalar_lea.vmem [#allocation9], %s878
          %s881 = ssub.s32 16, 16
          %882 = vsyncadd %s877, %s881
          %s883 = smul.addr %s55, 16
          %s884 = scalar_lea.hbm %s15, %s883
          %s886 = sshll.u32 %s879, 4
          %s887 = int_to_ptr.vmem [resolvable:$true] %s886
          %889 = dma.hbm_to_vmem [thread:$0]  %s884, 16, %s887, %s877
        $region96: #{raindrop_forward.1} parent=79 // pred_fallthru
          _
        // Predicated region
        $region97: #{raindrop_forward.1} parent=79 // pred_check
          %p890 = pneg %p431
        $region98: #{raindrop_forward.1} parent=79 // pred_check_branch
          %892 = sbr.rel (%p890) target = $region100
        $region99: #{raindrop_forward.1} parent=79 // pred_region
          %s893 = sand.u32 %s55, 1
          %s894 = scalar_lea.sflag [#allocation10], %s893
          %s895 = sand.u32 %s421, 1
          %s896 = scalar_lea.vmem [#allocation11], %s895
          %s898 = ssub.s32 16, 16
          %899 = vsyncadd %s894, %s898
          %s900 = smul.addr %s55, 16
          %s901 = scalar_lea.hbm %s16, %s900
          %s903 = sshll.u32 %s896, 4
          %s904 = int_to_ptr.vmem [resolvable:$true] %s903
          %906 = dma.hbm_to_vmem [thread:$0]  %s901, 16, %s904, %s894
        $region100: #{raindrop_forward.1} parent=79 // pred_fallthru
          _
        // Predicated region
        $region101: #{raindrop_forward.1} parent=79 // pred_check
          %p907 = pneg %p457
        $region102: #{raindrop_forward.1} parent=79 // pred_check_branch
          %909 = sbr.rel (%p907) target = $region104
        $region103: #{raindrop_forward.1} parent=79 // pred_region
          %s910 = sand.u32 %s55, 1
          %s911 = scalar_lea.sflag [#allocation13], %s910
          %s912 = sand.u32 %s447, 1
          %s913 = scalar_lea.vmem [#allocation12], %s912
          %s915 = ssub.s32 16, 16
          %916 = vsyncadd %s911, %s915
          %s917 = smul.addr %s55, 16
          %s918 = scalar_lea.hbm %s17, %s917
          %s920 = sshll.u32 %s913, 4
          %s921 = int_to_ptr.vmem [resolvable:$true] %s920
          %923 = dma.hbm_to_vmem [thread:$0]  %s918, 16, %s921, %s911
        $region104: #{raindrop_forward.1} parent=79 // pred_fallthru
          _
        // Predicated region
        $region105: #{raindrop_forward.1} parent=79 // pred_check
          %p924 = pneg %p483
        $region106: #{raindrop_forward.1} parent=79 // pred_check_branch
          %926 = sbr.rel (%p924) target = $region108
        $region107: #{raindrop_forward.1} parent=79 // pred_region
          %s927 = sand.u32 %s55, 1
          %s928 = scalar_lea.sflag [#allocation13], %s927
          %s929 = sand.u32 %s473, 1
          %s930 = smul.addr %s929, 64
          %s931 = scalar_lea.vmem [#allocation14], %s930
          %s933 = ssub.s32 1024, 1024
          %934 = vsyncadd %s928, %s933
          %s935 = smul.addr %s55, 16
          %s936 = smul.addr %s935, 64
          %s937 = scalar_lea.hbm %s18, %s936
          %s938 = sshll.u32 %s931, 4
          %s939 = int_to_ptr.vmem [resolvable:$true] %s938
          %944 = dma.hbm_to_vmem [thread:$0]  %s937, 1024, %s939, %s928, 64, 64, 4
        $region108: #{raindrop_forward.1} parent=79 // pred_fallthru
          _
        // Predicated region
        $region109: #{raindrop_forward.1} parent=79 // pred_check
          %p945 = pneg %p509
        $region110: #{raindrop_forward.1} parent=79 // pred_check_branch
          %947 = sbr.rel (%p945) target = $region112
        $region111: #{raindrop_forward.1} parent=79 // pred_region
          %s948 = sand.u32 %s55, 1
          %s949 = scalar_lea.sflag [#allocation16], %s948
          %s950 = sand.u32 %s499, 1
          %s951 = scalar_lea.vmem [#allocation15], %s950
          %s953 = ssub.s32 16, 16
          %954 = vsyncadd %s949, %s953
          %s955 = smul.addr %s55, 16
          %s956 = scalar_lea.hbm %s19, %s955
          %s958 = sshll.u32 %s951, 4
          %s959 = int_to_ptr.vmem [resolvable:$true] %s958
          %961 = dma.hbm_to_vmem [thread:$0]  %s956, 16, %s959, %s949
        $region112: #{raindrop_forward.1} parent=79 // pred_fallthru
          _
        // Predicated region
        $region113: #{raindrop_forward.1} parent=79 // pred_check
          %p962 = pneg %p535
        $region114: #{raindrop_forward.1} parent=79 // pred_check_branch
          %964 = sbr.rel (%p962) target = $region116
        $region115: #{raindrop_forward.1} parent=79 // pred_region
          %s965 = sand.u32 %s55, 1
          %s966 = scalar_lea.sflag [#allocation16], %s965
          %s967 = sand.u32 %s525, 1
          %s968 = smul.addr %s967, 64
          %s969 = scalar_lea.vmem [#allocation17], %s968
          %s971 = ssub.s32 1024, 1024
          %972 = vsyncadd %s966, %s971
          %s973 = smul.addr %s55, 16
          %s974 = smul.addr %s973, 64
          %s975 = scalar_lea.hbm %s20, %s974
          %s976 = sshll.u32 %s969, 4
          %s977 = int_to_ptr.vmem [resolvable:$true] %s976
          %982 = dma.hbm_to_vmem [thread:$0]  %s975, 1024, %s977, %s966, 64, 64, 4
        $region116: #{raindrop_forward.1} parent=79 // pred_fallthru
          _
        // Predicated region
        $region117: #{raindrop_forward.1} parent=79 // pred_check
          %p983 = pneg %p561
        $region118: #{raindrop_forward.1} parent=79 // pred_check_branch
          %985 = sbr.rel (%p983) target = $region120
        $region119: #{raindrop_forward.1} parent=79 // pred_region
          %s986 = sand.u32 %s55, 1
          %s987 = scalar_lea.sflag [#allocation19], %s986
          %s988 = sand.u32 %s551, 1
          %s989 = scalar_lea.vmem [#allocation18], %s988
          %s991 = ssub.s32 16, 16
          %992 = vsyncadd %s987, %s991
          %s993 = smul.addr %s55, 16
          %s994 = scalar_lea.hbm %s21, %s993
          %s996 = sshll.u32 %s989, 4
          %s997 = int_to_ptr.vmem [resolvable:$true] %s996
          %999 = dma.hbm_to_vmem [thread:$0]  %s994, 16, %s997, %s987
        $region120: #{raindrop_forward.1} parent=79 // pred_fallthru
          _
        // Predicated region
        $region121: #{raindrop_forward.1} parent=79 // pred_check
          %p1000 = pneg %p587
        $region122: #{raindrop_forward.1} parent=79 // pred_check_branch
          %1002 = sbr.rel (%p1000) target = $region124
        $region123: #{raindrop_forward.1} parent=79 // pred_region
          %s1003 = sand.u32 %s55, 1
          %s1004 = scalar_lea.sflag [#allocation19], %s1003
          %s1005 = sand.u32 %s577, 1
          %s1006 = scalar_lea.vmem [#allocation20], %s1005
          %s1008 = ssub.s32 16, 16
          %1009 = vsyncadd %s1004, %s1008
          %s1010 = smul.addr %s55, 16
          %s1011 = scalar_lea.hbm %s22, %s1010
          %s1013 = sshll.u32 %s1006, 4
          %s1014 = int_to_ptr.vmem [resolvable:$true] %s1013
          %1016 = dma.hbm_to_vmem [thread:$0]  %s1011, 16, %s1014, %s1004
        $region124: #{raindrop_forward.1} parent=79 // pred_fallthru
          _
        // Predicated region
        $region125: #{raindrop_forward.1} parent=79 // pred_check
          %p1017 = pneg %p613
        $region126: #{raindrop_forward.1} parent=79 // pred_check_branch
          %1019 = sbr.rel (%p1017) target = $region128
        $region127: #{raindrop_forward.1} parent=79 // pred_region
          %s1020 = sand.u32 %s55, 1
          %s1021 = scalar_lea.sflag [#allocation22], %s1020
          %s1022 = sand.u32 %s603, 1
          %s1023 = scalar_lea.vmem [#allocation21], %s1022
          %s1025 = ssub.s32 16, 16
          %1026 = vsyncadd %s1021, %s1025
          %s1027 = smul.addr %s55, 16
          %s1028 = scalar_lea.hbm %s23, %s1027
          %s1030 = sshll.u32 %s1023, 4
          %s1031 = int_to_ptr.vmem [resolvable:$true] %s1030
          %1033 = dma.hbm_to_vmem [thread:$0]  %s1028, 16, %s1031, %s1021
        $region128: #{raindrop_forward.1} parent=79 // pred_fallthru
          _
      $region80: #{raindrop_forward.1} parent=5 // pred_fallthru
        _
      %p1034 = scmp.le.s32.totalorder 1, %s55
      %p1035 = scmp.lt.s32.totalorder %s55, 3
      %p1036 = pnand %p1034, %p1035
      %p1037 = pneg %p1036
      // Predicated region
      $region129: #{raindrop_forward.1} parent=5 // pred_check
        _
      $region130: #{raindrop_forward.1} parent=5 // pred_check_branch
        %1039 = sbr.rel (%p1036) target = $region132
      $region131: #{raindrop_forward.1} parent=5 // pred_region
        %s1040 = ssub.s32 %s55, 1
        // Predicated region
        $region133: #{raindrop_forward.1} parent=131 // pred_check
          %p1041 = pneg %p307
        $region134: #{raindrop_forward.1} parent=131 // pred_check_branch
          %1043 = sbr.rel (%p1041) target = $region136
        $region135: #{raindrop_forward.1} parent=131 // pred_region
          %1044 = dma.done [#allocation4], 16
        $region136: #{raindrop_forward.1} parent=131 // pred_fallthru
          _
        %s1045 = sand.u32 %s60, 1
        %s1046 = scalar_lea.sflag [#allocation7], %s1045
        %s1047 = sand.u32 %s346, 1
        %s1048 = smul.addr %s1047, 3
        %s1049 = scalar_lea.vmem [#allocation6], %s1048
        // Predicated region
        $region137: #{raindrop_forward.1} parent=131 // pred_check
          %p1050 = pneg %p359
        $region138: #{raindrop_forward.1} parent=131 // pred_check_branch
          %1052 = sbr.rel (%p1050) target = $region140
        $region139: #{raindrop_forward.1} parent=131 // pred_region
          %1053 = dma.done %s1046, 48
        $region140: #{raindrop_forward.1} parent=131 // pred_fallthru
          _
        %s1054 = sand.u32 %s60, 1
        %s1055 = scalar_lea.sflag [#allocation7], %s1054
        %s1056 = sand.u32 %s372, 1
        %s1057 = smul.addr %s1056, 64
        %s1058 = scalar_lea.vmem [#allocation8], %s1057
        // Predicated region
        $region141: #{raindrop_forward.1} parent=131 // pred_check
          %p1059 = pneg %p385
        $region142: #{raindrop_forward.1} parent=131 // pred_check_branch
          %1061 = sbr.rel (%p1059) target = $region144
        $region143: #{raindrop_forward.1} parent=131 // pred_region
          %1062 = dma.done %s1055, 1024
        $region144: #{raindrop_forward.1} parent=131 // pred_fallthru
          _
        %s1063 = sand.u32 %s60, 1
        %s1064 = scalar_lea.sflag [#allocation10], %s1063
        %s1065 = sand.u32 %s398, 1
        %s1066 = scalar_lea.vmem [#allocation9], %s1065
        // Predicated region
        $region145: #{raindrop_forward.1} parent=131 // pred_check
          %p1067 = pneg %p411
        $region146: #{raindrop_forward.1} parent=131 // pred_check_branch
          %1069 = sbr.rel (%p1067) target = $region148
        $region147: #{raindrop_forward.1} parent=131 // pred_region
          %1070 = dma.done %s1064, 16
        $region148: #{raindrop_forward.1} parent=131 // pred_fallthru
          _
        %s1071 = sand.u32 %s60, 1
        %s1072 = scalar_lea.sflag [#allocation10], %s1071
        %s1073 = sand.u32 %s424, 1
        %s1074 = scalar_lea.vmem [#allocation11], %s1073
        // Predicated region
        $region149: #{raindrop_forward.1} parent=131 // pred_check
          %p1075 = pneg %p437
        $region150: #{raindrop_forward.1} parent=131 // pred_check_branch
          %1077 = sbr.rel (%p1075) target = $region152
        $region151: #{raindrop_forward.1} parent=131 // pred_region
          %1078 = dma.done %s1072, 16
        $region152: #{raindrop_forward.1} parent=131 // pred_fallthru
          _
        %s1079 = sand.u32 %s60, 1
        %s1080 = scalar_lea.sflag [#allocation13], %s1079
        %s1081 = sand.u32 %s450, 1
        %s1082 = scalar_lea.vmem [#allocation12], %s1081
        // Predicated region
        $region153: #{raindrop_forward.1} parent=131 // pred_check
          %p1083 = pneg %p463
        $region154: #{raindrop_forward.1} parent=131 // pred_check_branch
          %1085 = sbr.rel (%p1083) target = $region156
        $region155: #{raindrop_forward.1} parent=131 // pred_region
          %1086 = dma.done %s1080, 16
        $region156: #{raindrop_forward.1} parent=131 // pred_fallthru
          _
        %s1087 = sand.u32 %s60, 1
        %s1088 = scalar_lea.sflag [#allocation13], %s1087
        %s1089 = sand.u32 %s476, 1
        %s1090 = smul.addr %s1089, 64
        %s1091 = scalar_lea.vmem [#allocation14], %s1090
        // Predicated region
        $region157: #{raindrop_forward.1} parent=131 // pred_check
          %p1092 = pneg %p489
        $region158: #{raindrop_forward.1} parent=131 // pred_check_branch
          %1094 = sbr.rel (%p1092) target = $region160
        $region159: #{raindrop_forward.1} parent=131 // pred_region
          %1095 = dma.done %s1088, 1024
        $region160: #{raindrop_forward.1} parent=131 // pred_fallthru
          _
        %s1096 = sand.u32 %s60, 1
        %s1097 = scalar_lea.sflag [#allocation16], %s1096
        %s1098 = sand.u32 %s502, 1
        %s1099 = scalar_lea.vmem [#allocation15], %s1098
        // Predicated region
        $region161: #{raindrop_forward.1} parent=131 // pred_check
          %p1100 = pneg %p515
        $region162: #{raindrop_forward.1} parent=131 // pred_check_branch
          %1102 = sbr.rel (%p1100) target = $region164
        $region163: #{raindrop_forward.1} parent=131 // pred_region
          %1103 = dma.done %s1097, 16
        $region164: #{raindrop_forward.1} parent=131 // pred_fallthru
          _
        %s1104 = sand.u32 %s60, 1
        %s1105 = scalar_lea.sflag [#allocation16], %s1104
        %s1106 = sand.u32 %s528, 1
        %s1107 = smul.addr %s1106, 64
        %s1108 = scalar_lea.vmem [#allocation17], %s1107
        // Predicated region
        $region165: #{raindrop_forward.1} parent=131 // pred_check
          %p1109 = pneg %p541
        $region166: #{raindrop_forward.1} parent=131 // pred_check_branch
          %1111 = sbr.rel (%p1109) target = $region168
        $region167: #{raindrop_forward.1} parent=131 // pred_region
          %1112 = dma.done %s1105, 1024
        $region168: #{raindrop_forward.1} parent=131 // pred_fallthru
          _
        %s1113 = sand.u32 %s60, 1
        %s1114 = scalar_lea.sflag [#allocation19], %s1113
        %s1115 = sand.u32 %s554, 1
        %s1116 = scalar_lea.vmem [#allocation18], %s1115
        // Predicated region
        $region169: #{raindrop_forward.1} parent=131 // pred_check
          %p1117 = pneg %p567
        $region170: #{raindrop_forward.1} parent=131 // pred_check_branch
          %1119 = sbr.rel (%p1117) target = $region172
        $region171: #{raindrop_forward.1} parent=131 // pred_region
          %1120 = dma.done %s1114, 16
        $region172: #{raindrop_forward.1} parent=131 // pred_fallthru
          _
        %s1121 = sand.u32 %s60, 1
        %s1122 = scalar_lea.sflag [#allocation19], %s1121
        %s1123 = sand.u32 %s580, 1
        %s1124 = scalar_lea.vmem [#allocation20], %s1123
        // Predicated region
        $region173: #{raindrop_forward.1} parent=131 // pred_check
          %p1125 = pneg %p593
        $region174: #{raindrop_forward.1} parent=131 // pred_check_branch
          %1127 = sbr.rel (%p1125) target = $region176
        $region175: #{raindrop_forward.1} parent=131 // pred_region
          %1128 = dma.done %s1122, 16
        $region176: #{raindrop_forward.1} parent=131 // pred_fallthru
          _
        %s1129 = sand.u32 %s60, 1
        %s1130 = scalar_lea.sflag [#allocation22], %s1129
        %s1131 = sand.u32 %s606, 1
        %s1132 = scalar_lea.vmem [#allocation21], %s1131
        // Predicated region
        $region177: #{raindrop_forward.1} parent=131 // pred_check
          %p1133 = pneg %p619
        $region178: #{raindrop_forward.1} parent=131 // pred_check_branch
          %1135 = sbr.rel (%p1133) target = $region180
        $region179: #{raindrop_forward.1} parent=131 // pred_region
          %1136 = dma.done %s1130, 16
        $region180: #{raindrop_forward.1} parent=131 // pred_fallthru
          _
        // Predicated region
        $region181: #{raindrop_forward.1} parent=131 // pred_check
          %p1137 = pneg %p661
        $region182: #{raindrop_forward.1} parent=131 // pred_check_branch
          %1139 = sbr.rel (%p1137) target = $region184
        $region183: #{raindrop_forward.1} parent=131 // pred_region
          %1140 = dma.done [#allocation22], 16
        $region184: #{raindrop_forward.1} parent=131 // pred_fallthru
          _
        // Predicated region
        $region185: #{raindrop_forward.1} parent=131 // pred_check
          %p1141 = pneg %p682
        $region186: #{raindrop_forward.1} parent=131 // pred_check_branch
          %1143 = sbr.rel (%p1141) target = $region188
        $region187: #{raindrop_forward.1} parent=131 // pred_region
          %1144 = dma.done [#allocation25], 1024
        $region188: #{raindrop_forward.1} parent=131 // pred_fallthru
          _
        // Predicated region
        $region189: #{raindrop_forward.1} parent=131 // pred_check
          %p1145 = pneg %p703
        $region190: #{raindrop_forward.1} parent=131 // pred_check_branch
          %1147 = sbr.rel (%p1145) target = $region192
        $region191: #{raindrop_forward.1} parent=131 // pred_region
          %1148 = dma.done [#allocation25], 16
        $region192: #{raindrop_forward.1} parent=131 // pred_fallthru
          _
        %p1149 = pneg %p76
        %p1150 = pneg %p73
        %p1151 = pneg %p97
        %p1152 = pneg %p94
        %p1153 = pneg %p118
        %p1154 = pneg %p115
        %p1155 = pneg %p139
        %p1156 = pneg %p136
        %p1157 = pneg %p160
        %p1158 = pneg %p157
        %p1159 = pneg %p181
        %p1160 = pneg %p178
        %p1161 = pneg %p202
        %p1162 = pneg %p199
        %p1163 = pneg %p223
        %p1164 = pneg %p220
        %p1165 = pneg %p244
        %p1166 = pneg %p241
        %p1167 = pneg %p265
        %p1168 = pneg %p262
        %p1169 = pneg %p286
        %p1170 = pneg %p283
        %p1171 = pneg %p307
        %p1172 = pneg %p304
        %p1173 = scmp.lt.s32.totalorder %s60, 1
        %s1174 = scalar_select %p1173, %s60, 1
        %s1175 = smul.addr %s1174, 48
        %s1176 = smul.addr %s1175, 4
        %s1177 = scalar_lea.vmem %s12, %s1176
        %p1178 = pneg %p333
        %p1179 = pneg %p330
        %s1180 = sand.u32 %s60, 1
        %s1181 = scalar_lea.sflag [#allocation7], %s1180
        %s1182 = sand.u32 %s346, 1
        %s1183 = smul.addr %s1182, 3
        %s1184 = scalar_lea.vmem [#allocation6], %s1183
        %p1185 = pneg %p359
        %p1186 = pneg %p356
        %s1187 = sand.u32 %s60, 1
        %s1188 = scalar_lea.sflag [#allocation7], %s1187
        %s1189 = sand.u32 %s372, 1
        %s1190 = smul.addr %s1189, 64
        %s1191 = scalar_lea.vmem [#allocation8], %s1190
        %p1192 = pneg %p385
        %p1193 = pneg %p382
        %s1194 = sand.u32 %s60, 1
        %s1195 = scalar_lea.sflag [#allocation10], %s1194
        %s1196 = sand.u32 %s398, 1
        %s1197 = scalar_lea.vmem [#allocation9], %s1196
        %p1198 = pneg %p411
        %p1199 = pneg %p408
        %s1200 = sand.u32 %s60, 1
        %s1201 = scalar_lea.sflag [#allocation10], %s1200
        %s1202 = sand.u32 %s424, 1
        %s1203 = scalar_lea.vmem [#allocation11], %s1202
        %p1204 = pneg %p437
        %p1205 = pneg %p434
        %s1206 = sand.u32 %s60, 1
        %s1207 = scalar_lea.sflag [#allocation13], %s1206
        %s1208 = sand.u32 %s450, 1
        %s1209 = scalar_lea.vmem [#allocation12], %s1208
        %p1210 = pneg %p463
        %p1211 = pneg %p460
        %s1212 = sand.u32 %s60, 1
        %s1213 = scalar_lea.sflag [#allocation13], %s1212
        %s1214 = sand.u32 %s476, 1
        %s1215 = smul.addr %s1214, 64
        %s1216 = scalar_lea.vmem [#allocation14], %s1215
        %p1217 = pneg %p489
        %p1218 = pneg %p486
        %s1219 = sand.u32 %s60, 1
        %s1220 = scalar_lea.sflag [#allocation16], %s1219
        %s1221 = sand.u32 %s502, 1
        %s1222 = scalar_lea.vmem [#allocation15], %s1221
        %p1223 = pneg %p515
        %p1224 = pneg %p512
        %s1225 = sand.u32 %s60, 1
        %s1226 = scalar_lea.sflag [#allocation16], %s1225
        %s1227 = sand.u32 %s528, 1
        %s1228 = smul.addr %s1227, 64
        %s1229 = scalar_lea.vmem [#allocation17], %s1228
        %p1230 = pneg %p541
        %p1231 = pneg %p538
        %s1232 = sand.u32 %s60, 1
        %s1233 = scalar_lea.sflag [#allocation19], %s1232
        %s1234 = sand.u32 %s554, 1
        %s1235 = scalar_lea.vmem [#allocation18], %s1234
        %p1236 = pneg %p567
        %p1237 = pneg %p564
        %s1238 = sand.u32 %s60, 1
        %s1239 = scalar_lea.sflag [#allocation19], %s1238
        %s1240 = sand.u32 %s580, 1
        %s1241 = scalar_lea.vmem [#allocation20], %s1240
        %p1242 = pneg %p593
        %p1243 = pneg %p590
        %s1244 = sand.u32 %s60, 1
        %s1245 = scalar_lea.sflag [#allocation22], %s1244
        %s1246 = sand.u32 %s606, 1
        %s1247 = scalar_lea.vmem [#allocation21], %s1246
        %p1248 = pneg %p619
        %p1249 = pneg %p616
        %p1250 = pneg %p640
        %p1251 = pneg %p637
        %p1252 = pneg %p661
        %p1253 = pneg %p658
        %p1254 = pneg %p682
        %p1255 = pneg %p679
        %p1256 = pneg %p703
        %p1257 = pneg %p700
        %p1258 = pneg %p724
        %p1259 = pneg %p721
        %p1260 = scmp.lt.s32.totalorder %s60, 1
        %s1261 = scalar_select %p1260, %s60, 1
        %s1262 = smul.addr %s1261, 48
        %s1263 = smul.addr %s1262, 4
        %s1264 = scalar_lea.vmem %s12, %s1263
        %p1266 = scmp.eq.s32.totalorder %s60, 0
        // Predicated region
        $region193: #{raindrop_forward.1} parent=131 // pred_check
          %p1267 = pneg %p1266
        $region194: #{raindrop_forward.1} parent=131 // pred_check_branch
          %1269 = sbr.rel (%p1267) target = $region196
        $region195: #{raindrop_forward.1} parent=131 // pred_region
          %v1270 = vld [vmem:[%s0] sm:$0xff]
          %v1271 = vld [vmem:[%s0 + $0x8] sm:$0xff]
          %v1272 = vpack.c.bf16 %v1271, %v1270
          %v1273 = vld [vmem:[%s7] sm:$0x3]
          %v1274 = vld [vmem:[%s8] sm:$0x1]
          %v1276 = vlaneseq
          %v1277 = vshrl.u32 %v1276, 7
          %v1278 = vsub.s32 0, %v1277
          %v1279 = vrot.slane %v1274, %v1278
          %vm1281 = vcmask 31744
          %v1283 = vsel %vm1281, %v1272, 0
          %vm1285 = vcmask 1041408
          %v1287 = vsel %vm1285, %v1273, 0
          %1289 = vmatprep.subr.bf16.mxu0 0
          %1290 = vmatpush1.bf16.msra.mxu0 %v1287
          %1291 = vmatprep.subr.bf16.mxu0 0
          %1292 = vmatpush1.bf16.msra.mxu0 0
          %1293 = vmatprep.subr.bf16.mxu0 0
          %1294 = vmatpush1.bf16.msra.mxu0 0
          %1295 = vmatprep.subr.bf16.mxu0 0
          %1296 = vmatpush1.bf16.msra.mxu0 0
          %1297 = vmatprep.subr.bf16.mxu0 0
          %1298 = vmatpush1.bf16.msra.mxu0 0
          %1299 = vmatprep.subr.bf16.mxu0 0
          %1300 = vmatpush1.bf16.msra.mxu0 0
          %1301 = vmatprep.subr.bf16.mxu0 0
          %1302 = vmatpush1.bf16.msra.mxu0 0
          %1303 = vmatprep.subr.bf16.mxu0 0
          %1304 = vmatpush1.bf16.msra.mxu0 0
          %1305 = vmatprep.subr.bf16.mxu0 0
          %1306 = vmatpush1.bf16.msra.mxu0 0
          %1307 = vmatprep.subr.bf16.mxu0 0
          %1308 = vmatpush1.bf16.msra.mxu0 0
          %1309 = vmatprep.subr.bf16.mxu0 0
          %1310 = vmatpush1.bf16.msra.mxu0 0
          %1311 = vmatprep.subr.bf16.mxu0 0
          %1312 = vmatpush1.bf16.msra.mxu0 0
          %1313 = vmatprep.subr.bf16.mxu0 0
          %1314 = vmatpush1.bf16.msra.mxu0 0
          %1315 = vmatprep.subr.bf16.mxu0 0
          %1316 = vmatpush1.bf16.msra.mxu0 0
          %1317 = vmatprep.subr.bf16.mxu0 0
          %1318 = vmatpush1.bf16.msra.mxu0 0
          %1319 = vmatprep.subr.bf16.mxu0 0
          %1320 = vmatpush1.bf16.msra.mxu0 0
          %1321 = vmatprep.mubr.bf16.mxu0 0
          %1322 = vmatmul.mubr.bf16.gmra.mrb[0].mxu0 %v1283
          %v1323 = vpop.f32.mrb[0].mxu0
          %v1324 = vadd.f32 %v1279, %v1323
          %v1325 = vpop.f32.mrb[0].mxu0
          %v1326 = vpop.f32.mrb[0].mxu0
          %v1327 = vadd.f32 %v1279, %v1326
          %v1328 = vpop.f32.mrb[0].mxu0
          %1329 = vdwg.mxu0
          %v1330 = vlaneseq
          %v1331 = vand.u32 %v1330, 127
          %v1332 = vld [vmem:[%s1] sm:$0xff]
          %v1333 = vld [vmem:[%s1 + $0x8] sm:$0xff]
          %v1334 = vld [vmem:[%s9] sm:$0x1]
          %1336 = vset.pattern.permute.xlu0 0
          %1337 = vperm.xlu0 %1336, %v1332
          %v1338 = vpop.permute.xlu0 %1337
          %1341 = vset.pattern.permute.xlu0 0
          %1342 = vperm.xlu0 %1341, %v1333
          %v1343 = vpop.permute.xlu0 %1342
          %v1346 = vlaneseq
          %v1347 = vshrl.u32 %v1346, 7
          %v1348 = vsub.s32 0, %v1347
          %v1349 = vrot.slane %v1334, %v1348
          %v1351 = vmul.f32 %v1338, %v1349
          %v1352 = vmul.f32 %v1343, %v1349
          %vm1353 = vcmp.ge.s32.totalorder %v1331, 32
          %vm1354 = vcmp.lt.s32.totalorder %v1331, 40
          %vm1355 = vmand %vm1353, %vm1354
          %v1356 = vand.u32 2147483647, %v1351
          %vm1357 = vcmp.le.f32.partialorder %v1356, 0.7853982
          %vm1358 = vcmp.lt.s32.totalorder %v1351, 0
          %v1359 = vand.u32 %v1351, 2139095040
          %v1360 = vshrl.u32 %v1359, 23
          %v1361 = vsub.s32 %v1360, 127
          %v1362 = vand.u32 2147483647, %v1351
          %v1363 = vand.u32 %v1362, 8388607
          %v1364 = vor.u32 %v1363, 8388608
          %v1365 = vsub.s32 0, %v1364
          %v1366 = vadd.s32 %v1361, 1
          %vm1367 = vcmp.gt.s32.totalorder %v1366, 0
          %v1368 = vsel %vm1367, %v1366, 0
          %v1369 = vshrl.u32 %v1368, 5
          %v1370 = vand.u32 %v1368, 31
          %v1371 = vsub.s32 32, %v1370
          %v1372 = vshrl.u32 683565275, %v1371
          %v1373 = vshll.u32 683565275, %v1370
          %v1374 = vshrl.u32 2475754826, %v1371
          %v1375 = vor.u32 %v1373, %v1374
          %v1376 = vshll.u32 2475754826, %v1370
          %v1377 = vshrl.u32 2131351028, %v1371
          %v1378 = vor.u32 %v1376, %v1377
          %v1379 = vshll.u32 2131351028, %v1370
          %v1380 = vshrl.u32 2102212464, %v1371
          %v1381 = vor.u32 %v1379, %v1380
          %v1382 = vshll.u32 2102212464, %v1370
          %v1383 = vshrl.u32 920167782, %v1371
          %v1384 = vor.u32 %v1382, %v1383
          %v1385 = vshll.u32 920167782, %v1370
          %v1386 = vshrl.u32 1326507024, %v1371
          %v1387 = vor.u32 %v1385, %v1386
          %vm1388 = vcmp.lt.s32.totalorder %v1369, 1
          %vm1389 = vcmp.lt.s32.totalorder %v1369, 2
          %vm1390 = vcmp.lt.s32.totalorder %v1369, 3
          %vm1391 = vcmp.lt.s32.totalorder %v1369, 4
          %v1392 = vsel %vm1388, %v1372, %v1375
          %v1393 = vsel %vm1391, %v1381, 2102212464
          %v1394 = vsel %vm1390, %v1378, %v1393
          %v1395 = vsel %vm1389, %v1392, %v1394
          %v1396 = vsel %vm1388, %v1375, %v1378
          %v1397 = vsel %vm1391, %v1384, 920167782
          %v1398 = vsel %vm1390, %v1381, %v1397
          %v1399 = vsel %vm1389, %v1396, %v1398
          %v1400 = vsel %vm1388, %v1378, %v1381
          %v1401 = vsel %vm1391, %v1387, 1326507024
          %v1402 = vsel %vm1390, %v1384, %v1401
          %v1403 = vsel %vm1389, %v1400, %v1402
          %v1404 = vshll.u32 %v1364, 8
          %v1405 = vmul.u32.u64.compose %v1404, %v1403
          %v1406 = vextract.low.u32 %v1405
          %v1407 = vextract.high.u32 %v1405
          %v1408 = vmul.u32.u64.compose %v1404, %v1399
          %v1409 = vextract.low.u32 %v1408
          %v1410 = vextract.high.u32 %v1408
          %v1411 = vmul.u32 %v1404, %v1395
          %v1412 = vadd.s32 %v1407, %v1409
          %vm1413 = vc.u32 %v1407, %v1409
          %v1414 = vadd.s32 %v1410, 1
          %v1415 = vsel %vm1413, %v1414, %v1410
          %v1416 = vadd.s32 %v1411, %v1415
          %v1417 = vadd.s32 %v1416, 536870912
          %v1418 = vshrl.u32 %v1417, 30
          %v1419 = vshll.u32 %v1418, 30
          %v1420 = vsub.s32 %v1416, %v1419
          %vm1421 = vcmp.lt.s32.totalorder %v1420, 0
          %v1422 = vsub.s32 0, %v1420
          %v1423 = vsel %vm1421, %v1422, %v1420
          %v1424 = vclz %v1423
          %v1425 = vsub.s32 %v1424, 2
          %vm1426 = vcmp.gt.s32.totalorder 0, %v1425
          %v1427 = vsel %vm1426, 0, %v1425
          %v1428 = vsub.s32 32, %v1427
          %v1429 = vshll.u32 %v1420, %v1427
          %v1430 = vshrl.u32 %v1412, %v1428
          %v1431 = vor.u32 %v1429, %v1430
          %v1432 = vsub.s32 4294967266, %v1427
          %v1433 = vadd.s32 %v1432, 127
          %v1434 = vshll.u32 %v1433, 23
          %v1435 = vor.u32 4788187, %v1434
          %v1436 = vand.u32 2147483647, %v1435
          %v1438 = vcvt.s32.f32 %v1431
          %v1439 = vmul.f32 %v1438, %v1436
          %v1440 = vxor.u32 %v1439, 2147483648
          %v1441 = vsel %vm1358, %v1440, %v1439
          %v1442 = vsub.s32 4, %v1418
          %v1443 = vsel %vm1358, %v1442, %v1418
          %v1444 = vsel %vm1357, %v1351, %v1441
          %v1445 = vsel %vm1357, 0, %v1443
          %v1446 = vcosq.f32.pop %v1444
          %v1447 = vsinq.f32.pop %v1444
          %vm1448 = vweird.f32 %v1351
          %v1449 = vadd.s32 %v1445, 3
          %v1450 = vand.u32 %v1449, 3
          %vm1451 = vcmp.lt.s32.totalorder %v1450, 2
          %vm1452 = vcmp.eq.s32.totalorder %v1450, 0
          %v1453 = vxor.u32 %v1447, 2147483648
          %v1454 = vsel %vm1452, %v1446, %v1453
          %vm1455 = vcmp.eq.s32.totalorder %v1450, 2
          %v1456 = vxor.u32 %v1446, 2147483648
          %v1457 = vsel %vm1455, %v1456, %v1447
          %v1458 = vsel %vm1451, %v1454, %v1457
          %v1459 = vsel %vm1448, nan, %v1458
          %v1460 = vand.u32 2147483647, %v1352
          %vm1461 = vcmp.le.f32.partialorder %v1460, 0.7853982
          %vm1462 = vcmp.lt.s32.totalorder %v1352, 0
          %v1463 = vand.u32 %v1352, 2139095040
          %v1464 = vshrl.u32 %v1463, 23
          %v1465 = vsub.s32 %v1464, 127
          %v1466 = vand.u32 2147483647, %v1352
          %v1467 = vand.u32 %v1466, 8388607
          %v1468 = vor.u32 %v1467, 8388608
          %v1469 = vsub.s32 0, %v1468
          %v1470 = vadd.s32 %v1465, 1
          %vm1471 = vcmp.gt.s32.totalorder %v1470, 0
          %v1472 = vsel %vm1471, %v1470, 0
          %v1473 = vshrl.u32 %v1472, 5
          %v1474 = vand.u32 %v1472, 31
          %v1475 = vsub.s32 32, %v1474
          %v1476 = vshrl.u32 683565275, %v1475
          %v1477 = vshll.u32 683565275, %v1474
          %v1478 = vshrl.u32 2475754826, %v1475
          %v1479 = vor.u32 %v1477, %v1478
          %v1480 = vshll.u32 2475754826, %v1474
          %v1481 = vshrl.u32 2131351028, %v1475
          %v1482 = vor.u32 %v1480, %v1481
          %v1483 = vshll.u32 2131351028, %v1474
          %v1484 = vshrl.u32 2102212464, %v1475
          %v1485 = vor.u32 %v1483, %v1484
          %v1486 = vshll.u32 2102212464, %v1474
          %v1487 = vshrl.u32 920167782, %v1475
          %v1488 = vor.u32 %v1486, %v1487
          %v1489 = vshll.u32 920167782, %v1474
          %v1490 = vshrl.u32 1326507024, %v1475
          %v1491 = vor.u32 %v1489, %v1490
          %vm1492 = vcmp.lt.s32.totalorder %v1473, 1
          %vm1493 = vcmp.lt.s32.totalorder %v1473, 2
          %vm1494 = vcmp.lt.s32.totalorder %v1473, 3
          %vm1495 = vcmp.lt.s32.totalorder %v1473, 4
          %v1496 = vsel %vm1492, %v1476, %v1479
          %v1497 = vsel %vm1495, %v1485, 2102212464
          %v1498 = vsel %vm1494, %v1482, %v1497
          %v1499 = vsel %vm1493, %v1496, %v1498
          %v1500 = vsel %vm1492, %v1479, %v1482
          %v1501 = vsel %vm1495, %v1488, 920167782
          %v1502 = vsel %vm1494, %v1485, %v1501
          %v1503 = vsel %vm1493, %v1500, %v1502
          %v1504 = vsel %vm1492, %v1482, %v1485
          %v1505 = vsel %vm1495, %v1491, 1326507024
          %v1506 = vsel %vm1494, %v1488, %v1505
          %v1507 = vsel %vm1493, %v1504, %v1506
          %v1508 = vshll.u32 %v1468, 8
          %v1509 = vmul.u32.u64.compose %v1508, %v1507
          %v1510 = vextract.low.u32 %v1509
          %v1511 = vextract.high.u32 %v1509
          %v1512 = vmul.u32.u64.compose %v1508, %v1503
          %v1513 = vextract.low.u32 %v1512
          %v1514 = vextract.high.u32 %v1512
          %v1515 = vmul.u32 %v1508, %v1499
          %v1516 = vadd.s32 %v1511, %v1513
          %vm1517 = vc.u32 %v1511, %v1513
          %v1518 = vadd.s32 %v1514, 1
          %v1519 = vsel %vm1517, %v1518, %v1514
          %v1520 = vadd.s32 %v1515, %v1519
          %v1521 = vadd.s32 %v1520, 536870912
          %v1522 = vshrl.u32 %v1521, 30
          %v1523 = vshll.u32 %v1522, 30
          %v1524 = vsub.s32 %v1520, %v1523
          %vm1525 = vcmp.lt.s32.totalorder %v1524, 0
          %v1526 = vsub.s32 0, %v1524
          %v1527 = vsel %vm1525, %v1526, %v1524
          %v1528 = vclz %v1527
          %v1529 = vsub.s32 %v1528, 2
          %vm1530 = vcmp.gt.s32.totalorder 0, %v1529
          %v1531 = vsel %vm1530, 0, %v1529
          %v1532 = vsub.s32 32, %v1531
          %v1533 = vshll.u32 %v1524, %v1531
          %v1534 = vshrl.u32 %v1516, %v1532
          %v1535 = vor.u32 %v1533, %v1534
          %v1536 = vsub.s32 4294967266, %v1531
          %v1537 = vadd.s32 %v1536, 127
          %v1538 = vshll.u32 %v1537, 23
          %v1539 = vor.u32 4788187, %v1538
          %v1540 = vand.u32 2147483647, %v1539
          %v1542 = vcvt.s32.f32 %v1535
          %v1543 = vmul.f32 %v1542, %v1540
          %v1544 = vxor.u32 %v1543, 2147483648
          %v1545 = vsel %vm1462, %v1544, %v1543
          %v1546 = vsub.s32 4, %v1522
          %v1547 = vsel %vm1462, %v1546, %v1522
          %v1548 = vsel %vm1461, %v1352, %v1545
          %v1549 = vsel %vm1461, 0, %v1547
          %v1550 = vcosq.f32.pop %v1548
          %v1551 = vsinq.f32.pop %v1548
          %vm1552 = vweird.f32 %v1352
          %v1553 = vadd.s32 %v1549, 3
          %v1554 = vand.u32 %v1553, 3
          %vm1555 = vcmp.lt.s32.totalorder %v1554, 2
          %vm1556 = vcmp.eq.s32.totalorder %v1554, 0
          %v1557 = vxor.u32 %v1551, 2147483648
          %v1558 = vsel %vm1556, %v1550, %v1557
          %vm1559 = vcmp.eq.s32.totalorder %v1554, 2
          %v1560 = vxor.u32 %v1550, 2147483648
          %v1561 = vsel %vm1559, %v1560, %v1551
          %v1562 = vsel %vm1555, %v1558, %v1561
          %v1563 = vsel %vm1552, nan, %v1562
          %v1564 = vsel %vm1355, 1, 0
          %vm1565 = vcmp.eq.s32.totalorder %v1564, 1
          %v1566 = vsel %vm1565, %v1459, 0.0
          %v1567 = vsel %vm1565, %v1563, 0.0
          %vm1568 = vcmp.ge.s32.totalorder %v1331, 40
          %vm1569 = vcmp.lt.s32.totalorder %v1331, 48
          %vm1570 = vmand %vm1568, %vm1569
          %v1571 = vand.u32 2147483647, %v1351
          %vm1572 = vcmp.le.f32.partialorder %v1571, 0.7853982
          %vm1573 = vcmp.lt.s32.totalorder %v1351, 0
          %v1574 = vand.u32 %v1351, 2139095040
          %v1575 = vshrl.u32 %v1574, 23
          %v1576 = vsub.s32 %v1575, 127
          %v1577 = vand.u32 2147483647, %v1351
          %v1578 = vand.u32 %v1577, 8388607
          %v1579 = vor.u32 %v1578, 8388608
          %v1580 = vsub.s32 0, %v1579
          %v1581 = vadd.s32 %v1576, 1
          %vm1582 = vcmp.gt.s32.totalorder %v1581, 0
          %v1583 = vsel %vm1582, %v1581, 0
          %v1584 = vshrl.u32 %v1583, 5
          %v1585 = vand.u32 %v1583, 31
          %v1586 = vsub.s32 32, %v1585
          %v1587 = vshrl.u32 683565275, %v1586
          %v1588 = vshll.u32 683565275, %v1585
          %v1589 = vshrl.u32 2475754826, %v1586
          %v1590 = vor.u32 %v1588, %v1589
          %v1591 = vshll.u32 2475754826, %v1585
          %v1592 = vshrl.u32 2131351028, %v1586
          %v1593 = vor.u32 %v1591, %v1592
          %v1594 = vshll.u32 2131351028, %v1585
          %v1595 = vshrl.u32 2102212464, %v1586
          %v1596 = vor.u32 %v1594, %v1595
          %v1597 = vshll.u32 2102212464, %v1585
          %v1598 = vshrl.u32 920167782, %v1586
          %v1599 = vor.u32 %v1597, %v1598
          %v1600 = vshll.u32 920167782, %v1585
          %v1601 = vshrl.u32 1326507024, %v1586
          %v1602 = vor.u32 %v1600, %v1601
          %vm1603 = vcmp.lt.s32.totalorder %v1584, 1
          %vm1604 = vcmp.lt.s32.totalorder %v1584, 2
          %vm1605 = vcmp.lt.s32.totalorder %v1584, 3
          %vm1606 = vcmp.lt.s32.totalorder %v1584, 4
          %v1607 = vsel %vm1603, %v1587, %v1590
          %v1608 = vsel %vm1606, %v1596, 2102212464
          %v1609 = vsel %vm1605, %v1593, %v1608
          %v1610 = vsel %vm1604, %v1607, %v1609
          %v1611 = vsel %vm1603, %v1590, %v1593
          %v1612 = vsel %vm1606, %v1599, 920167782
          %v1613 = vsel %vm1605, %v1596, %v1612
          %v1614 = vsel %vm1604, %v1611, %v1613
          %v1615 = vsel %vm1603, %v1593, %v1596
          %v1616 = vsel %vm1606, %v1602, 1326507024
          %v1617 = vsel %vm1605, %v1599, %v1616
          %v1618 = vsel %vm1604, %v1615, %v1617
          %v1619 = vshll.u32 %v1579, 8
          %v1620 = vmul.u32.u64.compose %v1619, %v1618
          %v1621 = vextract.low.u32 %v1620
          %v1622 = vextract.high.u32 %v1620
          %v1623 = vmul.u32.u64.compose %v1619, %v1614
          %v1624 = vextract.low.u32 %v1623
          %v1625 = vextract.high.u32 %v1623
          %v1626 = vmul.u32 %v1619, %v1610
          %v1627 = vadd.s32 %v1622, %v1624
          %vm1628 = vc.u32 %v1622, %v1624
          %v1629 = vadd.s32 %v1625, 1
          %v1630 = vsel %vm1628, %v1629, %v1625
          %v1631 = vadd.s32 %v1626, %v1630
          %v1632 = vadd.s32 %v1631, 536870912
          %v1633 = vshrl.u32 %v1632, 30
          %v1634 = vshll.u32 %v1633, 30
          %v1635 = vsub.s32 %v1631, %v1634
          %vm1636 = vcmp.lt.s32.totalorder %v1635, 0
          %v1637 = vsub.s32 0, %v1635
          %v1638 = vsel %vm1636, %v1637, %v1635
          %v1639 = vclz %v1638
          %v1640 = vsub.s32 %v1639, 2
          %vm1641 = vcmp.gt.s32.totalorder 0, %v1640
          %v1642 = vsel %vm1641, 0, %v1640
          %v1643 = vsub.s32 32, %v1642
          %v1644 = vshll.u32 %v1635, %v1642
          %v1645 = vshrl.u32 %v1627, %v1643
          %v1646 = vor.u32 %v1644, %v1645
          %v1647 = vsub.s32 4294967266, %v1642
          %v1648 = vadd.s32 %v1647, 127
          %v1649 = vshll.u32 %v1648, 23
          %v1650 = vor.u32 4788187, %v1649
          %v1651 = vand.u32 2147483647, %v1650
          %v1653 = vcvt.s32.f32 %v1646
          %v1654 = vmul.f32 %v1653, %v1651
          %v1655 = vxor.u32 %v1654, 2147483648
          %v1656 = vsel %vm1573, %v1655, %v1654
          %v1657 = vsub.s32 4, %v1633
          %v1658 = vsel %vm1573, %v1657, %v1633
          %v1659 = vsel %vm1572, %v1351, %v1656
          %v1660 = vsel %vm1572, 0, %v1658
          %v1661 = vcosq.f32.pop %v1659
          %v1662 = vsinq.f32.pop %v1659
          %vm1663 = vweird.f32 %v1351
          %v1664 = vand.u32 %v1660, 3
          %vm1665 = vcmp.lt.s32.totalorder %v1664, 2
          %vm1666 = vcmp.eq.s32.totalorder %v1664, 0
          %v1667 = vxor.u32 %v1662, 2147483648
          %v1668 = vsel %vm1666, %v1661, %v1667
          %vm1669 = vcmp.eq.s32.totalorder %v1664, 2
          %v1670 = vxor.u32 %v1661, 2147483648
          %v1671 = vsel %vm1669, %v1670, %v1662
          %v1672 = vsel %vm1665, %v1668, %v1671
          %v1673 = vsel %vm1663, nan, %v1672
          %v1674 = vand.u32 2147483647, %v1352
          %vm1675 = vcmp.le.f32.partialorder %v1674, 0.7853982
          %vm1676 = vcmp.lt.s32.totalorder %v1352, 0
          %v1677 = vand.u32 %v1352, 2139095040
          %v1678 = vshrl.u32 %v1677, 23
          %v1679 = vsub.s32 %v1678, 127
          %v1680 = vand.u32 2147483647, %v1352
          %v1681 = vand.u32 %v1680, 8388607
          %v1682 = vor.u32 %v1681, 8388608
          %v1683 = vsub.s32 0, %v1682
          %v1684 = vadd.s32 %v1679, 1
          %vm1685 = vcmp.gt.s32.totalorder %v1684, 0
          %v1686 = vsel %vm1685, %v1684, 0
          %v1687 = vshrl.u32 %v1686, 5
          %v1688 = vand.u32 %v1686, 31
          %v1689 = vsub.s32 32, %v1688
          %v1690 = vshrl.u32 683565275, %v1689
          %v1691 = vshll.u32 683565275, %v1688
          %v1692 = vshrl.u32 2475754826, %v1689
          %v1693 = vor.u32 %v1691, %v1692
          %v1694 = vshll.u32 2475754826, %v1688
          %v1695 = vshrl.u32 2131351028, %v1689
          %v1696 = vor.u32 %v1694, %v1695
          %v1697 = vshll.u32 2131351028, %v1688
          %v1698 = vshrl.u32 2102212464, %v1689
          %v1699 = vor.u32 %v1697, %v1698
          %v1700 = vshll.u32 2102212464, %v1688
          %v1701 = vshrl.u32 920167782, %v1689
          %v1702 = vor.u32 %v1700, %v1701
          %v1703 = vshll.u32 920167782, %v1688
          %v1704 = vshrl.u32 1326507024, %v1689
          %v1705 = vor.u32 %v1703, %v1704
          %vm1706 = vcmp.lt.s32.totalorder %v1687, 1
          %vm1707 = vcmp.lt.s32.totalorder %v1687, 2
          %vm1708 = vcmp.lt.s32.totalorder %v1687, 3
          %vm1709 = vcmp.lt.s32.totalorder %v1687, 4
          %v1710 = vsel %vm1706, %v1690, %v1693
          %v1711 = vsel %vm1709, %v1699, 2102212464
          %v1712 = vsel %vm1708, %v1696, %v1711
          %v1713 = vsel %vm1707, %v1710, %v1712
          %v1714 = vsel %vm1706, %v1693, %v1696
          %v1715 = vsel %vm1709, %v1702, 920167782
          %v1716 = vsel %vm1708, %v1699, %v1715
          %v1717 = vsel %vm1707, %v1714, %v1716
          %v1718 = vsel %vm1706, %v1696, %v1699
          %v1719 = vsel %vm1709, %v1705, 1326507024
          %v1720 = vsel %vm1708, %v1702, %v1719
          %v1721 = vsel %vm1707, %v1718, %v1720
          %v1722 = vshll.u32 %v1682, 8
          %v1723 = vmul.u32.u64.compose %v1722, %v1721
          %v1724 = vextract.low.u32 %v1723
          %v1725 = vextract.high.u32 %v1723
          %v1726 = vmul.u32.u64.compose %v1722, %v1717
          %v1727 = vextract.low.u32 %v1726
          %v1728 = vextract.high.u32 %v1726
          %v1729 = vmul.u32 %v1722, %v1713
          %v1730 = vadd.s32 %v1725, %v1727
          %vm1731 = vc.u32 %v1725, %v1727
          %v1732 = vadd.s32 %v1728, 1
          %v1733 = vsel %vm1731, %v1732, %v1728
          %v1734 = vadd.s32 %v1729, %v1733
          %v1735 = vadd.s32 %v1734, 536870912
          %v1736 = vshrl.u32 %v1735, 30
          %v1737 = vshll.u32 %v1736, 30
          %v1738 = vsub.s32 %v1734, %v1737
          %vm1739 = vcmp.lt.s32.totalorder %v1738, 0
          %v1740 = vsub.s32 0, %v1738
          %v1741 = vsel %vm1739, %v1740, %v1738
          %v1742 = vclz %v1741
          %v1743 = vsub.s32 %v1742, 2
          %vm1744 = vcmp.gt.s32.totalorder 0, %v1743
          %v1745 = vsel %vm1744, 0, %v1743
          %v1746 = vsub.s32 32, %v1745
          %v1747 = vshll.u32 %v1738, %v1745
          %v1748 = vshrl.u32 %v1730, %v1746
          %v1749 = vor.u32 %v1747, %v1748
          %v1750 = vsub.s32 4294967266, %v1745
          %v1751 = vadd.s32 %v1750, 127
          %v1752 = vshll.u32 %v1751, 23
          %v1753 = vor.u32 4788187, %v1752
          %v1754 = vand.u32 2147483647, %v1753
          %v1756 = vcvt.s32.f32 %v1749
          %v1757 = vmul.f32 %v1756, %v1754
          %v1758 = vxor.u32 %v1757, 2147483648
          %v1759 = vsel %vm1676, %v1758, %v1757
          %v1760 = vsub.s32 4, %v1736
          %v1761 = vsel %vm1676, %v1760, %v1736
          %v1762 = vsel %vm1675, %v1352, %v1759
          %v1763 = vsel %vm1675, 0, %v1761
          %v1764 = vcosq.f32.pop %v1762
          %v1765 = vsinq.f32.pop %v1762
          %vm1766 = vweird.f32 %v1352
          %v1767 = vand.u32 %v1763, 3
          %vm1768 = vcmp.lt.s32.totalorder %v1767, 2
          %vm1769 = vcmp.eq.s32.totalorder %v1767, 0
          %v1770 = vxor.u32 %v1765, 2147483648
          %v1771 = vsel %vm1769, %v1764, %v1770
          %vm1772 = vcmp.eq.s32.totalorder %v1767, 2
          %v1773 = vxor.u32 %v1764, 2147483648
          %v1774 = vsel %vm1772, %v1773, %v1765
          %v1775 = vsel %vm1768, %v1771, %v1774
          %v1776 = vsel %vm1766, nan, %v1775
          %v1777 = vsel %vm1570, 1, 0
          %vm1778 = vcmp.eq.s32.totalorder %v1777, 1
          %v1779 = vsel %vm1778, %v1673, 0.0
          %v1780 = vsel %vm1778, %v1776, 0.0
          %v1781 = vadd.f32 %v1566, %v1779
          %v1782 = vadd.f32 %v1567, %v1780
          %v1783 = vadd.f32 %v1324, %v1781
          %v1784 = vadd.f32 %v1327, %v1782
          %1785 = vst [vmem:[#allocation2] sm:$0xff] %v1783
          %1786 = vst [vmem:[#allocation2 + $0x8] sm:$0xff] %v1784
        $region196: #{raindrop_forward.1} parent=131 // pred_fallthru
          _
        %v1787 = vld [vmem:[#allocation2] sm:$0xff]
        %v1788 = vld [vmem:[#allocation2 + $0x8] sm:$0xff]
        %v1789 = vld [vmem:[%s5] sm:$0xff]
        %v1790 = vld [vmem:[%s5 + $0x8] sm:$0xff]
        %v1791 = vld [vmem:[%s5 + $0x10] sm:$0xff]
        %v1792 = vld [vmem:[%s5 + $0x18] sm:$0xff]
        %v1793 = vld [vmem:[%s5 + $0x20] sm:$0xff]
        %v1794 = vld [vmem:[%s5 + $0x28] sm:$0xff]
        %v1795 = vld [vmem:[%s5 + $0x30] sm:$0xff]
        %v1796 = vld [vmem:[%s5 + $0x38] sm:$0xff]
        %v1797 = vpack.c.bf16 %v1788, %v1787
        %v1798 = vld [vmem:[%s1264] sm:$0xff]
        %v1799 = vld [vmem:[%s1264 + $0x8] sm:$0xf]
        %v1800 = vld [vmem:[%s1264 + $0xc] sm:$0xff]
        %v1801 = vld [vmem:[%s1264 + $0x14] sm:$0xf]
        %v1802 = vld [vmem:[%s1264 + $0x18] sm:$0xff]
        %v1803 = vld [vmem:[%s1264 + $0x20] sm:$0xf]
        %v1804 = vld [vmem:[%s1264 + $0x24] sm:$0xff]
        %v1805 = vld [vmem:[%s1264 + $0x2c] sm:$0xf]
        %v1806 = vld [vmem:[%s1264 + $0x30] sm:$0xff]
        %v1807 = vld [vmem:[%s1264 + $0x38] sm:$0xf]
        %v1808 = vld [vmem:[%s1264 + $0x3c] sm:$0xff]
        %v1809 = vld [vmem:[%s1264 + $0x44] sm:$0xf]
        %v1810 = vld [vmem:[%s1264 + $0x48] sm:$0xff]
        %v1811 = vld [vmem:[%s1264 + $0x50] sm:$0xf]
        %v1812 = vld [vmem:[%s1264 + $0x54] sm:$0xff]
        %v1813 = vld [vmem:[%s1264 + $0x5c] sm:$0xf]
        %v1814 = vld [vmem:[%s1264 + $0x60] sm:$0xff]
        %v1815 = vld [vmem:[%s1264 + $0x68] sm:$0xf]
        %v1816 = vld [vmem:[%s1264 + $0x6c] sm:$0xff]
        %v1817 = vld [vmem:[%s1264 + $0x74] sm:$0xf]
        %v1818 = vld [vmem:[%s1264 + $0x78] sm:$0xff]
        %v1819 = vld [vmem:[%s1264 + $0x80] sm:$0xf]
        %v1820 = vld [vmem:[%s1264 + $0x84] sm:$0xff]
        %v1821 = vld [vmem:[%s1264 + $0x8c] sm:$0xf]
        %v1822 = vld [vmem:[%s1264 + $0x90] sm:$0xff]
        %v1823 = vld [vmem:[%s1264 + $0x98] sm:$0xf]
        %v1824 = vld [vmem:[%s1264 + $0x9c] sm:$0xff]
        %v1825 = vld [vmem:[%s1264 + $0xa4] sm:$0xf]
        %v1826 = vld [vmem:[%s1264 + $0xa8] sm:$0xff]
        %v1827 = vld [vmem:[%s1264 + $0xb0] sm:$0xf]
        %v1828 = vld [vmem:[%s1264 + $0xb4] sm:$0xff]
        %v1829 = vld [vmem:[%s1264 + $0xbc] sm:$0xf]
        %v1830 = vld [vmem:[%s1049] sm:$0x7]
        %v1832 = vlaneseq
        %v1833 = vshrl.u32 %v1832, 7
        %v1834 = vsub.s32 0, %v1833
        %v1835 = vrot.slane %v1830, %v1834
        %v1836 = vlaneseq
        %v1837 = vshrl.u32 %v1836, 7
        %v1838 = vsub.s32 1, %v1837
        %v1839 = vrot.slane %v1830, %v1838
        %v1840 = vlaneseq
        %v1841 = vshrl.u32 %v1840, 7
        %v1842 = vsub.s32 2, %v1841
        %v1843 = vrot.slane %v1830, %v1842
        %v1879 = vunpack.c.l.b16 %v1798
        %v1880 = vunpack.c.h.b16 %v1798
        %v1881 = vunpack.c.l.b16 %v1799
        %v1882 = vunpack.c.l.b16 %v1800
        %v1883 = vunpack.c.h.b16 %v1800
        %v1884 = vunpack.c.l.b16 %v1801
        %v1885 = vunpack.c.l.b16 %v1802
        %v1886 = vunpack.c.h.b16 %v1802
        %v1887 = vunpack.c.l.b16 %v1803
        %v1888 = vunpack.c.l.b16 %v1804
        %v1889 = vunpack.c.h.b16 %v1804
        %v1890 = vunpack.c.l.b16 %v1805
        %v1891 = vunpack.c.l.b16 %v1806
        %v1892 = vunpack.c.h.b16 %v1806
        %v1893 = vunpack.c.l.b16 %v1807
        %v1894 = vunpack.c.l.b16 %v1808
        %v1895 = vunpack.c.h.b16 %v1808
        %v1896 = vunpack.c.l.b16 %v1809
        %v1897 = vunpack.c.l.b16 %v1810
        %v1898 = vunpack.c.h.b16 %v1810
        %v1899 = vunpack.c.l.b16 %v1811
        %v1900 = vunpack.c.l.b16 %v1812
        %v1901 = vunpack.c.h.b16 %v1812
        %v1902 = vunpack.c.l.b16 %v1813
        %v1903 = vunpack.c.l.b16 %v1814
        %v1904 = vunpack.c.h.b16 %v1814
        %v1905 = vunpack.c.l.b16 %v1815
        %v1906 = vunpack.c.l.b16 %v1816
        %v1907 = vunpack.c.h.b16 %v1816
        %v1908 = vunpack.c.l.b16 %v1817
        %v1909 = vunpack.c.l.b16 %v1818
        %v1910 = vunpack.c.h.b16 %v1818
        %v1911 = vunpack.c.l.b16 %v1819
        %v1912 = vunpack.c.l.b16 %v1820
        %v1913 = vunpack.c.h.b16 %v1820
        %v1914 = vunpack.c.l.b16 %v1821
        %v1915 = vunpack.c.l.b16 %v1822
        %v1916 = vunpack.c.h.b16 %v1822
        %v1917 = vunpack.c.l.b16 %v1823
        %v1918 = vunpack.c.l.b16 %v1824
        %v1919 = vunpack.c.h.b16 %v1824
        %v1920 = vunpack.c.l.b16 %v1825
        %v1921 = vunpack.c.l.b16 %v1826
        %v1922 = vunpack.c.h.b16 %v1826
        %v1923 = vunpack.c.l.b16 %v1827
        %v1924 = vunpack.c.l.b16 %v1828
        %v1925 = vunpack.c.h.b16 %v1828
        %v1926 = vunpack.c.l.b16 %v1829
        %v1927 = vpack.c.b16 %v1882, %v1879
        %v1928 = vpack.c.b16 %v1883, %v1880
        %v1929 = vpack.c.b16 %v1884, %v1881
        %v1930 = vpack.c.b16 %v1888, %v1885
        %v1931 = vpack.c.b16 %v1889, %v1886
        %v1932 = vpack.c.b16 %v1890, %v1887
        %v1933 = vpack.c.b16 %v1894, %v1891
        %v1934 = vpack.c.b16 %v1895, %v1892
        %v1935 = vpack.c.b16 %v1896, %v1893
        %v1936 = vpack.c.b16 %v1900, %v1897
        %v1937 = vpack.c.b16 %v1901, %v1898
        %v1938 = vpack.c.b16 %v1902, %v1899
        %v1939 = vpack.c.b16 %v1906, %v1903
        %v1940 = vpack.c.b16 %v1907, %v1904
        %v1941 = vpack.c.b16 %v1908, %v1905
        %v1942 = vpack.c.b16 %v1912, %v1909
        %v1943 = vpack.c.b16 %v1913, %v1910
        %v1944 = vpack.c.b16 %v1914, %v1911
        %v1945 = vpack.c.b16 %v1918, %v1915
        %v1946 = vpack.c.b16 %v1919, %v1916
        %v1947 = vpack.c.b16 %v1920, %v1917
        %v1948 = vpack.c.b16 %v1924, %v1921
        %v1949 = vpack.c.b16 %v1925, %v1922
        %v1950 = vpack.c.b16 %v1926, %v1923
        %1975 = vmatprep.subr.bf16.mxu0 %v1928
        %1976 = vmatpush1.bf16.msra.mxu0 %v1927
        %1977 = vmatprep.subr.bf16.mxu0 %v1931
        %1978 = vmatpush1.bf16.msra.mxu0 %v1930
        %1979 = vmatprep.subr.bf16.mxu0 %v1934
        %1980 = vmatpush1.bf16.msra.mxu0 %v1933
        %1981 = vmatprep.subr.bf16.mxu0 %v1937
        %1982 = vmatpush1.bf16.msra.mxu0 %v1936
        %1983 = vmatprep.subr.bf16.mxu0 %v1940
        %1984 = vmatpush1.bf16.msra.mxu0 %v1939
        %1985 = vmatprep.subr.bf16.mxu0 %v1943
        %1986 = vmatpush1.bf16.msra.mxu0 %v1942
        %1987 = vmatprep.subr.bf16.mxu0 %v1946
        %1988 = vmatpush1.bf16.msra.mxu0 %v1945
        %1989 = vmatprep.subr.bf16.mxu0 %v1949
        %1990 = vmatpush1.bf16.msra.mxu0 %v1948
        %1991 = vmatprep.subr.bf16.mxu0 0
        %1992 = vmatpush1.bf16.msra.mxu0 0
        %1993 = vmatprep.subr.bf16.mxu0 0
        %1994 = vmatpush1.bf16.msra.mxu0 0
        %1995 = vmatprep.subr.bf16.mxu0 0
        %1996 = vmatpush1.bf16.msra.mxu0 0
        %1997 = vmatprep.subr.bf16.mxu0 0
        %1998 = vmatpush1.bf16.msra.mxu0 0
        %1999 = vmatprep.subr.bf16.mxu0 0
        %2000 = vmatpush1.bf16.msra.mxu0 0
        %2001 = vmatprep.subr.bf16.mxu0 0
        %2002 = vmatpush1.bf16.msra.mxu0 0
        %2003 = vmatprep.subr.bf16.mxu0 0
        %2004 = vmatpush1.bf16.msra.mxu0 0
        %2005 = vmatprep.subr.bf16.mxu0 0
        %2006 = vmatpush1.bf16.msra.mxu0 0
        %2007 = vmatprep.mubr.bf16.mxu0 0
        %2008 = vmatmul.mubr.bf16.gmra.mrb[0].mxu0 %v1797
        %v2009 = vpop.f32.mrb[0].mxu0
        %v2010 = vadd.f32 %v1835, %v2009
        %v2011 = vpop.f32.mrb[0].mxu0
        %v2012 = vadd.f32 %v1839, %v2011
        %v2013 = vpop.f32.mrb[0].mxu0
        %v2014 = vadd.f32 %v1835, %v2013
        %v2015 = vpop.f32.mrb[0].mxu0
        %v2016 = vadd.f32 %v1839, %v2015
        %2017 = vdwg.mxu0
        %2018 = vmatprep.subr.bf16.mxu0 0
        %2019 = vmatpush1.bf16.msra.mxu0 %v1929
        %2020 = vmatprep.subr.bf16.mxu0 0
        %2021 = vmatpush1.bf16.msra.mxu0 %v1932
        %2022 = vmatprep.subr.bf16.mxu0 0
        %2023 = vmatpush1.bf16.msra.mxu0 %v1935
        %2024 = vmatprep.subr.bf16.mxu0 0
        %2025 = vmatpush1.bf16.msra.mxu0 %v1938
        %2026 = vmatprep.subr.bf16.mxu0 0
        %2027 = vmatpush1.bf16.msra.mxu0 %v1941
        %2028 = vmatprep.subr.bf16.mxu0 0
        %2029 = vmatpush1.bf16.msra.mxu0 %v1944
        %2030 = vmatprep.subr.bf16.mxu0 0
        %2031 = vmatpush1.bf16.msra.mxu0 %v1947
        %2032 = vmatprep.subr.bf16.mxu0 0
        %2033 = vmatpush1.bf16.msra.mxu0 %v1950
        %2034 = vmatprep.subr.bf16.mxu0 0
        %2035 = vmatpush1.bf16.msra.mxu0 0
        %2036 = vmatprep.subr.bf16.mxu0 0
        %2037 = vmatpush1.bf16.msra.mxu0 0
        %2038 = vmatprep.subr.bf16.mxu0 0
        %2039 = vmatpush1.bf16.msra.mxu0 0
        %2040 = vmatprep.subr.bf16.mxu0 0
        %2041 = vmatpush1.bf16.msra.mxu0 0
        %2042 = vmatprep.subr.bf16.mxu0 0
        %2043 = vmatpush1.bf16.msra.mxu0 0
        %2044 = vmatprep.subr.bf16.mxu0 0
        %2045 = vmatpush1.bf16.msra.mxu0 0
        %2046 = vmatprep.subr.bf16.mxu0 0
        %2047 = vmatpush1.bf16.msra.mxu0 0
        %2048 = vmatprep.subr.bf16.mxu0 0
        %2049 = vmatpush1.bf16.msra.mxu0 0
        %2050 = vmatprep.mubr.bf16.mxu0 0
        %2051 = vmatmul.mubr.bf16.gmra.mrb[0].mxu0 %v1797
        %v2052 = vpop.f32.mrb[0].mxu0
        %v2053 = vadd.f32 %v1843, %v2052
        %v2054 = vpop.f32.mrb[0].mxu0
        %v2055 = vpop.f32.mrb[0].mxu0
        %v2056 = vadd.f32 %v1843, %v2055
        %v2057 = vpop.f32.mrb[0].mxu0
        %2058 = vdwg.mxu0
        %v2059 = vmul.f32 %v2012, %v1789
        %v2060 = vmul.f32 %v2016, %v1790
        %v2061 = vmul.f32 %v2012, %v1791
        %v2062 = vmul.f32 %v2016, %v1792
        %v2063 = vmul.f32 %v2012, %v1793
        %v2064 = vmul.f32 %v2016, %v1794
        %v2065 = vmul.f32 %v2012, %v1795
        %v2066 = vmul.f32 %v2016, %v1796
        %v2067 = vmul.f32 %v2053, %v1789
        %v2068 = vmul.f32 %v2056, %v1790
        %v2069 = vmul.f32 %v2053, %v1791
        %v2070 = vmul.f32 %v2056, %v1792
        %v2071 = vmul.f32 %v2053, %v1793
        %v2072 = vmul.f32 %v2056, %v1794
        %v2073 = vmul.f32 %v2053, %v1795
        %v2074 = vmul.f32 %v2056, %v1796
        %v2075 = vpack.c.bf16 %v2014, %v2010
        %v2076 = vpack.c.bf16 %v2060, %v2059
        %v2077 = vpack.c.bf16 %v2062, %v2061
        %v2078 = vpack.c.bf16 %v2064, %v2063
        %v2079 = vpack.c.bf16 %v2066, %v2065
        %v2080 = vld [vmem:[%s3] sm:$0xff]
        %v2081 = vld [vmem:[%s3 + $0x8] sm:$0xff]
        %2082 = vmatprep.subr.bf16.mxu0 0
        %2083 = vmatpush1.bf16.xpose.msra.mxu0 %v2076
        %2084 = vmatprep.subr.bf16.mxu0 0
        %2085 = vmatpush1.bf16.xpose.msra.mxu0 %v2077
        %2086 = vmatprep.subr.bf16.mxu0 0
        %2087 = vmatpush1.bf16.xpose.msra.mxu0 %v2078
        %2088 = vmatprep.subr.bf16.mxu0 0
        %2089 = vmatpush1.bf16.xpose.msra.mxu0 %v2079
        %2090 = vmatprep.subr.bf16.mxu0 0
        %2091 = vmatpush1.bf16.xpose.msra.mxu0 0
        %2092 = vmatprep.subr.bf16.mxu0 0
        %2093 = vmatpush1.bf16.xpose.msra.mxu0 0
        %2094 = vmatprep.subr.bf16.mxu0 0
        %2095 = vmatpush1.bf16.xpose.msra.mxu0 0
        %2096 = vmatprep.subr.bf16.mxu0 0
        %2097 = vmatpush1.bf16.xpose.msra.mxu0 0
        %2098 = vmatprep.subr.bf16.mxu0 0
        %2099 = vmatpush1.bf16.xpose.msra.mxu0 0
        %2100 = vmatprep.subr.bf16.mxu0 0
        %2101 = vmatpush1.bf16.xpose.msra.mxu0 0
        %2102 = vmatprep.subr.bf16.mxu0 0
        %2103 = vmatpush1.bf16.xpose.msra.mxu0 0
        %2104 = vmatprep.subr.bf16.mxu0 0
        %2105 = vmatpush1.bf16.xpose.msra.mxu0 0
        %2106 = vmatprep.subr.bf16.mxu0 0
        %2107 = vmatpush1.bf16.xpose.msra.mxu0 0
        %2108 = vmatprep.subr.bf16.mxu0 0
        %2109 = vmatpush1.bf16.xpose.msra.mxu0 0
        %2110 = vmatprep.subr.bf16.mxu0 0
        %2111 = vmatpush1.bf16.xpose.msra.mxu0 0
        %2112 = vmatprep.subr.bf16.mxu0 0
        %2113 = vmatpush1.bf16.xpose.msra.mxu0 0
        %2114 = vmatprep.mubr.bf16.mxu0 0
        %2115 = vmatmul.mubr.bf16.gmra.mrb[0].mxu0 %v2075
        %v2116 = vpop.f32.mrb[0].mxu0
        %v2117 = vadd.f32 %v2080, %v2116
        %v2118 = vpop.f32.mrb[0].mxu0
        %v2119 = vpop.f32.mrb[0].mxu0
        %v2120 = vadd.f32 %v2081, %v2119
        %v2121 = vpop.f32.mrb[0].mxu0
        %2122 = vdwg.mxu0
        %vm2123 = vcmask 523264
        %v2124 = vsel %vm2123, %v2117, -inf
        %2125 = vmax.xlane.f32.xlu0 %v2124
        %v2126 = vpop.xlane.xlu0 %2125
        %v2127 = vsel %vm2123, %v2120, -inf
        %2128 = vmax.xlane.f32.xlu0 %v2127
        %v2129 = vpop.xlane.xlu0 %2128
        %v2130 = vsub.f32 %v2117, %v2126
        %v2131 = vsub.f32 %v2120, %v2129
        %v2132 = vmul.f32 %v2130, 1.442695
        %v2133 = vpow.pop %v2132
        %v2134 = vmul.f32 %v2131, 1.442695
        %v2135 = vpow.pop %v2134
        %v2136 = vld [vmem:[%s6] sm:$0xff]
        %v2137 = vld [vmem:[%s6 + $0x8] sm:$0xff]
        %v2138 = vld [vmem:[%s6 + $0x10] sm:$0xff]
        %v2139 = vld [vmem:[%s6 + $0x18] sm:$0xff]
        %v2140 = vld [vmem:[%s6 + $0x20] sm:$0xff]
        %v2141 = vld [vmem:[%s6 + $0x28] sm:$0xff]
        %v2142 = vld [vmem:[%s6 + $0x30] sm:$0xff]
        %v2143 = vld [vmem:[%s6 + $0x38] sm:$0xff]
        %v2145 = vsel %vm2123, %v2133, 0
        %v2148 = vsel %vm2123, %v2135, 0
        %2150 = vmatprep.subr.mxu0 0.0
        %2151 = vmatpush1.msra.mxu0 %v2136
        %2152 = vmatprep.subr.mxu0 0.0
        %2153 = vmatpush1.msra.mxu0 %v2137
        %2154 = vmatprep.subr.mxu0 0.0
        %2155 = vmatpush1.msra.mxu0 %v2138
        %2156 = vmatprep.subr.mxu0 0.0
        %2157 = vmatpush1.msra.mxu0 %v2139
        %2158 = vmatprep.subr.mxu0 0.0
        %2159 = vmatpush1.msra.mxu0 %v2140
        %2160 = vmatprep.subr.mxu0 0.0
        %2161 = vmatpush1.msra.mxu0 %v2141
        %2162 = vmatprep.subr.mxu0 0.0
        %2163 = vmatpush1.msra.mxu0 %v2142
        %2164 = vmatprep.subr.mxu0 0.0
        %2165 = vmatpush1.msra.mxu0 %v2143
        %2166 = vmatprep.subr.mxu0 0.0
        %2167 = vmatpush1.msra.mxu0 0.0
        %2168 = vmatprep.subr.mxu0 0.0
        %2169 = vmatpush1.msra.mxu0 0.0
        %2170 = vmatprep.subr.mxu0 0.0
        %2171 = vmatpush1.msra.mxu0 0.0
        %2172 = vmatprep.subr.mxu0 0.0
        %2173 = vmatpush1.msra.mxu0 0.0
        %2174 = vmatprep.subr.mxu0 0.0
        %2175 = vmatpush1.msra.mxu0 0.0
        %2176 = vmatprep.subr.mxu0 0.0
        %2177 = vmatpush1.msra.mxu0 0.0
        %2178 = vmatprep.subr.mxu0 0.0
        %2179 = vmatpush1.msra.mxu0 0.0
        %2180 = vmatprep.subr.mxu0 0.0
        %2181 = vmatpush1.msra.mxu0 0.0
        %2182 = vmatprep.subr.mxu0 0.0
        %2183 = vmatpush1.msra.mxu0 0.0
        %2184 = vmatprep.subr.mxu0 0.0
        %2185 = vmatpush1.msra.mxu0 0.0
        %2186 = vmatprep.subr.mxu0 0.0
        %2187 = vmatpush1.msra.mxu0 0.0
        %2188 = vmatprep.subr.mxu0 0.0
        %2189 = vmatpush1.msra.mxu0 0.0
        %2190 = vmatprep.subr.mxu0 0.0
        %2191 = vmatpush1.msra.mxu0 0.0
        %2192 = vmatprep.subr.mxu0 0.0
        %2193 = vmatpush1.msra.mxu0 0.0
        %2194 = vmatprep.subr.mxu0 0.0
        %2195 = vmatpush1.msra.mxu0 0.0
        %2196 = vmatprep.subr.mxu0 0.0
        %2197 = vmatpush1.msra.mxu0 0.0
        %2198 = vmatprep.subr.mxu0 0.0
        %2199 = vmatpush1.msra.mxu0 0.0
        %2200 = vmatprep.subr.mxu0 0.0
        %2201 = vmatpush1.msra.mxu0 0.0
        %2202 = vmatprep.subr.mxu0 0.0
        %2203 = vmatpush1.msra.mxu0 0.0
        %2204 = vmatprep.subr.mxu0 0.0
        %2205 = vmatpush1.msra.mxu0 0.0
        %2206 = vmatprep.subr.mxu0 0.0
        %2207 = vmatpush1.msra.mxu0 0.0
        %2208 = vmatprep.subr.mxu0 0.0
        %2209 = vmatpush1.msra.mxu0 0.0
        %2210 = vmatprep.subr.mxu0 0.0
        %2211 = vmatpush1.msra.mxu0 0.0
        %2212 = vmatprep.subr.mxu0 0.0
        %2213 = vmatpush1.msra.mxu0 0.0
        %2214 = vmatprep.mubr.f32.mxu0 0.0
        %2215 = vmatmul.mubr.f32.gmra.mrb[0].mxu0 %v2145
        %v2216 = vpop.f32.mrb[0].mxu0
        %v2217 = vadd.f32 0.0, %v2216
        %v2218 = vpop.f32.mrb[0].mxu0
        %2219 = vmatprep.mubr.f32.mxu0 0.0
        %2220 = vmatmul.mubr.f32.gmra.mrb[0].mxu0 %v2148
        %v2221 = vpop.f32.mrb[0].mxu0
        %v2222 = vadd.f32 0.0, %v2221
        %v2223 = vpop.f32.mrb[0].mxu0
        %2224 = vdwg.mxu0
        %v2225 = vrcp.pop %v2217
        %v2226 = vrcp.pop %v2222
        %v2227 = vmul.f32 %v2133, %v2225
        %v2228 = vmul.f32 %v2135, %v2226
        %v2229 = vpack.c.bf16 %v2228, %v2227
        %v2230 = vpack.c.bf16 %v2068, %v2067
        %v2231 = vpack.c.bf16 %v2070, %v2069
        %v2232 = vpack.c.bf16 %v2072, %v2071
        %v2233 = vpack.c.bf16 %v2074, %v2073
        %v2235 = vsel %vm2123, %v2229, 0
        %2237 = vmatprep.subr.bf16.mxu0 0
        %2238 = vmatpush1.bf16.msra.mxu0 %v2230
        %2239 = vmatprep.subr.bf16.mxu0 0
        %2240 = vmatpush1.bf16.msra.mxu0 %v2231
        %2241 = vmatprep.subr.bf16.mxu0 0
        %2242 = vmatpush1.bf16.msra.mxu0 %v2232
        %2243 = vmatprep.subr.bf16.mxu0 0
        %2244 = vmatpush1.bf16.msra.mxu0 %v2233
        %2245 = vmatprep.subr.bf16.mxu0 0
        %2246 = vmatpush1.bf16.msra.mxu0 0
        %2247 = vmatprep.subr.bf16.mxu0 0
        %2248 = vmatpush1.bf16.msra.mxu0 0
        %2249 = vmatprep.subr.bf16.mxu0 0
        %2250 = vmatpush1.bf16.msra.mxu0 0
        %2251 = vmatprep.subr.bf16.mxu0 0
        %2252 = vmatpush1.bf16.msra.mxu0 0
        %2253 = vmatprep.subr.bf16.mxu0 0
        %2254 = vmatpush1.bf16.msra.mxu0 0
        %2255 = vmatprep.subr.bf16.mxu0 0
        %2256 = vmatpush1.bf16.msra.mxu0 0
        %2257 = vmatprep.subr.bf16.mxu0 0
        %2258 = vmatpush1.bf16.msra.mxu0 0
        %2259 = vmatprep.subr.bf16.mxu0 0
        %2260 = vmatpush1.bf16.msra.mxu0 0
        %2261 = vmatprep.subr.bf16.mxu0 0
        %2262 = vmatpush1.bf16.msra.mxu0 0
        %2263 = vmatprep.subr.bf16.mxu0 0
        %2264 = vmatpush1.bf16.msra.mxu0 0
        %2265 = vmatprep.subr.bf16.mxu0 0
        %2266 = vmatpush1.bf16.msra.mxu0 0
        %2267 = vmatprep.subr.bf16.mxu0 0
        %2268 = vmatpush1.bf16.msra.mxu0 0
        %2269 = vmatprep.mubr.bf16.mxu0 0
        %2270 = vmatmul.mubr.bf16.gmra.mrb[0].mxu0 %v2235
        %v2271 = vpop.f32.mrb[0].mxu0
        %v2272 = vadd.f32 0.0, %v2271
        %v2273 = vpop.f32.mrb[0].mxu0
        %v2274 = vpop.f32.mrb[0].mxu0
        %v2275 = vadd.f32 0.0, %v2274
        %v2276 = vpop.f32.mrb[0].mxu0
        %2277 = vdwg.mxu0
        %v2278 = vpack.c.bf16 %v2275, %v2272
        %v2279 = vld [vmem:[%s1058] sm:$0xf]
        %v2280 = vld [vmem:[%s1058 + $0x4] sm:$0xf]
        %v2281 = vld [vmem:[%s1058 + $0x8] sm:$0xf]
        %v2282 = vld [vmem:[%s1058 + $0xc] sm:$0xf]
        %v2283 = vld [vmem:[%s1058 + $0x10] sm:$0xf]
        %v2284 = vld [vmem:[%s1058 + $0x14] sm:$0xf]
        %v2285 = vld [vmem:[%s1058 + $0x18] sm:$0xf]
        %v2286 = vld [vmem:[%s1058 + $0x1c] sm:$0xf]
        %v2287 = vld [vmem:[%s1058 + $0x20] sm:$0xf]
        %v2288 = vld [vmem:[%s1058 + $0x24] sm:$0xf]
        %v2289 = vld [vmem:[%s1058 + $0x28] sm:$0xf]
        %v2290 = vld [vmem:[%s1058 + $0x2c] sm:$0xf]
        %v2291 = vld [vmem:[%s1058 + $0x30] sm:$0xf]
        %v2292 = vld [vmem:[%s1058 + $0x34] sm:$0xf]
        %v2293 = vld [vmem:[%s1058 + $0x38] sm:$0xf]
        %v2294 = vld [vmem:[%s1058 + $0x3c] sm:$0xf]
        %v2295 = vld [vmem:[%s1066] sm:$0x1]
        %v2297 = vlaneseq
        %v2298 = vshrl.u32 %v2297, 7
        %v2299 = vsub.s32 0, %v2298
        %v2300 = vrot.slane %v2295, %v2299
        %v2318 = vunpack.c.l.b16 %v2279
        %v2319 = vunpack.c.l.b16 %v2280
        %v2320 = vunpack.c.l.b16 %v2281
        %v2321 = vunpack.c.l.b16 %v2282
        %v2322 = vunpack.c.l.b16 %v2283
        %v2323 = vunpack.c.l.b16 %v2284
        %v2324 = vunpack.c.l.b16 %v2285
        %v2325 = vunpack.c.l.b16 %v2286
        %v2326 = vunpack.c.l.b16 %v2287
        %v2327 = vunpack.c.l.b16 %v2288
        %v2328 = vunpack.c.l.b16 %v2289
        %v2329 = vunpack.c.l.b16 %v2290
        %v2330 = vunpack.c.l.b16 %v2291
        %v2331 = vunpack.c.l.b16 %v2292
        %v2332 = vunpack.c.l.b16 %v2293
        %v2333 = vunpack.c.l.b16 %v2294
        %v2334 = vpack.c.b16 %v2319, %v2318
        %v2335 = vpack.c.b16 %v2321, %v2320
        %v2336 = vpack.c.b16 %v2323, %v2322
        %v2337 = vpack.c.b16 %v2325, %v2324
        %v2338 = vpack.c.b16 %v2327, %v2326
        %v2339 = vpack.c.b16 %v2329, %v2328
        %v2340 = vpack.c.b16 %v2331, %v2330
        %v2341 = vpack.c.b16 %v2333, %v2332
        %2350 = vmatprep.subr.bf16.mxu0 0
        %2351 = vmatpush1.bf16.msra.mxu0 %v2334
        %2352 = vmatprep.subr.bf16.mxu0 0
        %2353 = vmatpush1.bf16.msra.mxu0 %v2335
        %2354 = vmatprep.subr.bf16.mxu0 0
        %2355 = vmatpush1.bf16.msra.mxu0 %v2336
        %2356 = vmatprep.subr.bf16.mxu0 0
        %2357 = vmatpush1.bf16.msra.mxu0 %v2337
        %2358 = vmatprep.subr.bf16.mxu0 0
        %2359 = vmatpush1.bf16.msra.mxu0 %v2338
        %2360 = vmatprep.subr.bf16.mxu0 0
        %2361 = vmatpush1.bf16.msra.mxu0 %v2339
        %2362 = vmatprep.subr.bf16.mxu0 0
        %2363 = vmatpush1.bf16.msra.mxu0 %v2340
        %2364 = vmatprep.subr.bf16.mxu0 0
        %2365 = vmatpush1.bf16.msra.mxu0 %v2341
        %2366 = vmatprep.subr.bf16.mxu0 0
        %2367 = vmatpush1.bf16.msra.mxu0 0
        %2368 = vmatprep.subr.bf16.mxu0 0
        %2369 = vmatpush1.bf16.msra.mxu0 0
        %2370 = vmatprep.subr.bf16.mxu0 0
        %2371 = vmatpush1.bf16.msra.mxu0 0
        %2372 = vmatprep.subr.bf16.mxu0 0
        %2373 = vmatpush1.bf16.msra.mxu0 0
        %2374 = vmatprep.subr.bf16.mxu0 0
        %2375 = vmatpush1.bf16.msra.mxu0 0
        %2376 = vmatprep.subr.bf16.mxu0 0
        %2377 = vmatpush1.bf16.msra.mxu0 0
        %2378 = vmatprep.subr.bf16.mxu0 0
        %2379 = vmatpush1.bf16.msra.mxu0 0
        %2380 = vmatprep.subr.bf16.mxu0 0
        %2381 = vmatpush1.bf16.msra.mxu0 0
        %2382 = vmatprep.mubr.bf16.mxu0 0
        %2383 = vmatmul.mubr.bf16.gmra.mrb[0].mxu0 %v2278
        %v2384 = vpop.f32.mrb[0].mxu0
        %v2385 = vadd.f32 %v2300, %v2384
        %v2386 = vpop.f32.mrb[0].mxu0
        %v2387 = vpop.f32.mrb[0].mxu0
        %v2388 = vadd.f32 %v2300, %v2387
        %v2389 = vpop.f32.mrb[0].mxu0
        %2390 = vdwg.mxu0
        %v2391 = vadd.f32 %v1787, %v2385
        %v2392 = vadd.f32 %v1788, %v2388
        %v2393 = vld [vmem:[%s1074] sm:$0x1]
        %v2394 = vld [vmem:[%s1082] sm:$0x1]
        %2395 = vadd.xlane.f32.xlu0 %v2391
        %v2396 = vpop.xlane.xlu0 %2395
        %2397 = vadd.xlane.f32.xlu0 %v2392
        %v2398 = vpop.xlane.xlu0 %2397
        %v2399 = vmul.f32 %v2396, 0.020833334
        %v2400 = vmul.f32 %v2398, 0.020833334
        %v2401 = vmul.f32 %v2391, %v2391
        %v2402 = vmul.f32 %v2392, %v2392
        %2403 = vadd.xlane.f32.xlu0 %v2401
        %v2404 = vpop.xlane.xlu0 %2403
        %2405 = vadd.xlane.f32.xlu0 %v2402
        %v2406 = vpop.xlane.xlu0 %2405
        %v2407 = vmul.f32 %v2404, 0.020833334
        %v2408 = vmul.f32 %v2406, 0.020833334
        %v2409 = vmul.f32 %v2399, %v2399
        %v2410 = vmul.f32 %v2400, %v2400
        %v2411 = vsub.f32 %v2407, %v2409
        %v2412 = vsub.f32 %v2408, %v2410
        %v2413 = vsub.f32 %v2391, %v2399
        %v2414 = vsub.f32 %v2392, %v2400
        %v2415 = vadd.f32 %v2411, 1e-05
        %v2416 = vadd.f32 %v2412, 1e-05
        %v2417 = vrsqrt.pop %v2415
        %v2418 = vrsqrt.pop %v2416
        %v2419 = vmul.f32 %v2413, %v2417
        %v2420 = vmul.f32 %v2414, %v2418
        %v2422 = vlaneseq
        %v2423 = vshrl.u32 %v2422, 7
        %v2424 = vsub.s32 0, %v2423
        %v2425 = vrot.slane %v2393, %v2424
        %v2427 = vmul.f32 %v2419, %v2425
        %v2428 = vmul.f32 %v2420, %v2425
        %v2430 = vlaneseq
        %v2431 = vshrl.u32 %v2430, 7
        %v2432 = vsub.s32 0, %v2431
        %v2433 = vrot.slane %v2394, %v2432
        %v2435 = vadd.f32 %v2427, %v2433
        %v2436 = vadd.f32 %v2428, %v2433
        %v2437 = vpack.c.bf16 %v2436, %v2435
        %v2438 = vld [vmem:[%s1091] sm:$0xf]
        %v2439 = vld [vmem:[%s1091 + $0x4] sm:$0xf]
        %v2440 = vld [vmem:[%s1091 + $0x8] sm:$0xf]
        %v2441 = vld [vmem:[%s1091 + $0xc] sm:$0xf]
        %v2442 = vld [vmem:[%s1091 + $0x10] sm:$0xf]
        %v2443 = vld [vmem:[%s1091 + $0x14] sm:$0xf]
        %v2444 = vld [vmem:[%s1091 + $0x18] sm:$0xf]
        %v2445 = vld [vmem:[%s1091 + $0x1c] sm:$0xf]
        %v2446 = vld [vmem:[%s1091 + $0x20] sm:$0xf]
        %v2447 = vld [vmem:[%s1091 + $0x24] sm:$0xf]
        %v2448 = vld [vmem:[%s1091 + $0x28] sm:$0xf]
        %v2449 = vld [vmem:[%s1091 + $0x2c] sm:$0xf]
        %v2450 = vld [vmem:[%s1091 + $0x30] sm:$0xf]
        %v2451 = vld [vmem:[%s1091 + $0x34] sm:$0xf]
        %v2452 = vld [vmem:[%s1091 + $0x38] sm:$0xf]
        %v2453 = vld [vmem:[%s1091 + $0x3c] sm:$0xf]
        %v2454 = vld [vmem:[%s1099] sm:$0x1]
        %v2456 = vlaneseq
        %v2457 = vshrl.u32 %v2456, 7
        %v2458 = vsub.s32 0, %v2457
        %v2459 = vrot.slane %v2454, %v2458
        %v2477 = vunpack.c.l.b16 %v2438
        %v2478 = vunpack.c.l.b16 %v2439
        %v2479 = vunpack.c.l.b16 %v2440
        %v2480 = vunpack.c.l.b16 %v2441
        %v2481 = vunpack.c.l.b16 %v2442
        %v2482 = vunpack.c.l.b16 %v2443
        %v2483 = vunpack.c.l.b16 %v2444
        %v2484 = vunpack.c.l.b16 %v2445
        %v2485 = vunpack.c.l.b16 %v2446
        %v2486 = vunpack.c.l.b16 %v2447
        %v2487 = vunpack.c.l.b16 %v2448
        %v2488 = vunpack.c.l.b16 %v2449
        %v2489 = vunpack.c.l.b16 %v2450
        %v2490 = vunpack.c.l.b16 %v2451
        %v2491 = vunpack.c.l.b16 %v2452
        %v2492 = vunpack.c.l.b16 %v2453
        %v2493 = vpack.c.b16 %v2478, %v2477
        %v2494 = vpack.c.b16 %v2480, %v2479
        %v2495 = vpack.c.b16 %v2482, %v2481
        %v2496 = vpack.c.b16 %v2484, %v2483
        %v2497 = vpack.c.b16 %v2486, %v2485
        %v2498 = vpack.c.b16 %v2488, %v2487
        %v2499 = vpack.c.b16 %v2490, %v2489
        %v2500 = vpack.c.b16 %v2492, %v2491
        %2509 = vmatprep.subr.bf16.mxu0 0
        %2510 = vmatpush1.bf16.msra.mxu0 %v2493
        %2511 = vmatprep.subr.bf16.mxu0 0
        %2512 = vmatpush1.bf16.msra.mxu0 %v2494
        %2513 = vmatprep.subr.bf16.mxu0 0
        %2514 = vmatpush1.bf16.msra.mxu0 %v2495
        %2515 = vmatprep.subr.bf16.mxu0 0
        %2516 = vmatpush1.bf16.msra.mxu0 %v2496
        %2517 = vmatprep.subr.bf16.mxu0 0
        %2518 = vmatpush1.bf16.msra.mxu0 %v2497
        %2519 = vmatprep.subr.bf16.mxu0 0
        %2520 = vmatpush1.bf16.msra.mxu0 %v2498
        %2521 = vmatprep.subr.bf16.mxu0 0
        %2522 = vmatpush1.bf16.msra.mxu0 %v2499
        %2523 = vmatprep.subr.bf16.mxu0 0
        %2524 = vmatpush1.bf16.msra.mxu0 %v2500
        %2525 = vmatprep.subr.bf16.mxu0 0
        %2526 = vmatpush1.bf16.msra.mxu0 0
        %2527 = vmatprep.subr.bf16.mxu0 0
        %2528 = vmatpush1.bf16.msra.mxu0 0
        %2529 = vmatprep.subr.bf16.mxu0 0
        %2530 = vmatpush1.bf16.msra.mxu0 0
        %2531 = vmatprep.subr.bf16.mxu0 0
        %2532 = vmatpush1.bf16.msra.mxu0 0
        %2533 = vmatprep.subr.bf16.mxu0 0
        %2534 = vmatpush1.bf16.msra.mxu0 0
        %2535 = vmatprep.subr.bf16.mxu0 0
        %2536 = vmatpush1.bf16.msra.mxu0 0
        %2537 = vmatprep.subr.bf16.mxu0 0
        %2538 = vmatpush1.bf16.msra.mxu0 0
        %2539 = vmatprep.subr.bf16.mxu0 0
        %2540 = vmatpush1.bf16.msra.mxu0 0
        %2541 = vmatprep.mubr.bf16.mxu0 0
        %2542 = vmatmul.mubr.bf16.gmra.mrb[0].mxu0 %v2437
        %v2543 = vpop.f32.mrb[0].mxu0
        %v2544 = vadd.f32 %v2459, %v2543
        %v2545 = vpop.f32.mrb[0].mxu0
        %v2546 = vpop.f32.mrb[0].mxu0
        %v2547 = vadd.f32 %v2459, %v2546
        %v2548 = vpop.f32.mrb[0].mxu0
        %2549 = vdwg.mxu0
        %v2550 = vmax.f32 %v2544, 0.0
        %v2551 = vmax.f32 %v2547, 0.0
        %v2552 = vpack.c.bf16 %v2551, %v2550
        %v2553 = vld [vmem:[%s1108] sm:$0xf]
        %v2554 = vld [vmem:[%s1108 + $0x4] sm:$0xf]
        %v2555 = vld [vmem:[%s1108 + $0x8] sm:$0xf]
        %v2556 = vld [vmem:[%s1108 + $0xc] sm:$0xf]
        %v2557 = vld [vmem:[%s1108 + $0x10] sm:$0xf]
        %v2558 = vld [vmem:[%s1108 + $0x14] sm:$0xf]
        %v2559 = vld [vmem:[%s1108 + $0x18] sm:$0xf]
        %v2560 = vld [vmem:[%s1108 + $0x1c] sm:$0xf]
        %v2561 = vld [vmem:[%s1108 + $0x20] sm:$0xf]
        %v2562 = vld [vmem:[%s1108 + $0x24] sm:$0xf]
        %v2563 = vld [vmem:[%s1108 + $0x28] sm:$0xf]
        %v2564 = vld [vmem:[%s1108 + $0x2c] sm:$0xf]
        %v2565 = vld [vmem:[%s1108 + $0x30] sm:$0xf]
        %v2566 = vld [vmem:[%s1108 + $0x34] sm:$0xf]
        %v2567 = vld [vmem:[%s1108 + $0x38] sm:$0xf]
        %v2568 = vld [vmem:[%s1108 + $0x3c] sm:$0xf]
        %v2569 = vld [vmem:[%s1116] sm:$0x1]
        %v2571 = vlaneseq
        %v2572 = vshrl.u32 %v2571, 7
        %v2573 = vsub.s32 0, %v2572
        %v2574 = vrot.slane %v2569, %v2573
        %v2592 = vunpack.c.l.b16 %v2553
        %v2593 = vunpack.c.l.b16 %v2554
        %v2594 = vunpack.c.l.b16 %v2555
        %v2595 = vunpack.c.l.b16 %v2556
        %v2596 = vunpack.c.l.b16 %v2557
        %v2597 = vunpack.c.l.b16 %v2558
        %v2598 = vunpack.c.l.b16 %v2559
        %v2599 = vunpack.c.l.b16 %v2560
        %v2600 = vunpack.c.l.b16 %v2561
        %v2601 = vunpack.c.l.b16 %v2562
        %v2602 = vunpack.c.l.b16 %v2563
        %v2603 = vunpack.c.l.b16 %v2564
        %v2604 = vunpack.c.l.b16 %v2565
        %v2605 = vunpack.c.l.b16 %v2566
        %v2606 = vunpack.c.l.b16 %v2567
        %v2607 = vunpack.c.l.b16 %v2568
        %v2608 = vpack.c.b16 %v2593, %v2592
        %v2609 = vpack.c.b16 %v2595, %v2594
        %v2610 = vpack.c.b16 %v2597, %v2596
        %v2611 = vpack.c.b16 %v2599, %v2598
        %v2612 = vpack.c.b16 %v2601, %v2600
        %v2613 = vpack.c.b16 %v2603, %v2602
        %v2614 = vpack.c.b16 %v2605, %v2604
        %v2615 = vpack.c.b16 %v2607, %v2606
        %2624 = vmatprep.subr.bf16.mxu0 0
        %2625 = vmatpush1.bf16.msra.mxu0 %v2608
        %2626 = vmatprep.subr.bf16.mxu0 0
        %2627 = vmatpush1.bf16.msra.mxu0 %v2609
        %2628 = vmatprep.subr.bf16.mxu0 0
        %2629 = vmatpush1.bf16.msra.mxu0 %v2610
        %2630 = vmatprep.subr.bf16.mxu0 0
        %2631 = vmatpush1.bf16.msra.mxu0 %v2611
        %2632 = vmatprep.subr.bf16.mxu0 0
        %2633 = vmatpush1.bf16.msra.mxu0 %v2612
        %2634 = vmatprep.subr.bf16.mxu0 0
        %2635 = vmatpush1.bf16.msra.mxu0 %v2613
        %2636 = vmatprep.subr.bf16.mxu0 0
        %2637 = vmatpush1.bf16.msra.mxu0 %v2614
        %2638 = vmatprep.subr.bf16.mxu0 0
        %2639 = vmatpush1.bf16.msra.mxu0 %v2615
        %2640 = vmatprep.subr.bf16.mxu0 0
        %2641 = vmatpush1.bf16.msra.mxu0 0
        %2642 = vmatprep.subr.bf16.mxu0 0
        %2643 = vmatpush1.bf16.msra.mxu0 0
        %2644 = vmatprep.subr.bf16.mxu0 0
        %2645 = vmatpush1.bf16.msra.mxu0 0
        %2646 = vmatprep.subr.bf16.mxu0 0
        %2647 = vmatpush1.bf16.msra.mxu0 0
        %2648 = vmatprep.subr.bf16.mxu0 0
        %2649 = vmatpush1.bf16.msra.mxu0 0
        %2650 = vmatprep.subr.bf16.mxu0 0
        %2651 = vmatpush1.bf16.msra.mxu0 0
        %2652 = vmatprep.subr.bf16.mxu0 0
        %2653 = vmatpush1.bf16.msra.mxu0 0
        %2654 = vmatprep.subr.bf16.mxu0 0
        %2655 = vmatpush1.bf16.msra.mxu0 0
        %2656 = vmatprep.mubr.bf16.mxu0 0
        %2657 = vmatmul.mubr.bf16.gmra.mrb[0].mxu0 %v2552
        %v2658 = vpop.f32.mrb[0].mxu0
        %v2659 = vadd.f32 %v2574, %v2658
        %v2660 = vpop.f32.mrb[0].mxu0
        %v2661 = vpop.f32.mrb[0].mxu0
        %v2662 = vadd.f32 %v2574, %v2661
        %v2663 = vpop.f32.mrb[0].mxu0
        %2664 = vdwg.mxu0
        %v2665 = vadd.f32 %v2435, %v2659
        %v2666 = vadd.f32 %v2436, %v2662
        %v2667 = vld [vmem:[%s1124] sm:$0x1]
        %v2668 = vld [vmem:[%s1132] sm:$0x1]
        %2669 = vadd.xlane.f32.xlu0 %v2665
        %v2670 = vpop.xlane.xlu0 %2669
        %2671 = vadd.xlane.f32.xlu0 %v2666
        %v2672 = vpop.xlane.xlu0 %2671
        %v2673 = vmul.f32 %v2670, 0.020833334
        %v2674 = vmul.f32 %v2672, 0.020833334
        %v2675 = vmul.f32 %v2665, %v2665
        %v2676 = vmul.f32 %v2666, %v2666
        %2677 = vadd.xlane.f32.xlu0 %v2675
        %v2678 = vpop.xlane.xlu0 %2677
        %2679 = vadd.xlane.f32.xlu0 %v2676
        %v2680 = vpop.xlane.xlu0 %2679
        %v2681 = vmul.f32 %v2678, 0.020833334
        %v2682 = vmul.f32 %v2680, 0.020833334
        %v2683 = vmul.f32 %v2673, %v2673
        %v2684 = vmul.f32 %v2674, %v2674
        %v2685 = vsub.f32 %v2681, %v2683
        %v2686 = vsub.f32 %v2682, %v2684
        %v2687 = vsub.f32 %v2665, %v2673
        %v2688 = vsub.f32 %v2666, %v2674
        %v2689 = vadd.f32 %v2685, 1e-05
        %v2690 = vadd.f32 %v2686, 1e-05
        %v2691 = vrsqrt.pop %v2689
        %v2692 = vrsqrt.pop %v2690
        %v2693 = vmul.f32 %v2687, %v2691
        %v2694 = vmul.f32 %v2688, %v2692
        %v2696 = vlaneseq
        %v2697 = vshrl.u32 %v2696, 7
        %v2698 = vsub.s32 0, %v2697
        %v2699 = vrot.slane %v2667, %v2698
        %v2701 = vmul.f32 %v2693, %v2699
        %v2702 = vmul.f32 %v2694, %v2699
        %v2704 = vlaneseq
        %v2705 = vshrl.u32 %v2704, 7
        %v2706 = vsub.s32 0, %v2705
        %v2707 = vrot.slane %v2668, %v2706
        %v2709 = vadd.f32 %v2701, %v2707
        %v2710 = vadd.f32 %v2702, %v2707
        %2711 = vst [vmem:[#allocation2] sm:$0xff] %v2709
        %2712 = vst [vmem:[#allocation2 + $0x8] sm:$0xff] %v2710
        %p2713 = scmp.eq.s32.totalorder %s60, 1
        // Predicated region
        $region197: #{raindrop_forward.1} parent=131 // pred_check
          %p2714 = pneg %p2713
        $region198: #{raindrop_forward.1} parent=131 // pred_check_branch
          %2716 = sbr.rel (%p2714) target = $region200
        $region199: #{raindrop_forward.1} parent=131 // pred_region
          %v2717 = vld [vmem:[%s4] sm:$0x3]
          %v2718 = vpack.c.bf16 %v2717, %v2717
          %v2719 = vpack.c.bf16 %v2710, %v2709
          %v2720 = vld [vmem:[%s2] sm:$0x3]
          %v2721 = vpack.c.bf16 %v2720, %v2720
          %v2722 = vld [vmem:[%s10] sm:$0x7]
          %vm2723 = vcmask 39936
          %v2725 = vsel %vm2723, %v2721, 0
          %vm2727 = vcmask 1041408
          %vm2728 = vcmask 1042432
          %v2729 = vsel %vm2727, 4294967295, 65535
          %v2730 = vsel %vm2728, %v2729, 0
          %v2732 = vand.u32 %v2722, %v2730
          %2734 = vmatprep.subr.bf16.mxu0 0
          %2735 = vmatpush1.bf16.msra.mxu0 %v2732
          %2736 = vmatprep.subr.bf16.mxu0 0
          %2737 = vmatpush1.bf16.msra.mxu0 0
          %2738 = vmatprep.subr.bf16.mxu0 0
          %2739 = vmatpush1.bf16.msra.mxu0 0
          %2740 = vmatprep.subr.bf16.mxu0 0
          %2741 = vmatpush1.bf16.msra.mxu0 0
          %2742 = vmatprep.subr.bf16.mxu0 0
          %2743 = vmatpush1.bf16.msra.mxu0 0
          %2744 = vmatprep.subr.bf16.mxu0 0
          %2745 = vmatpush1.bf16.msra.mxu0 0
          %2746 = vmatprep.subr.bf16.mxu0 0
          %2747 = vmatpush1.bf16.msra.mxu0 0
          %2748 = vmatprep.subr.bf16.mxu0 0
          %2749 = vmatpush1.bf16.msra.mxu0 0
          %2750 = vmatprep.subr.bf16.mxu0 0
          %2751 = vmatpush1.bf16.msra.mxu0 0
          %2752 = vmatprep.subr.bf16.mxu0 0
          %2753 = vmatpush1.bf16.msra.mxu0 0
          %2754 = vmatprep.subr.bf16.mxu0 0
          %2755 = vmatpush1.bf16.msra.mxu0 0
          %2756 = vmatprep.subr.bf16.mxu0 0
          %2757 = vmatpush1.bf16.msra.mxu0 0
          %2758 = vmatprep.subr.bf16.mxu0 0
          %2759 = vmatpush1.bf16.msra.mxu0 0
          %2760 = vmatprep.subr.bf16.mxu0 0
          %2761 = vmatpush1.bf16.msra.mxu0 0
          %2762 = vmatprep.subr.bf16.mxu0 0
          %2763 = vmatpush1.bf16.msra.mxu0 0
          %2764 = vmatprep.subr.bf16.mxu0 0
          %2765 = vmatpush1.bf16.msra.mxu0 0
          %2766 = vmatprep.mubr.bf16.mxu0 0
          %2767 = vmatmul.mubr.bf16.gmra.mrb[0].mxu0 %v2725
          %v2768 = vpop.f32.mrb[0].mxu0
          %v2769 = vadd.f32 0.0, %v2768
          %v2770 = vpop.f32.mrb[0].mxu0
          %v2771 = vpop.f32.mrb[0].mxu0
          %v2772 = vpop.f32.mrb[0].mxu0
          %2773 = vdwg.mxu0
          %vm2774 = vcmask 130048
          %v2776 = vsel %vm2774, %v2718, 0
          %2778 = vmatprep.subr.bf16.mxu0 0
          %2779 = vmatpush1.bf16.msra.mxu0 %v2719
          %2780 = vmatprep.subr.bf16.mxu0 0
          %2781 = vmatpush1.bf16.msra.mxu0 0
          %2782 = vmatprep.subr.bf16.mxu0 0
          %2783 = vmatpush1.bf16.msra.mxu0 0
          %2784 = vmatprep.subr.bf16.mxu0 0
          %2785 = vmatpush1.bf16.msra.mxu0 0
          %2786 = vmatprep.subr.bf16.mxu0 0
          %2787 = vmatpush1.bf16.msra.mxu0 0
          %2788 = vmatprep.subr.bf16.mxu0 0
          %2789 = vmatpush1.bf16.msra.mxu0 0
          %2790 = vmatprep.subr.bf16.mxu0 0
          %2791 = vmatpush1.bf16.msra.mxu0 0
          %2792 = vmatprep.subr.bf16.mxu0 0
          %2793 = vmatpush1.bf16.msra.mxu0 0
          %2794 = vmatprep.subr.bf16.mxu0 0
          %2795 = vmatpush1.bf16.msra.mxu0 0
          %2796 = vmatprep.subr.bf16.mxu0 0
          %2797 = vmatpush1.bf16.msra.mxu0 0
          %2798 = vmatprep.subr.bf16.mxu0 0
          %2799 = vmatpush1.bf16.msra.mxu0 0
          %2800 = vmatprep.subr.bf16.mxu0 0
          %2801 = vmatpush1.bf16.msra.mxu0 0
          %2802 = vmatprep.subr.bf16.mxu0 0
          %2803 = vmatpush1.bf16.msra.mxu0 0
          %2804 = vmatprep.subr.bf16.mxu0 0
          %2805 = vmatpush1.bf16.msra.mxu0 0
          %2806 = vmatprep.subr.bf16.mxu0 0
          %2807 = vmatpush1.bf16.msra.mxu0 0
          %2808 = vmatprep.subr.bf16.mxu0 0
          %2809 = vmatpush1.bf16.msra.mxu0 0
          %2810 = vmatprep.mubr.bf16.mxu0 0
          %2811 = vmatmul.mubr.bf16.gmra.mrb[0].mxu0 %v2776
          %v2812 = vpop.f32.mrb[0].mxu0
          %v2813 = vadd.f32 %v2769, %v2812
          %v2814 = vpop.f32.mrb[0].mxu0
          %v2815 = vpop.f32.mrb[0].mxu0
          %v2816 = vpop.f32.mrb[0].mxu0
          %2817 = vdwg.mxu0
          %v2818 = vld [vmem:[#allocation3] sm:$0x1]
          %v2820 = vlaneseq
          %v2821 = vshrl.u32 %v2820, 7
          %v2822 = vsub.s32 0, %v2821
          %v2823 = vrot.slane %v2818, %v2822
          %v2825 = vadd.f32 %v2813, %v2823
          %v2826 = vpack.c.bf16 %v2825, %v2825
          %v2827 = vld [vmem:[%s24] sm:$0xf]
          %v2828 = vld [vmem:[%s24 + $0x4] sm:$0xf]
          %v2829 = vld [vmem:[%s24 + $0x8] sm:$0xf]
          %v2830 = vld [vmem:[%s24 + $0xc] sm:$0xf]
          %v2831 = vld [vmem:[%s24 + $0x10] sm:$0xf]
          %v2832 = vld [vmem:[%s24 + $0x14] sm:$0xf]
          %v2833 = vld [vmem:[%s24 + $0x18] sm:$0xf]
          %v2834 = vld [vmem:[%s24 + $0x1c] sm:$0xf]
          %v2835 = vld [vmem:[%s24 + $0x20] sm:$0xf]
          %v2836 = vld [vmem:[%s24 + $0x24] sm:$0xf]
          %v2837 = vld [vmem:[%s24 + $0x28] sm:$0xf]
          %v2838 = vld [vmem:[%s24 + $0x2c] sm:$0xf]
          %v2839 = vld [vmem:[%s24 + $0x30] sm:$0xf]
          %v2840 = vld [vmem:[%s24 + $0x34] sm:$0xf]
          %v2841 = vld [vmem:[%s24 + $0x38] sm:$0xf]
          %v2842 = vld [vmem:[%s24 + $0x3c] sm:$0xf]
          %v2843 = vld [vmem:[#allocation23] sm:$0x1]
          %v2845 = vlaneseq
          %v2846 = vshrl.u32 %v2845, 7
          %v2847 = vsub.s32 0, %v2846
          %v2848 = vrot.slane %v2843, %v2847
          %v2866 = vunpack.c.l.b16 %v2827
          %v2867 = vunpack.c.l.b16 %v2828
          %v2868 = vunpack.c.l.b16 %v2829
          %v2869 = vunpack.c.l.b16 %v2830
          %v2870 = vunpack.c.l.b16 %v2831
          %v2871 = vunpack.c.l.b16 %v2832
          %v2872 = vunpack.c.l.b16 %v2833
          %v2873 = vunpack.c.l.b16 %v2834
          %v2874 = vunpack.c.l.b16 %v2835
          %v2875 = vunpack.c.l.b16 %v2836
          %v2876 = vunpack.c.l.b16 %v2837
          %v2877 = vunpack.c.l.b16 %v2838
          %v2878 = vunpack.c.l.b16 %v2839
          %v2879 = vunpack.c.l.b16 %v2840
          %v2880 = vunpack.c.l.b16 %v2841
          %v2881 = vunpack.c.l.b16 %v2842
          %v2882 = vpack.c.b16 %v2867, %v2866
          %v2883 = vpack.c.b16 %v2869, %v2868
          %v2884 = vpack.c.b16 %v2871, %v2870
          %v2885 = vpack.c.b16 %v2873, %v2872
          %v2886 = vpack.c.b16 %v2875, %v2874
          %v2887 = vpack.c.b16 %v2877, %v2876
          %v2888 = vpack.c.b16 %v2879, %v2878
          %v2889 = vpack.c.b16 %v2881, %v2880
          %2898 = vmatprep.subr.bf16.mxu0 0
          %2899 = vmatpush1.bf16.msra.mxu0 %v2882
          %2900 = vmatprep.subr.bf16.mxu0 0
          %2901 = vmatpush1.bf16.msra.mxu0 %v2883
          %2902 = vmatprep.subr.bf16.mxu0 0
          %2903 = vmatpush1.bf16.msra.mxu0 %v2884
          %2904 = vmatprep.subr.bf16.mxu0 0
          %2905 = vmatpush1.bf16.msra.mxu0 %v2885
          %2906 = vmatprep.subr.bf16.mxu0 0
          %2907 = vmatpush1.bf16.msra.mxu0 %v2886
          %2908 = vmatprep.subr.bf16.mxu0 0
          %2909 = vmatpush1.bf16.msra.mxu0 %v2887
          %2910 = vmatprep.subr.bf16.mxu0 0
          %2911 = vmatpush1.bf16.msra.mxu0 %v2888
          %2912 = vmatprep.subr.bf16.mxu0 0
          %2913 = vmatpush1.bf16.msra.mxu0 %v2889
          %2914 = vmatprep.subr.bf16.mxu0 0
          %2915 = vmatpush1.bf16.msra.mxu0 0
          %2916 = vmatprep.subr.bf16.mxu0 0
          %2917 = vmatpush1.bf16.msra.mxu0 0
          %2918 = vmatprep.subr.bf16.mxu0 0
          %2919 = vmatpush1.bf16.msra.mxu0 0
          %2920 = vmatprep.subr.bf16.mxu0 0
          %2921 = vmatpush1.bf16.msra.mxu0 0
          %2922 = vmatprep.subr.bf16.mxu0 0
          %2923 = vmatpush1.bf16.msra.mxu0 0
          %2924 = vmatprep.subr.bf16.mxu0 0
          %2925 = vmatpush1.bf16.msra.mxu0 0
          %2926 = vmatprep.subr.bf16.mxu0 0
          %2927 = vmatpush1.bf16.msra.mxu0 0
          %2928 = vmatprep.subr.bf16.mxu0 0
          %2929 = vmatpush1.bf16.msra.mxu0 0
          %2930 = vmatprep.mubr.bf16.mxu0 0
          %2931 = vmatmul.mubr.bf16.gmra.mrb[0].mxu0 %v2826
          %v2932 = vpop.f32.mrb[0].mxu0
          %v2933 = vadd.f32 %v2848, %v2932
          %v2934 = vpop.f32.mrb[0].mxu0
          %v2935 = vpop.f32.mrb[0].mxu0
          %v2936 = vpop.f32.mrb[0].mxu0
          %2937 = vdwg.mxu0
          %v2938 = vmax.f32 %v2933, 0.0
          %v2939 = vpack.c.bf16 %v2938, %v2938
          %v2940 = vld [vmem:[#allocation24] sm:$0xf]
          %v2941 = vld [vmem:[#allocation24 + $0x4] sm:$0xf]
          %v2942 = vld [vmem:[#allocation24 + $0x8] sm:$0xf]
          %v2943 = vld [vmem:[#allocation24 + $0xc] sm:$0xf]
          %v2944 = vld [vmem:[#allocation24 + $0x10] sm:$0xf]
          %v2945 = vld [vmem:[#allocation24 + $0x14] sm:$0xf]
          %v2946 = vld [vmem:[#allocation24 + $0x18] sm:$0xf]
          %v2947 = vld [vmem:[#allocation24 + $0x1c] sm:$0xf]
          %v2948 = vld [vmem:[#allocation24 + $0x20] sm:$0xf]
          %v2949 = vld [vmem:[#allocation24 + $0x24] sm:$0xf]
          %v2950 = vld [vmem:[#allocation24 + $0x28] sm:$0xf]
          %v2951 = vld [vmem:[#allocation24 + $0x2c] sm:$0xf]
          %v2952 = vld [vmem:[#allocation24 + $0x30] sm:$0xf]
          %v2953 = vld [vmem:[#allocation24 + $0x34] sm:$0xf]
          %v2954 = vld [vmem:[#allocation24 + $0x38] sm:$0xf]
          %v2955 = vld [vmem:[#allocation24 + $0x3c] sm:$0xf]
          %v2956 = vld [vmem:[#allocation26] sm:$0x1]
          %v2958 = vlaneseq
          %v2959 = vshrl.u32 %v2958, 7
          %v2960 = vsub.s32 0, %v2959
          %v2961 = vrot.slane %v2956, %v2960
          %v2979 = vunpack.c.l.b16 %v2940
          %v2980 = vunpack.c.l.b16 %v2941
          %v2981 = vunpack.c.l.b16 %v2942
          %v2982 = vunpack.c.l.b16 %v2943
          %v2983 = vunpack.c.l.b16 %v2944
          %v2984 = vunpack.c.l.b16 %v2945
          %v2985 = vunpack.c.l.b16 %v2946
          %v2986 = vunpack.c.l.b16 %v2947
          %v2987 = vunpack.c.l.b16 %v2948
          %v2988 = vunpack.c.l.b16 %v2949
          %v2989 = vunpack.c.l.b16 %v2950
          %v2990 = vunpack.c.l.b16 %v2951
          %v2991 = vunpack.c.l.b16 %v2952
          %v2992 = vunpack.c.l.b16 %v2953
          %v2993 = vunpack.c.l.b16 %v2954
          %v2994 = vunpack.c.l.b16 %v2955
          %v2995 = vpack.c.b16 %v2980, %v2979
          %v2996 = vpack.c.b16 %v2982, %v2981
          %v2997 = vpack.c.b16 %v2984, %v2983
          %v2998 = vpack.c.b16 %v2986, %v2985
          %v2999 = vpack.c.b16 %v2988, %v2987
          %v3000 = vpack.c.b16 %v2990, %v2989
          %v3001 = vpack.c.b16 %v2992, %v2991
          %v3002 = vpack.c.b16 %v2994, %v2993
          %3011 = vmatprep.subr.bf16.mxu0 0
          %3012 = vmatpush1.bf16.msra.mxu0 %v2995
          %3013 = vmatprep.subr.bf16.mxu0 0
          %3014 = vmatpush1.bf16.msra.mxu0 %v2996
          %3015 = vmatprep.subr.bf16.mxu0 0
          %3016 = vmatpush1.bf16.msra.mxu0 %v2997
          %3017 = vmatprep.subr.bf16.mxu0 0
          %3018 = vmatpush1.bf16.msra.mxu0 %v2998
          %3019 = vmatprep.subr.bf16.mxu0 0
          %3020 = vmatpush1.bf16.msra.mxu0 %v2999
          %3021 = vmatprep.subr.bf16.mxu0 0
          %3022 = vmatpush1.bf16.msra.mxu0 %v3000
          %3023 = vmatprep.subr.bf16.mxu0 0
          %3024 = vmatpush1.bf16.msra.mxu0 %v3001
          %3025 = vmatprep.subr.bf16.mxu0 0
          %3026 = vmatpush1.bf16.msra.mxu0 %v3002
          %3027 = vmatprep.subr.bf16.mxu0 0
          %3028 = vmatpush1.bf16.msra.mxu0 0
          %3029 = vmatprep.subr.bf16.mxu0 0
          %3030 = vmatpush1.bf16.msra.mxu0 0
          %3031 = vmatprep.subr.bf16.mxu0 0
          %3032 = vmatpush1.bf16.msra.mxu0 0
          %3033 = vmatprep.subr.bf16.mxu0 0
          %3034 = vmatpush1.bf16.msra.mxu0 0
          %3035 = vmatprep.subr.bf16.mxu0 0
          %3036 = vmatpush1.bf16.msra.mxu0 0
          %3037 = vmatprep.subr.bf16.mxu0 0
          %3038 = vmatpush1.bf16.msra.mxu0 0
          %3039 = vmatprep.subr.bf16.mxu0 0
          %3040 = vmatpush1.bf16.msra.mxu0 0
          %3041 = vmatprep.subr.bf16.mxu0 0
          %3042 = vmatpush1.bf16.msra.mxu0 0
          %3043 = vmatprep.mubr.bf16.mxu0 0
          %3044 = vmatmul.mubr.bf16.gmra.mrb[0].mxu0 %v2939
          %v3045 = vpop.f32.mrb[0].mxu0
          %v3046 = vadd.f32 %v2961, %v3045
          %v3047 = vpop.f32.mrb[0].mxu0
          %v3048 = vpop.f32.mrb[0].mxu0
          %v3049 = vpop.f32.mrb[0].mxu0
          %3050 = vdwg.mxu0
          %3051 = vst [vmem:[#allocation27] sm:$0x3] %v3046
        $region200: #{raindrop_forward.1} parent=131 // pred_fallthru
          _
        // Predicated region
        $region201: #{raindrop_forward.1} parent=131 // pred_check
          %p3052 = pneg %p721
        $region202: #{raindrop_forward.1} parent=131 // pred_check_branch
          %3054 = sbr.rel (%p3052) target = $region204
        $region203: #{raindrop_forward.1} parent=131 // pred_region
          %s3056 = ssub.s32 32, 32
          %3057 = vsyncadd [#allocation5], %s3056
          %s3059 = sshll.u32 [#allocation27], 4
          %s3060 = int_to_ptr.vmem [resolvable:$true] %s3059
          %3062 = dma.vmem_to_hbm [thread:$0]  %s3060, 32, %s28, [#allocation5]
        $region204: #{raindrop_forward.1} parent=131 // pred_fallthru
          _
        // Predicated region
        $region205: #{raindrop_forward.1} parent=131 // pred_check
          %p3063 = pneg %p721
        $region206: #{raindrop_forward.1} parent=131 // pred_check_branch
          %3065 = sbr.rel (%p3063) target = $region208
        $region207: #{raindrop_forward.1} parent=131 // pred_region
          %3066 = dma.done [#allocation5], 32
        $region208: #{raindrop_forward.1} parent=131 // pred_fallthru
          _
      $region132: #{raindrop_forward.1} parent=5 // pred_fallthru
        _
      %p3067 = scmp.le.s32.totalorder 2, %s55
      // Predicated region
      $region209: #{raindrop_forward.1} parent=5 // pred_check
        %p3068 = pneg %p3067
      $region210: #{raindrop_forward.1} parent=5 // pred_check_branch
        %3070 = sbr.rel (%p3068) target = $region212
      $region211: #{raindrop_forward.1} parent=5 // pred_region
        %s3071 = ssub.s32 %s55, 2
      $region212: #{raindrop_forward.1} parent=5 // pred_fallthru
        _
    $region6: #{raindrop_forward.1} parent=1 // loop_footer
      %s59 = sadd.s32 1, %s55
    $region7: #{raindrop_forward.1} parent=1 // loop_footer_branch
      %54 = sbr.rel target = $region3
    $region8: #{raindrop_forward.1} parent=1 // loop_exit
      _
    %3072 = vsyncpa [#allocation4], 1
    %s3073 = scalar_lea.sflag [#allocation4], 1
    %3074 = vsyncpa %s3073, 1
    %3075 = vsyncpa [#allocation7], 1
    %s3076 = scalar_lea.sflag [#allocation7], 1
    %3077 = vsyncpa %s3076, 1
    %3078 = vsyncpa [#allocation10], 1
    %s3079 = scalar_lea.sflag [#allocation10], 1
    %3080 = vsyncpa %s3079, 1
    %3081 = vsyncpa [#allocation13], 1
    %s3082 = scalar_lea.sflag [#allocation13], 1
    %3083 = vsyncpa %s3082, 1
    %3084 = vsyncpa [#allocation16], 1
    %s3085 = scalar_lea.sflag [#allocation16], 1
    %3086 = vsyncpa %s3085, 1
    %3087 = vsyncpa [#allocation19], 1
    %s3088 = scalar_lea.sflag [#allocation19], 1
    %3089 = vsyncpa %s3088, 1
    %3090 = vsyncpa [#allocation22], 1
    %s3091 = scalar_lea.sflag [#allocation22], 1
    %3092 = vsyncpa %s3091, 1
    %3093 = vsyncpa [#allocation25], 1
    %3094 = vsyncpa [#allocation5], 1
    %s3095 = scalar_lea.sflag [#allocation5], 1
    %3096 = vsyncpa %s3095, 1

</llo_original>
